<compile_context>
chip_gen: v7x
topology: tpu7x:2x2x1
jax: 0.10.0
libtpu: 0.0.40
codegen_flags: <defaults>
</compile_context>

<pallas_src>
import math
import functools

import jax
import jax.numpy as jnp
from jax import lax
from jax.experimental import pallas as pl
from jax.experimental.pallas import tpu as pltpu


# ----------------------------- Pallas kernel ------------------------------ #

def _layernorm(x, g, b, eps=1e-5):
    mu = jnp.mean(x, axis=-1, keepdims=True)
    var = jnp.mean((x - mu) ** 2, axis=-1, keepdims=True)
    return (x - mu) * lax.rsqrt(var + eps) * g + b


def encoder_stack_kernel(num_layers, num_heads,
                         x_ref, pe_ref,
                         wq_ref, bq_ref,          # (L,H,D,dh), (L,H,1,dh) (pre-scaled)
                         wk_ref, bk_ref,
                         wv_ref, bv_ref,
                         wo_ref, bo_ref,          # (L,H,dh,D), (L,1,D)
                         g1_ref, be1_ref,         # layernorm 1
                         w1_ref, b1_ref,          # FFN linear1 (L,D,F),(L,1,F)
                         w2_ref, b2_ref,          # FFN linear2 (L,F,D),(L,1,D)
                         g2_ref, be2_ref,         # layernorm 2
                         o_ref):
    # x_ref / o_ref: (S, D) tile for one batch element (batch dim squeezed).
    x = x_ref[...].astype(jnp.float32) + pe_ref[...]       # fused PE add

    for l in range(num_layers):                  # static unroll over layers
        # ---- multi-head self attention (heads pre-split in the weights) --- #
        attn = None
        for h in range(num_heads):               # static unroll over heads
            # q is pre-scaled by 1/sqrt(dh) via the packed weights.
            qh = jnp.dot(x, wq_ref[l, h],
                         preferred_element_type=jnp.float32) + bq_ref[l, h]
            kh = jnp.dot(x, wk_ref[l, h],
                         preferred_element_type=jnp.float32) + bk_ref[l, h]
            vh = jnp.dot(x, wv_ref[l, h],
                         preferred_element_type=jnp.float32) + bv_ref[l, h]
            # scores = q @ k^T, transpose folded into dot_general
            s = lax.dot_general(qh, kh,
                                (((1,), (1,)), ((), ())),
                                preferred_element_type=jnp.float32)   # (S, S)
            s = s - jnp.max(s, axis=-1, keepdims=True)
            p = jnp.exp(s)
            p = p * pl.reciprocal(jnp.sum(p, axis=-1, keepdims=True),
                                  approx=True)
            oh = jnp.dot(p, vh, preferred_element_type=jnp.float32)   # (S, dh)
            # fold this head's slice of the output projection and accumulate;
            # equivalent to concat(heads) @ Wo^T without slicing/concat.
            ch = jnp.dot(oh, wo_ref[l, h],
                         preferred_element_type=jnp.float32)          # (S, D)
            attn = ch if attn is None else attn + ch
        attn = attn + bo_ref[l]

        # residual + LayerNorm 1 (post-norm, PyTorch default norm_first=False)
        y = _layernorm(x + attn, g1_ref[l], be1_ref[l])

        # ---- feed-forward (ReLU) ------------------------------------------ #
        h1 = jnp.maximum(
            jnp.dot(y, w1_ref[l], preferred_element_type=jnp.float32)
            + b1_ref[l], 0.0)                                         # (S, F)
        h2 = jnp.dot(h1, w2_ref[l],
                     preferred_element_type=jnp.float32) + b2_ref[l]  # (S, D)

        x = _layernorm(y + h2, g2_ref[l], be2_ref[l])

    o_ref[...] = x.astype(o_ref.dtype)


# --------------------------- pallas_call wrapper --------------------------- #

_PACKED_ORDER = ("wq", "bq", "wk", "bk", "wv", "bv", "wo", "bo",
                 "g1", "be1", "w1", "b1", "w2", "b2", "g2", "be2")


def _full_spec(arr):
    n = arr.ndim
    return pl.BlockSpec(arr.shape, lambda b, n=n: (0,) * n)


def encoder_stack(x_emb, pe_s, packed):
    """All transformer layers in one Pallas call. x_emb: (B,S,D) -> (B,S,D)."""
    B, S, D = x_emb.shape
    L, H = packed["wq"].shape[:2]
    weights = [packed[k] for k in _PACKED_ORDER]

    kernel = functools.partial(encoder_stack_kernel, L, H)
    return pl.pallas_call(
        kernel,
        out_shape=jax.ShapeDtypeStruct((B, S, D), x_emb.dtype),
        grid=(B,),
        in_specs=[
            pl.BlockSpec((None, S, D), lambda b: (b, 0, 0)),  # activations
            pl.BlockSpec((S, D), lambda b: (0, 0)),           # pos encoding
        ] + [_full_spec(w) for w in weights],                 # grid-constant
        out_specs=pl.BlockSpec((None, S, D), lambda b: (b, 0, 0)),
        compiler_params=pltpu.CompilerParams(
            dimension_semantics=("parallel",)),
    )(x_emb, pe_s, *weights)


# --------------------------- parameter packing ----------------------------- #

def pack_encoder_params(layer_params, num_heads):
    """Stack per-layer PyTorch-layout params into layer-major, head-split,
    pre-transposed arrays.  Done ONCE outside the forward pass so the forward
    graph contains no transposes.  The attention scale 1/sqrt(dh) is folded
    into Wq / bq here."""
    H = num_heads
    D = layer_params[0]["w_o"].shape[0]
    dh = D // H
    scale = 1.0 / math.sqrt(dh)

    def per_layer(p):
        w_in, b_in = p["w_in"], p["b_in"]            # (3D, D), (3D,)
        wq, wk, wv = (w_in[i * D:(i + 1) * D] for i in range(3))
        bq, bk, bv = (b_in[i * D:(i + 1) * D] for i in range(3))

        def split_wt(w):    # (D, D) torch (out,in) -> (H, D, dh): q_h = x @ [h]
            return w.reshape(H, dh, D).transpose(0, 2, 1)

        def split_b(b):     # (D,) -> (H, 1, dh)
            return b.reshape(H, 1, dh)

        return dict(
            wq=split_wt(wq) * scale, bq=split_b(bq) * scale,   # scale folded in
            wk=split_wt(wk), bk=split_b(bk),
            wv=split_wt(wv), bv=split_b(bv),
            wo=p["w_o"].T.reshape(H, dh, D),          # rows of Wo^T, per head
            bo=p["b_o"].reshape(1, D),
            g1=p["g1"].reshape(1, D), be1=p["be1"].reshape(1, D),
            w1=p["w1"].T, b1=p["b1"].reshape(1, -1),
            w2=p["w2"].T, b2=p["b2"].reshape(1, D),
            g2=p["g2"].reshape(1, D), be2=p["be2"].reshape(1, D),
        )

    per = [per_layer(p) for p in layer_params]
    return {k: jnp.stack([q[k] for q in per], axis=0) for k in per[0]}


# ------------------------------ glue (JAX) --------------------------------- #

def positional_encoding(max_len, d_model):
    pos = jnp.arange(0, max_len + 2, dtype=jnp.float32)[:, None]
    div = jnp.exp(jnp.arange(0, d_model, 2, dtype=jnp.float32)
                  * (-math.log(10000.0) / d_model))
    pe = jnp.zeros((max_len + 2, d_model), jnp.float32)
    pe = pe.at[:, 0::2].set(jnp.sin(pos * div))
    pe = pe.at[:, 1::2].set(jnp.cos(pos * div))
    return pe                                         # (max_len + 2, D)


@jax.jit
def encoder_forward(token_ids, embedding, pe, packed):
    S = token_ids.shape[1]
    emb = embedding[token_ids]                        # (B, S, D) gather (glue)
    x = encoder_stack(emb, pe[:S], packed)            # Pallas hot path
    # batch_first=False `memory` layout: (S, B, D).  Tiny XLA layout op.
    return jnp.transpose(x, (1, 0, 2))


def init_layer_params(key, D, F_):
    ks = jax.random.split(key, 4)
    s = 0.02
    return dict(
        w_in=jax.random.normal(ks[0], (3 * D, D), jnp.float32) * s,
        b_in=jnp.zeros((3 * D,), jnp.float32),
        w_o=jax.random.normal(ks[1], (D, D), jnp.float32) * s,
        b_o=jnp.zeros((D,), jnp.float32),
        g1=jnp.ones((D,), jnp.float32), be1=jnp.zeros((D,), jnp.float32),
        w1=jax.random.normal(ks[2], (F_, D), jnp.float32) * s,
        b1=jnp.zeros((F_,), jnp.float32),
        w2=jax.random.normal(ks[3], (D, F_), jnp.float32) * s,
        b2=jnp.zeros((D,), jnp.float32),
        g2=jnp.ones((D,), jnp.float32), be2=jnp.zeros((D,), jnp.float32),
    )


# --------------------------------- main ------------------------------------ #

if __name__ == "__main__":
    # module hyper-parameters (small, consistent with the nn.Module __init__)
    INPUT_DIM = 16     # vocab size
    MAX_LEN = 8
    DIM_MODEL = 32
    NUM_HEADS = 4
    NUM_LAYERS = 2
    FF_HIDDEN = 64
    B, S = 2, 8

    root = jax.random.PRNGKey(0)
    k_emb, k_tok, k_layers = jax.random.split(root, 3)

    embedding = jax.random.normal(k_emb, (INPUT_DIM, DIM_MODEL), jnp.float32) * 0.02
    pe = positional_encoding(MAX_LEN, DIM_MODEL)
    layer_keys = jax.random.split(k_layers, NUM_LAYERS)
    layer_params = [init_layer_params(k, DIM_MODEL, FF_HIDDEN) for k in layer_keys]
    packed = pack_encoder_params(layer_params, NUM_HEADS)

    token_ids = jax.random.randint(k_tok, (B, S), 0, INPUT_DIM, dtype=jnp.int32)

    memory = encoder_forward(token_ids, embedding, pe, packed)
    memory = jax.block_until_ready(memory)

    assert memory.shape == (S, B, DIM_MODEL), memory.shape
    assert memory.dtype == jnp.float32
    assert bool(jnp.all(jnp.isfinite(memory)))
    print("KERNEL_OK")
</pallas_src>

<mosaic_0001>
module attributes {stable_mosaic.version = 11 : i64} {
  func.func @encoder_stack_kernel(%arg0: i32, %arg1: memref<1x8x32xf32, #tpu.memory_space<vmem>>, %arg2: memref<8x32xf32, #tpu.memory_space<vmem>>, %arg3: memref<2x4x32x8xf32, #tpu.memory_space<vmem>>, %arg4: memref<2x4x1x8xf32, #tpu.memory_space<vmem>>, %arg5: memref<2x4x32x8xf32, #tpu.memory_space<vmem>>, %arg6: memref<2x4x1x8xf32, #tpu.memory_space<vmem>>, %arg7: memref<2x4x32x8xf32, #tpu.memory_space<vmem>>, %arg8: memref<2x4x1x8xf32, #tpu.memory_space<vmem>>, %arg9: memref<2x4x8x32xf32, #tpu.memory_space<vmem>>, %arg10: memref<2x1x32xf32, #tpu.memory_space<vmem>>, %arg11: memref<2x1x32xf32, #tpu.memory_space<vmem>>, %arg12: memref<2x1x32xf32, #tpu.memory_space<vmem>>, %arg13: memref<2x32x64xf32, #tpu.memory_space<vmem>>, %arg14: memref<2x1x64xf32, #tpu.memory_space<vmem>>, %arg15: memref<2x64x32xf32, #tpu.memory_space<vmem>>, %arg16: memref<2x1x32xf32, #tpu.memory_space<vmem>>, %arg17: memref<2x1x32xf32, #tpu.memory_space<vmem>>, %arg18: memref<2x1x32xf32, #tpu.memory_space<vmem>>, %arg19: memref<1x8x32xf32, #tpu.memory_space<vmem>>) attributes {dimension_semantics = [#tpu.dimension_semantics<parallel>], iteration_bounds = array<i64: 2>, scalar_prefetch = 0 : i64, scratch_operands = 0 : i64, tpu.core_type = #tpu.core_type<tc>, window_params = [{transform_indices = @transform_0, window_bounds = array<i64: 1, 8, 32>}, {pipeline_mode = #tpu.pipeline_mode<synchronous>, transform_indices = @transform_1, window_bounds = array<i64: 8, 32>}, {pipeline_mode = #tpu.pipeline_mode<synchronous>, transform_indices = @transform_2, window_bounds = array<i64: 2, 4, 32, 8>}, {pipeline_mode = #tpu.pipeline_mode<synchronous>, transform_indices = @transform_3, window_bounds = array<i64: 2, 4, 1, 8>}, {pipeline_mode = #tpu.pipeline_mode<synchronous>, transform_indices = @transform_4, window_bounds = array<i64: 2, 4, 32, 8>}, {pipeline_mode = #tpu.pipeline_mode<synchronous>, transform_indices = @transform_5, window_bounds = array<i64: 2, 4, 1, 8>}, {pipeline_mode = #tpu.pipeline_mode<synchronous>, transform_indices = @transform_6, window_bounds = array<i64: 2, 4, 32, 8>}, {pipeline_mode = #tpu.pipeline_mode<synchronous>, transform_indices = @transform_7, window_bounds = array<i64: 2, 4, 1, 8>}, {pipeline_mode = #tpu.pipeline_mode<synchronous>, transform_indices = @transform_8, window_bounds = array<i64: 2, 4, 8, 32>}, {pipeline_mode = #tpu.pipeline_mode<synchronous>, transform_indices = @transform_9, window_bounds = array<i64: 2, 1, 32>}, {pipeline_mode = #tpu.pipeline_mode<synchronous>, transform_indices = @transform_10, window_bounds = array<i64: 2, 1, 32>}, {pipeline_mode = #tpu.pipeline_mode<synchronous>, transform_indices = @transform_11, window_bounds = array<i64: 2, 1, 32>}, {pipeline_mode = #tpu.pipeline_mode<synchronous>, transform_indices = @transform_12, window_bounds = array<i64: 2, 32, 64>}, {pipeline_mode = #tpu.pipeline_mode<synchronous>, transform_indices = @transform_13, window_bounds = array<i64: 2, 1, 64>}, {pipeline_mode = #tpu.pipeline_mode<synchronous>, transform_indices = @transform_14, window_bounds = array<i64: 2, 64, 32>}, {pipeline_mode = #tpu.pipeline_mode<synchronous>, transform_indices = @transform_15, window_bounds = array<i64: 2, 1, 32>}, {pipeline_mode = #tpu.pipeline_mode<synchronous>, transform_indices = @transform_16, window_bounds = array<i64: 2, 1, 32>}, {pipeline_mode = #tpu.pipeline_mode<synchronous>, transform_indices = @transform_17, window_bounds = array<i64: 2, 1, 32>}, {transform_indices = @transform_18, window_bounds = array<i64: 1, 8, 32>}]} {
    %c0 = arith.constant 0 : index
    %c0_0 = arith.constant 0 : index
    %c0_1 = arith.constant 0 : index
    %0 = vector.load %arg1[%c0, %c0_0, %c0_1] : memref<1x8x32xf32, #tpu.memory_space<vmem>>, vector<1x8x32xf32>
    %1 = vector.shape_cast %0 : vector<1x8x32xf32> to vector<8x32xf32>
    %c0_2 = arith.constant 0 : index
    %c0_3 = arith.constant 0 : index
    %2 = vector.load %arg2[%c0_2, %c0_3] : memref<8x32xf32, #tpu.memory_space<vmem>>, vector<8x32xf32>
    %3 = arith.addf %1, %2 : vector<8x32xf32>
    %c0_4 = arith.constant 0 : index
    %c0_5 = arith.constant 0 : index
    %c0_6 = arith.constant 0 : index
    %c0_7 = arith.constant 0 : index
    %4 = vector.load %arg3[%c0_4, %c0_5, %c0_6, %c0_7] : memref<2x4x32x8xf32, #tpu.memory_space<vmem>>, vector<1x1x32x8xf32>
    %5 = vector.shape_cast %4 : vector<1x1x32x8xf32> to vector<32x8xf32>
    %cst = arith.constant dense<0.000000e+00> : vector<8x8xf32>
    %6 = tpu.matmul %3, %5, %cst {dimension_numbers = #tpu.dot_dimension_numbers<[1], [0], [0], [1], [0, 0, 1, 1], [], []>} : vector<8x32xf32>, vector<32x8xf32>, vector<8x8xf32> -> vector<8x8xf32>
    %c0_8 = arith.constant 0 : index
    %c0_9 = arith.constant 0 : index
    %c0_10 = arith.constant 0 : index
    %c0_11 = arith.constant 0 : index
    %7 = vector.load %arg4[%c0_8, %c0_9, %c0_10, %c0_11] : memref<2x4x1x8xf32, #tpu.memory_space<vmem>>, vector<1x1x1x8xf32>
    %8 = vector.shape_cast %7 : vector<1x1x1x8xf32> to vector<1x8xf32>
    %9 = vector.broadcast %8 : vector<1x8xf32> to vector<8x8xf32>
    %10 = arith.addf %6, %9 : vector<8x8xf32>
    %c0_12 = arith.constant 0 : index
    %c0_13 = arith.constant 0 : index
    %c0_14 = arith.constant 0 : index
    %c0_15 = arith.constant 0 : index
    %11 = vector.load %arg5[%c0_12, %c0_13, %c0_14, %c0_15] : memref<2x4x32x8xf32, #tpu.memory_space<vmem>>, vector<1x1x32x8xf32>
    %12 = vector.shape_cast %11 : vector<1x1x32x8xf32> to vector<32x8xf32>
    %cst_16 = arith.constant dense<0.000000e+00> : vector<8x8xf32>
    %13 = tpu.matmul %3, %12, %cst_16 {dimension_numbers = #tpu.dot_dimension_numbers<[1], [0], [0], [1], [0, 0, 1, 1], [], []>} : vector<8x32xf32>, vector<32x8xf32>, vector<8x8xf32> -> vector<8x8xf32>
    %c0_17 = arith.constant 0 : index
    %c0_18 = arith.constant 0 : index
    %c0_19 = arith.constant 0 : index
    %c0_20 = arith.constant 0 : index
    %14 = vector.load %arg6[%c0_17, %c0_18, %c0_19, %c0_20] : memref<2x4x1x8xf32, #tpu.memory_space<vmem>>, vector<1x1x1x8xf32>
    %15 = vector.shape_cast %14 : vector<1x1x1x8xf32> to vector<1x8xf32>
    %16 = vector.broadcast %15 : vector<1x8xf32> to vector<8x8xf32>
    %17 = arith.addf %13, %16 : vector<8x8xf32>
    %c0_21 = arith.constant 0 : index
    %c0_22 = arith.constant 0 : index
    %c0_23 = arith.constant 0 : index
    %c0_24 = arith.constant 0 : index
    %18 = vector.load %arg7[%c0_21, %c0_22, %c0_23, %c0_24] : memref<2x4x32x8xf32, #tpu.memory_space<vmem>>, vector<1x1x32x8xf32>
    %19 = vector.shape_cast %18 : vector<1x1x32x8xf32> to vector<32x8xf32>
    %cst_25 = arith.constant dense<0.000000e+00> : vector<8x8xf32>
    %20 = tpu.matmul %3, %19, %cst_25 {dimension_numbers = #tpu.dot_dimension_numbers<[1], [0], [0], [1], [0, 0, 1, 1], [], []>} : vector<8x32xf32>, vector<32x8xf32>, vector<8x8xf32> -> vector<8x8xf32>
    %c0_26 = arith.constant 0 : index
    %c0_27 = arith.constant 0 : index
    %c0_28 = arith.constant 0 : index
    %c0_29 = arith.constant 0 : index
    %21 = vector.load %arg8[%c0_26, %c0_27, %c0_28, %c0_29] : memref<2x4x1x8xf32, #tpu.memory_space<vmem>>, vector<1x1x1x8xf32>
    %22 = vector.shape_cast %21 : vector<1x1x1x8xf32> to vector<1x8xf32>
    %23 = vector.broadcast %22 : vector<1x8xf32> to vector<8x8xf32>
    %24 = arith.addf %20, %23 : vector<8x8xf32>
    %cst_30 = arith.constant dense<0.000000e+00> : vector<8x8xf32>
    %25 = tpu.matmul %10, %17, %cst_30 {dimension_numbers = #tpu.dot_dimension_numbers<[1], [1], [0], [0], [0, 0, 1, 0], [], []>} : vector<8x8xf32>, vector<8x8xf32>, vector<8x8xf32> -> vector<8x8xf32>
    %cst_31 = arith.constant dense<0xFF800000> : vector<8xf32>
    %26 = vector.multi_reduction <maximumf>, %25, %cst_31 [1] : vector<8x8xf32> to vector<8xf32>
    %27 = vector.shape_cast %26 : vector<8xf32> to vector<8x1xf32>
    %28 = vector.broadcast %27 : vector<8x1xf32> to vector<8x8xf32>
    %29 = arith.subf %25, %28 : vector<8x8xf32>
    %30 = math.exp %29 : vector<8x8xf32>
    %cst_32 = arith.constant dense<0.000000e+00> : vector<8xf32>
    %31 = vector.multi_reduction <add>, %30, %cst_32 [1] : vector<8x8xf32> to vector<8xf32>
    %32 = vector.shape_cast %31 : vector<8xf32> to vector<8x1xf32>
    %33 = tpu.reciprocal %32 {approx = true} : vector<8x1xf32> -> vector<8x1xf32>
    %34 = vector.broadcast %33 : vector<8x1xf32> to vector<8x8xf32>
    %35 = arith.mulf %30, %34 : vector<8x8xf32>
    %cst_33 = arith.constant dense<0.000000e+00> : vector<8x8xf32>
    %36 = tpu.matmul %35, %24, %cst_33 {dimension_numbers = #tpu.dot_dimension_numbers<[1], [0], [0], [1], [0, 0, 1, 1], [], []>} : vector<8x8xf32>, vector<8x8xf32>, vector<8x8xf32> -> vector<8x8xf32>
    %c0_34 = arith.constant 0 : index
    %c0_35 = arith.constant 0 : index
    %c0_36 = arith.constant 0 : index
    %c0_37 = arith.constant 0 : index
    %37 = vector.load %arg9[%c0_34, %c0_35, %c0_36, %c0_37] : memref<2x4x8x32xf32, #tpu.memory_space<vmem>>, vector<1x1x8x32xf32>
    %38 = vector.shape_cast %37 : vector<1x1x8x32xf32> to vector<8x32xf32>
    %cst_38 = arith.constant dense<0.000000e+00> : vector<8x32xf32>
    %39 = tpu.matmul %36, %38, %cst_38 {dimension_numbers = #tpu.dot_dimension_numbers<[1], [0], [0], [1], [0, 0, 1, 1], [], []>} : vector<8x8xf32>, vector<8x32xf32>, vector<8x32xf32> -> vector<8x32xf32>
    %c0_39 = arith.constant 0 : index
    %c1 = arith.constant 1 : index
    %c0_40 = arith.constant 0 : index
    %c0_41 = arith.constant 0 : index
    %40 = vector.load %arg3[%c0_39, %c1, %c0_40, %c0_41] : memref<2x4x32x8xf32, #tpu.memory_space<vmem>>, vector<1x1x32x8xf32>
    %41 = vector.shape_cast %40 : vector<1x1x32x8xf32> to vector<32x8xf32>
    %cst_42 = arith.constant dense<0.000000e+00> : vector<8x8xf32>
    %42 = tpu.matmul %3, %41, %cst_42 {dimension_numbers = #tpu.dot_dimension_numbers<[1], [0], [0], [1], [0, 0, 1, 1], [], []>} : vector<8x32xf32>, vector<32x8xf32>, vector<8x8xf32> -> vector<8x8xf32>
    %c0_43 = arith.constant 0 : index
    %c1_44 = arith.constant 1 : index
    %c0_45 = arith.constant 0 : index
    %c0_46 = arith.constant 0 : index
    %43 = vector.load %arg4[%c0_43, %c1_44, %c0_45, %c0_46] : memref<2x4x1x8xf32, #tpu.memory_space<vmem>>, vector<1x1x1x8xf32>
    %44 = vector.shape_cast %43 : vector<1x1x1x8xf32> to vector<1x8xf32>
    %45 = vector.broadcast %44 : vector<1x8xf32> to vector<8x8xf32>
    %46 = arith.addf %42, %45 : vector<8x8xf32>
    %c0_47 = arith.constant 0 : index
    %c1_48 = arith.constant 1 : index
    %c0_49 = arith.constant 0 : index
    %c0_50 = arith.constant 0 : index
    %47 = vector.load %arg5[%c0_47, %c1_48, %c0_49, %c0_50] : memref<2x4x32x8xf32, #tpu.memory_space<vmem>>, vector<1x1x32x8xf32>
    %48 = vector.shape_cast %47 : vector<1x1x32x8xf32> to vector<32x8xf32>
    %cst_51 = arith.constant dense<0.000000e+00> : vector<8x8xf32>
    %49 = tpu.matmul %3, %48, %cst_51 {dimension_numbers = #tpu.dot_dimension_numbers<[1], [0], [0], [1], [0, 0, 1, 1], [], []>} : vector<8x32xf32>, vector<32x8xf32>, vector<8x8xf32> -> vector<8x8xf32>
    %c0_52 = arith.constant 0 : index
    %c1_53 = arith.constant 1 : index
    %c0_54 = arith.constant 0 : index
    %c0_55 = arith.constant 0 : index
    %50 = vector.load %arg6[%c0_52, %c1_53, %c0_54, %c0_55] : memref<2x4x1x8xf32, #tpu.memory_space<vmem>>, vector<1x1x1x8xf32>
    %51 = vector.shape_cast %50 : vector<1x1x1x8xf32> to vector<1x8xf32>
    %52 = vector.broadcast %51 : vector<1x8xf32> to vector<8x8xf32>
    %53 = arith.addf %49, %52 : vector<8x8xf32>
    %c0_56 = arith.constant 0 : index
    %c1_57 = arith.constant 1 : index
    %c0_58 = arith.constant 0 : index
    %c0_59 = arith.constant 0 : index
    %54 = vector.load %arg7[%c0_56, %c1_57, %c0_58, %c0_59] : memref<2x4x32x8xf32, #tpu.memory_space<vmem>>, vector<1x1x32x8xf32>
    %55 = vector.shape_cast %54 : vector<1x1x32x8xf32> to vector<32x8xf32>
    %cst_60 = arith.constant dense<0.000000e+00> : vector<8x8xf32>
    %56 = tpu.matmul %3, %55, %cst_60 {dimension_numbers = #tpu.dot_dimension_numbers<[1], [0], [0], [1], [0, 0, 1, 1], [], []>} : vector<8x32xf32>, vector<32x8xf32>, vector<8x8xf32> -> vector<8x8xf32>
    %c0_61 = arith.constant 0 : index
    %c1_62 = arith.constant 1 : index
    %c0_63 = arith.constant 0 : index
    %c0_64 = arith.constant 0 : index
    %57 = vector.load %arg8[%c0_61, %c1_62, %c0_63, %c0_64] : memref<2x4x1x8xf32, #tpu.memory_space<vmem>>, vector<1x1x1x8xf32>
    %58 = vector.shape_cast %57 : vector<1x1x1x8xf32> to vector<1x8xf32>
    %59 = vector.broadcast %58 : vector<1x8xf32> to vector<8x8xf32>
    %60 = arith.addf %56, %59 : vector<8x8xf32>
    %cst_65 = arith.constant dense<0.000000e+00> : vector<8x8xf32>
    %61 = tpu.matmul %46, %53, %cst_65 {dimension_numbers = #tpu.dot_dimension_numbers<[1], [1], [0], [0], [0, 0, 1, 0], [], []>} : vector<8x8xf32>, vector<8x8xf32>, vector<8x8xf32> -> vector<8x8xf32>
    %cst_66 = arith.constant dense<0xFF800000> : vector<8xf32>
    %62 = vector.multi_reduction <maximumf>, %61, %cst_66 [1] : vector<8x8xf32> to vector<8xf32>
    %63 = vector.shape_cast %62 : vector<8xf32> to vector<8x1xf32>
    %64 = vector.broadcast %63 : vector<8x1xf32> to vector<8x8xf32>
    %65 = arith.subf %61, %64 : vector<8x8xf32>
    %66 = math.exp %65 : vector<8x8xf32>
    %cst_67 = arith.constant dense<0.000000e+00> : vector<8xf32>
    %67 = vector.multi_reduction <add>, %66, %cst_67 [1] : vector<8x8xf32> to vector<8xf32>
    %68 = vector.shape_cast %67 : vector<8xf32> to vector<8x1xf32>
    %69 = tpu.reciprocal %68 {approx = true} : vector<8x1xf32> -> vector<8x1xf32>
    %70 = vector.broadcast %69 : vector<8x1xf32> to vector<8x8xf32>
    %71 = arith.mulf %66, %70 : vector<8x8xf32>
    %cst_68 = arith.constant dense<0.000000e+00> : vector<8x8xf32>
    %72 = tpu.matmul %71, %60, %cst_68 {dimension_numbers = #tpu.dot_dimension_numbers<[1], [0], [0], [1], [0, 0, 1, 1], [], []>} : vector<8x8xf32>, vector<8x8xf32>, vector<8x8xf32> -> vector<8x8xf32>
    %c0_69 = arith.constant 0 : index
    %c1_70 = arith.constant 1 : index
    %c0_71 = arith.constant 0 : index
    %c0_72 = arith.constant 0 : index
    %73 = vector.load %arg9[%c0_69, %c1_70, %c0_71, %c0_72] : memref<2x4x8x32xf32, #tpu.memory_space<vmem>>, vector<1x1x8x32xf32>
    %74 = vector.shape_cast %73 : vector<1x1x8x32xf32> to vector<8x32xf32>
    %cst_73 = arith.constant dense<0.000000e+00> : vector<8x32xf32>
    %75 = tpu.matmul %72, %74, %cst_73 {dimension_numbers = #tpu.dot_dimension_numbers<[1], [0], [0], [1], [0, 0, 1, 1], [], []>} : vector<8x8xf32>, vector<8x32xf32>, vector<8x32xf32> -> vector<8x32xf32>
    %76 = arith.addf %39, %75 : vector<8x32xf32>
    %c0_74 = arith.constant 0 : index
    %c2 = arith.constant 2 : index
    %c0_75 = arith.constant 0 : index
    %c0_76 = arith.constant 0 : index
    %77 = vector.load %arg3[%c0_74, %c2, %c0_75, %c0_76] : memref<2x4x32x8xf32, #tpu.memory_space<vmem>>, vector<1x1x32x8xf32>
    %78 = vector.shape_cast %77 : vector<1x1x32x8xf32> to vector<32x8xf32>
    %cst_77 = arith.constant dense<0.000000e+00> : vector<8x8xf32>
    %79 = tpu.matmul %3, %78, %cst_77 {dimension_numbers = #tpu.dot_dimension_numbers<[1], [0], [0], [1], [0, 0, 1, 1], [], []>} : vector<8x32xf32>, vector<32x8xf32>, vector<8x8xf32> -> vector<8x8xf32>
    %c0_78 = arith.constant 0 : index
    %c2_79 = arith.constant 2 : index
    %c0_80 = arith.constant 0 : index
    %c0_81 = arith.constant 0 : index
    %80 = vector.load %arg4[%c0_78, %c2_79, %c0_80, %c0_81] : memref<2x4x1x8xf32, #tpu.memory_space<vmem>>, vector<1x1x1x8xf32>
    %81 = vector.shape_cast %80 : vector<1x1x1x8xf32> to vector<1x8xf32>
    %82 = vector.broadcast %81 : vector<1x8xf32> to vector<8x8xf32>
    %83 = arith.addf %79, %82 : vector<8x8xf32>
    %c0_82 = arith.constant 0 : index
    %c2_83 = arith.constant 2 : index
    %c0_84 = arith.constant 0 : index
    %c0_85 = arith.constant 0 : index
    %84 = vector.load %arg5[%c0_82, %c2_83, %c0_84, %c0_85] : memref<2x4x32x8xf32, #tpu.memory_space<vmem>>, vector<1x1x32x8xf32>
    %85 = vector.shape_cast %84 : vector<1x1x32x8xf32> to vector<32x8xf32>
    %cst_86 = arith.constant dense<0.000000e+00> : vector<8x8xf32>
    %86 = tpu.matmul %3, %85, %cst_86 {dimension_numbers = #tpu.dot_dimension_numbers<[1], [0], [0], [1], [0, 0, 1, 1], [], []>} : vector<8x32xf32>, vector<32x8xf32>, vector<8x8xf32> -> vector<8x8xf32>
    %c0_87 = arith.constant 0 : index
    %c2_88 = arith.constant 2 : index
    %c0_89 = arith.constant 0 : index
    %c0_90 = arith.constant 0 : index
    %87 = vector.load %arg6[%c0_87, %c2_88, %c0_89, %c0_90] : memref<2x4x1x8xf32, #tpu.memory_space<vmem>>, vector<1x1x1x8xf32>
    %88 = vector.shape_cast %87 : vector<1x1x1x8xf32> to vector<1x8xf32>
    %89 = vector.broadcast %88 : vector<1x8xf32> to vector<8x8xf32>
    %90 = arith.addf %86, %89 : vector<8x8xf32>
    %c0_91 = arith.constant 0 : index
    %c2_92 = arith.constant 2 : index
    %c0_93 = arith.constant 0 : index
    %c0_94 = arith.constant 0 : index
    %91 = vector.load %arg7[%c0_91, %c2_92, %c0_93, %c0_94] : memref<2x4x32x8xf32, #tpu.memory_space<vmem>>, vector<1x1x32x8xf32>
    %92 = vector.shape_cast %91 : vector<1x1x32x8xf32> to vector<32x8xf32>
    %cst_95 = arith.constant dense<0.000000e+00> : vector<8x8xf32>
    %93 = tpu.matmul %3, %92, %cst_95 {dimension_numbers = #tpu.dot_dimension_numbers<[1], [0], [0], [1], [0, 0, 1, 1], [], []>} : vector<8x32xf32>, vector<32x8xf32>, vector<8x8xf32> -> vector<8x8xf32>
    %c0_96 = arith.constant 0 : index
    %c2_97 = arith.constant 2 : index
    %c0_98 = arith.constant 0 : index
    %c0_99 = arith.constant 0 : index
    %94 = vector.load %arg8[%c0_96, %c2_97, %c0_98, %c0_99] : memref<2x4x1x8xf32, #tpu.memory_space<vmem>>, vector<1x1x1x8xf32>
    %95 = vector.shape_cast %94 : vector<1x1x1x8xf32> to vector<1x8xf32>
    %96 = vector.broadcast %95 : vector<1x8xf32> to vector<8x8xf32>
    %97 = arith.addf %93, %96 : vector<8x8xf32>
    %cst_100 = arith.constant dense<0.000000e+00> : vector<8x8xf32>
    %98 = tpu.matmul %83, %90, %cst_100 {dimension_numbers = #tpu.dot_dimension_numbers<[1], [1], [0], [0], [0, 0, 1, 0], [], []>} : vector<8x8xf32>, vector<8x8xf32>, vector<8x8xf32> -> vector<8x8xf32>
    %cst_101 = arith.constant dense<0xFF800000> : vector<8xf32>
    %99 = vector.multi_reduction <maximumf>, %98, %cst_101 [1] : vector<8x8xf32> to vector<8xf32>
    %100 = vector.shape_cast %99 : vector<8xf32> to vector<8x1xf32>
    %101 = vector.broadcast %100 : vector<8x1xf32> to vector<8x8xf32>
    %102 = arith.subf %98, %101 : vector<8x8xf32>
    %103 = math.exp %102 : vector<8x8xf32>
    %cst_102 = arith.constant dense<0.000000e+00> : vector<8xf32>
    %104 = vector.multi_reduction <add>, %103, %cst_102 [1] : vector<8x8xf32> to vector<8xf32>
    %105 = vector.shape_cast %104 : vector<8xf32> to vector<8x1xf32>
    %106 = tpu.reciprocal %105 {approx = true} : vector<8x1xf32> -> vector<8x1xf32>
    %107 = vector.broadcast %106 : vector<8x1xf32> to vector<8x8xf32>
    %108 = arith.mulf %103, %107 : vector<8x8xf32>
    %cst_103 = arith.constant dense<0.000000e+00> : vector<8x8xf32>
    %109 = tpu.matmul %108, %97, %cst_103 {dimension_numbers = #tpu.dot_dimension_numbers<[1], [0], [0], [1], [0, 0, 1, 1], [], []>} : vector<8x8xf32>, vector<8x8xf32>, vector<8x8xf32> -> vector<8x8xf32>
    %c0_104 = arith.constant 0 : index
    %c2_105 = arith.constant 2 : index
    %c0_106 = arith.constant 0 : index
    %c0_107 = arith.constant 0 : index
    %110 = vector.load %arg9[%c0_104, %c2_105, %c0_106, %c0_107] : memref<2x4x8x32xf32, #tpu.memory_space<vmem>>, vector<1x1x8x32xf32>
    %111 = vector.shape_cast %110 : vector<1x1x8x32xf32> to vector<8x32xf32>
    %cst_108 = arith.constant dense<0.000000e+00> : vector<8x32xf32>
    %112 = tpu.matmul %109, %111, %cst_108 {dimension_numbers = #tpu.dot_dimension_numbers<[1], [0], [0], [1], [0, 0, 1, 1], [], []>} : vector<8x8xf32>, vector<8x32xf32>, vector<8x32xf32> -> vector<8x32xf32>
    %113 = arith.addf %76, %112 : vector<8x32xf32>
    %c0_109 = arith.constant 0 : index
    %c3 = arith.constant 3 : index
    %c0_110 = arith.constant 0 : index
    %c0_111 = arith.constant 0 : index
    %114 = vector.load %arg3[%c0_109, %c3, %c0_110, %c0_111] : memref<2x4x32x8xf32, #tpu.memory_space<vmem>>, vector<1x1x32x8xf32>
    %115 = vector.shape_cast %114 : vector<1x1x32x8xf32> to vector<32x8xf32>
    %cst_112 = arith.constant dense<0.000000e+00> : vector<8x8xf32>
    %116 = tpu.matmul %3, %115, %cst_112 {dimension_numbers = #tpu.dot_dimension_numbers<[1], [0], [0], [1], [0, 0, 1, 1], [], []>} : vector<8x32xf32>, vector<32x8xf32>, vector<8x8xf32> -> vector<8x8xf32>
    %c0_113 = arith.constant 0 : index
    %c3_114 = arith.constant 3 : index
    %c0_115 = arith.constant 0 : index
    %c0_116 = arith.constant 0 : index
    %117 = vector.load %arg4[%c0_113, %c3_114, %c0_115, %c0_116] : memref<2x4x1x8xf32, #tpu.memory_space<vmem>>, vector<1x1x1x8xf32>
    %118 = vector.shape_cast %117 : vector<1x1x1x8xf32> to vector<1x8xf32>
    %119 = vector.broadcast %118 : vector<1x8xf32> to vector<8x8xf32>
    %120 = arith.addf %116, %119 : vector<8x8xf32>
    %c0_117 = arith.constant 0 : index
    %c3_118 = arith.constant 3 : index
    %c0_119 = arith.constant 0 : index
    %c0_120 = arith.constant 0 : index
    %121 = vector.load %arg5[%c0_117, %c3_118, %c0_119, %c0_120] : memref<2x4x32x8xf32, #tpu.memory_space<vmem>>, vector<1x1x32x8xf32>
    %122 = vector.shape_cast %121 : vector<1x1x32x8xf32> to vector<32x8xf32>
    %cst_121 = arith.constant dense<0.000000e+00> : vector<8x8xf32>
    %123 = tpu.matmul %3, %122, %cst_121 {dimension_numbers = #tpu.dot_dimension_numbers<[1], [0], [0], [1], [0, 0, 1, 1], [], []>} : vector<8x32xf32>, vector<32x8xf32>, vector<8x8xf32> -> vector<8x8xf32>
    %c0_122 = arith.constant 0 : index
    %c3_123 = arith.constant 3 : index
    %c0_124 = arith.constant 0 : index
    %c0_125 = arith.constant 0 : index
    %124 = vector.load %arg6[%c0_122, %c3_123, %c0_124, %c0_125] : memref<2x4x1x8xf32, #tpu.memory_space<vmem>>, vector<1x1x1x8xf32>
    %125 = vector.shape_cast %124 : vector<1x1x1x8xf32> to vector<1x8xf32>
    %126 = vector.broadcast %125 : vector<1x8xf32> to vector<8x8xf32>
    %127 = arith.addf %123, %126 : vector<8x8xf32>
    %c0_126 = arith.constant 0 : index
    %c3_127 = arith.constant 3 : index
    %c0_128 = arith.constant 0 : index
    %c0_129 = arith.constant 0 : index
    %128 = vector.load %arg7[%c0_126, %c3_127, %c0_128, %c0_129] : memref<2x4x32x8xf32, #tpu.memory_space<vmem>>, vector<1x1x32x8xf32>
    %129 = vector.shape_cast %128 : vector<1x1x32x8xf32> to vector<32x8xf32>
    %cst_130 = arith.constant dense<0.000000e+00> : vector<8x8xf32>
    %130 = tpu.matmul %3, %129, %cst_130 {dimension_numbers = #tpu.dot_dimension_numbers<[1], [0], [0], [1], [0, 0, 1, 1], [], []>} : vector<8x32xf32>, vector<32x8xf32>, vector<8x8xf32> -> vector<8x8xf32>
    %c0_131 = arith.constant 0 : index
    %c3_132 = arith.constant 3 : index
    %c0_133 = arith.constant 0 : index
    %c0_134 = arith.constant 0 : index
    %131 = vector.load %arg8[%c0_131, %c3_132, %c0_133, %c0_134] : memref<2x4x1x8xf32, #tpu.memory_space<vmem>>, vector<1x1x1x8xf32>
    %132 = vector.shape_cast %131 : vector<1x1x1x8xf32> to vector<1x8xf32>
    %133 = vector.broadcast %132 : vector<1x8xf32> to vector<8x8xf32>
    %134 = arith.addf %130, %133 : vector<8x8xf32>
    %cst_135 = arith.constant dense<0.000000e+00> : vector<8x8xf32>
    %135 = tpu.matmul %120, %127, %cst_135 {dimension_numbers = #tpu.dot_dimension_numbers<[1], [1], [0], [0], [0, 0, 1, 0], [], []>} : vector<8x8xf32>, vector<8x8xf32>, vector<8x8xf32> -> vector<8x8xf32>
    %cst_136 = arith.constant dense<0xFF800000> : vector<8xf32>
    %136 = vector.multi_reduction <maximumf>, %135, %cst_136 [1] : vector<8x8xf32> to vector<8xf32>
    %137 = vector.shape_cast %136 : vector<8xf32> to vector<8x1xf32>
    %138 = vector.broadcast %137 : vector<8x1xf32> to vector<8x8xf32>
    %139 = arith.subf %135, %138 : vector<8x8xf32>
    %140 = math.exp %139 : vector<8x8xf32>
    %cst_137 = arith.constant dense<0.000000e+00> : vector<8xf32>
    %141 = vector.multi_reduction <add>, %140, %cst_137 [1] : vector<8x8xf32> to vector<8xf32>
    %142 = vector.shape_cast %141 : vector<8xf32> to vector<8x1xf32>
    %143 = tpu.reciprocal %142 {approx = true} : vector<8x1xf32> -> vector<8x1xf32>
    %144 = vector.broadcast %143 : vector<8x1xf32> to vector<8x8xf32>
    %145 = arith.mulf %140, %144 : vector<8x8xf32>
    %cst_138 = arith.constant dense<0.000000e+00> : vector<8x8xf32>
    %146 = tpu.matmul %145, %134, %cst_138 {dimension_numbers = #tpu.dot_dimension_numbers<[1], [0], [0], [1], [0, 0, 1, 1], [], []>} : vector<8x8xf32>, vector<8x8xf32>, vector<8x8xf32> -> vector<8x8xf32>
    %c0_139 = arith.constant 0 : index
    %c3_140 = arith.constant 3 : index
    %c0_141 = arith.constant 0 : index
    %c0_142 = arith.constant 0 : index
    %147 = vector.load %arg9[%c0_139, %c3_140, %c0_141, %c0_142] : memref<2x4x8x32xf32, #tpu.memory_space<vmem>>, vector<1x1x8x32xf32>
    %148 = vector.shape_cast %147 : vector<1x1x8x32xf32> to vector<8x32xf32>
    %cst_143 = arith.constant dense<0.000000e+00> : vector<8x32xf32>
    %149 = tpu.matmul %146, %148, %cst_143 {dimension_numbers = #tpu.dot_dimension_numbers<[1], [0], [0], [1], [0, 0, 1, 1], [], []>} : vector<8x8xf32>, vector<8x32xf32>, vector<8x32xf32> -> vector<8x32xf32>
    %150 = arith.addf %113, %149 : vector<8x32xf32>
    %c0_144 = arith.constant 0 : index
    %c0_145 = arith.constant 0 : index
    %c0_146 = arith.constant 0 : index
    %151 = vector.load %arg10[%c0_144, %c0_145, %c0_146] : memref<2x1x32xf32, #tpu.memory_space<vmem>>, vector<1x1x32xf32>
    %152 = vector.shape_cast %151 : vector<1x1x32xf32> to vector<1x32xf32>
    %153 = vector.broadcast %152 : vector<1x32xf32> to vector<8x32xf32>
    %154 = arith.addf %150, %153 : vector<8x32xf32>
    %155 = arith.addf %3, %154 : vector<8x32xf32>
    %c0_147 = arith.constant 0 : index
    %c0_148 = arith.constant 0 : index
    %c0_149 = arith.constant 0 : index
    %156 = vector.load %arg11[%c0_147, %c0_148, %c0_149] : memref<2x1x32xf32, #tpu.memory_space<vmem>>, vector<1x1x32xf32>
    %157 = vector.shape_cast %156 : vector<1x1x32xf32> to vector<1x32xf32>
    %c0_150 = arith.constant 0 : index
    %c0_151 = arith.constant 0 : index
    %c0_152 = arith.constant 0 : index
    %158 = vector.load %arg12[%c0_150, %c0_151, %c0_152] : memref<2x1x32xf32, #tpu.memory_space<vmem>>, vector<1x1x32xf32>
    %159 = vector.shape_cast %158 : vector<1x1x32xf32> to vector<1x32xf32>
    %cst_153 = arith.constant dense<0.000000e+00> : vector<8xf32>
    %160 = vector.multi_reduction <add>, %155, %cst_153 [1] : vector<8x32xf32> to vector<8xf32>
    %161 = vector.shape_cast %160 : vector<8xf32> to vector<8x1xf32>
    %cst_154 = arith.constant 3.200000e+01 : f32
    %162 = vector.broadcast %cst_154 : f32 to vector<8x1xf32>
    %163 = arith.divf %161, %162 : vector<8x1xf32>
    %164 = vector.broadcast %163 : vector<8x1xf32> to vector<8x32xf32>
    %165 = arith.subf %155, %164 : vector<8x32xf32>
    %166 = arith.mulf %165, %165 : vector<8x32xf32>
    %cst_155 = arith.constant dense<0.000000e+00> : vector<8xf32>
    %167 = vector.multi_reduction <add>, %166, %cst_155 [1] : vector<8x32xf32> to vector<8xf32>
    %168 = vector.shape_cast %167 : vector<8xf32> to vector<8x1xf32>
    %cst_156 = arith.constant 3.200000e+01 : f32
    %169 = vector.broadcast %cst_156 : f32 to vector<8x1xf32>
    %170 = arith.divf %168, %169 : vector<8x1xf32>
    %171 = vector.broadcast %163 : vector<8x1xf32> to vector<8x32xf32>
    %172 = arith.subf %155, %171 : vector<8x32xf32>
    %cst_157 = arith.constant 9.99999974E-6 : f32
    %173 = vector.broadcast %cst_157 : f32 to vector<8x1xf32>
    %174 = arith.addf %170, %173 : vector<8x1xf32>
    %175 = math.rsqrt %174 : vector<8x1xf32>
    %176 = vector.broadcast %175 : vector<8x1xf32> to vector<8x32xf32>
    %177 = arith.mulf %172, %176 : vector<8x32xf32>
    %178 = vector.broadcast %157 : vector<1x32xf32> to vector<8x32xf32>
    %179 = arith.mulf %177, %178 : vector<8x32xf32>
    %180 = vector.broadcast %159 : vector<1x32xf32> to vector<8x32xf32>
    %181 = arith.addf %179, %180 : vector<8x32xf32>
    %c0_158 = arith.constant 0 : index
    %c0_159 = arith.constant 0 : index
    %c0_160 = arith.constant 0 : index
    %182 = vector.load %arg13[%c0_158, %c0_159, %c0_160] : memref<2x32x64xf32, #tpu.memory_space<vmem>>, vector<1x32x64xf32>
    %183 = vector.shape_cast %182 : vector<1x32x64xf32> to vector<32x64xf32>
    %cst_161 = arith.constant dense<0.000000e+00> : vector<8x64xf32>
    %184 = tpu.matmul %181, %183, %cst_161 {dimension_numbers = #tpu.dot_dimension_numbers<[1], [0], [0], [1], [0, 0, 1, 1], [], []>} : vector<8x32xf32>, vector<32x64xf32>, vector<8x64xf32> -> vector<8x64xf32>
    %c0_162 = arith.constant 0 : index
    %c0_163 = arith.constant 0 : index
    %c0_164 = arith.constant 0 : index
    %185 = vector.load %arg14[%c0_162, %c0_163, %c0_164] : memref<2x1x64xf32, #tpu.memory_space<vmem>>, vector<1x1x64xf32>
    %186 = vector.shape_cast %185 : vector<1x1x64xf32> to vector<1x64xf32>
    %187 = vector.broadcast %186 : vector<1x64xf32> to vector<8x64xf32>
    %188 = arith.addf %184, %187 : vector<8x64xf32>
    %cst_165 = arith.constant 0.000000e+00 : f32
    %189 = vector.broadcast %cst_165 : f32 to vector<8x64xf32>
    %190 = arith.maximumf %188, %189 : vector<8x64xf32>
    %c0_166 = arith.constant 0 : index
    %c0_167 = arith.constant 0 : index
    %c0_168 = arith.constant 0 : index
    %191 = vector.load %arg15[%c0_166, %c0_167, %c0_168] : memref<2x64x32xf32, #tpu.memory_space<vmem>>, vector<1x64x32xf32>
    %192 = vector.shape_cast %191 : vector<1x64x32xf32> to vector<64x32xf32>
    %cst_169 = arith.constant dense<0.000000e+00> : vector<8x32xf32>
    %193 = tpu.matmul %190, %192, %cst_169 {dimension_numbers = #tpu.dot_dimension_numbers<[1], [0], [0], [1], [0, 0, 1, 1], [], []>} : vector<8x64xf32>, vector<64x32xf32>, vector<8x32xf32> -> vector<8x32xf32>
    %c0_170 = arith.constant 0 : index
    %c0_171 = arith.constant 0 : index
    %c0_172 = arith.constant 0 : index
    %194 = vector.load %arg16[%c0_170, %c0_171, %c0_172] : memref<2x1x32xf32, #tpu.memory_space<vmem>>, vector<1x1x32xf32>
    %195 = vector.shape_cast %194 : vector<1x1x32xf32> to vector<1x32xf32>
    %196 = vector.broadcast %195 : vector<1x32xf32> to vector<8x32xf32>
    %197 = arith.addf %193, %196 : vector<8x32xf32>
    %198 = arith.addf %181, %197 : vector<8x32xf32>
    %c0_173 = arith.constant 0 : index
    %c0_174 = arith.constant 0 : index
    %c0_175 = arith.constant 0 : index
    %199 = vector.load %arg17[%c0_173, %c0_174, %c0_175] : memref<2x1x32xf32, #tpu.memory_space<vmem>>, vector<1x1x32xf32>
    %200 = vector.shape_cast %199 : vector<1x1x32xf32> to vector<1x32xf32>
    %c0_176 = arith.constant 0 : index
    %c0_177 = arith.constant 0 : index
    %c0_178 = arith.constant 0 : index
    %201 = vector.load %arg18[%c0_176, %c0_177, %c0_178] : memref<2x1x32xf32, #tpu.memory_space<vmem>>, vector<1x1x32xf32>
    %202 = vector.shape_cast %201 : vector<1x1x32xf32> to vector<1x32xf32>
    %cst_179 = arith.constant dense<0.000000e+00> : vector<8xf32>
    %203 = vector.multi_reduction <add>, %198, %cst_179 [1] : vector<8x32xf32> to vector<8xf32>
    %204 = vector.shape_cast %203 : vector<8xf32> to vector<8x1xf32>
    %cst_180 = arith.constant 3.200000e+01 : f32
    %205 = vector.broadcast %cst_180 : f32 to vector<8x1xf32>
    %206 = arith.divf %204, %205 : vector<8x1xf32>
    %207 = vector.broadcast %206 : vector<8x1xf32> to vector<8x32xf32>
    %208 = arith.subf %198, %207 : vector<8x32xf32>
    %209 = arith.mulf %208, %208 : vector<8x32xf32>
    %cst_181 = arith.constant dense<0.000000e+00> : vector<8xf32>
    %210 = vector.multi_reduction <add>, %209, %cst_181 [1] : vector<8x32xf32> to vector<8xf32>
    %211 = vector.shape_cast %210 : vector<8xf32> to vector<8x1xf32>
    %cst_182 = arith.constant 3.200000e+01 : f32
    %212 = vector.broadcast %cst_182 : f32 to vector<8x1xf32>
    %213 = arith.divf %211, %212 : vector<8x1xf32>
    %214 = vector.broadcast %206 : vector<8x1xf32> to vector<8x32xf32>
    %215 = arith.subf %198, %214 : vector<8x32xf32>
    %cst_183 = arith.constant 9.99999974E-6 : f32
    %216 = vector.broadcast %cst_183 : f32 to vector<8x1xf32>
    %217 = arith.addf %213, %216 : vector<8x1xf32>
    %218 = math.rsqrt %217 : vector<8x1xf32>
    %219 = vector.broadcast %218 : vector<8x1xf32> to vector<8x32xf32>
    %220 = arith.mulf %215, %219 : vector<8x32xf32>
    %221 = vector.broadcast %200 : vector<1x32xf32> to vector<8x32xf32>
    %222 = arith.mulf %220, %221 : vector<8x32xf32>
    %223 = vector.broadcast %202 : vector<1x32xf32> to vector<8x32xf32>
    %224 = arith.addf %222, %223 : vector<8x32xf32>
    %c1_184 = arith.constant 1 : index
    %c0_185 = arith.constant 0 : index
    %c0_186 = arith.constant 0 : index
    %c0_187 = arith.constant 0 : index
    %225 = vector.load %arg3[%c1_184, %c0_185, %c0_186, %c0_187] : memref<2x4x32x8xf32, #tpu.memory_space<vmem>>, vector<1x1x32x8xf32>
    %226 = vector.shape_cast %225 : vector<1x1x32x8xf32> to vector<32x8xf32>
    %cst_188 = arith.constant dense<0.000000e+00> : vector<8x8xf32>
    %227 = tpu.matmul %224, %226, %cst_188 {dimension_numbers = #tpu.dot_dimension_numbers<[1], [0], [0], [1], [0, 0, 1, 1], [], []>} : vector<8x32xf32>, vector<32x8xf32>, vector<8x8xf32> -> vector<8x8xf32>
    %c1_189 = arith.constant 1 : index
    %c0_190 = arith.constant 0 : index
    %c0_191 = arith.constant 0 : index
    %c0_192 = arith.constant 0 : index
    %228 = vector.load %arg4[%c1_189, %c0_190, %c0_191, %c0_192] : memref<2x4x1x8xf32, #tpu.memory_space<vmem>>, vector<1x1x1x8xf32>
    %229 = vector.shape_cast %228 : vector<1x1x1x8xf32> to vector<1x8xf32>
    %230 = vector.broadcast %229 : vector<1x8xf32> to vector<8x8xf32>
    %231 = arith.addf %227, %230 : vector<8x8xf32>
    %c1_193 = arith.constant 1 : index
    %c0_194 = arith.constant 0 : index
    %c0_195 = arith.constant 0 : index
    %c0_196 = arith.constant 0 : index
    %232 = vector.load %arg5[%c1_193, %c0_194, %c0_195, %c0_196] : memref<2x4x32x8xf32, #tpu.memory_space<vmem>>, vector<1x1x32x8xf32>
    %233 = vector.shape_cast %232 : vector<1x1x32x8xf32> to vector<32x8xf32>
    %cst_197 = arith.constant dense<0.000000e+00> : vector<8x8xf32>
    %234 = tpu.matmul %224, %233, %cst_197 {dimension_numbers = #tpu.dot_dimension_numbers<[1], [0], [0], [1], [0, 0, 1, 1], [], []>} : vector<8x32xf32>, vector<32x8xf32>, vector<8x8xf32> -> vector<8x8xf32>
    %c1_198 = arith.constant 1 : index
    %c0_199 = arith.constant 0 : index
    %c0_200 = arith.constant 0 : index
    %c0_201 = arith.constant 0 : index
    %235 = vector.load %arg6[%c1_198, %c0_199, %c0_200, %c0_201] : memref<2x4x1x8xf32, #tpu.memory_space<vmem>>, vector<1x1x1x8xf32>
    %236 = vector.shape_cast %235 : vector<1x1x1x8xf32> to vector<1x8xf32>
    %237 = vector.broadcast %236 : vector<1x8xf32> to vector<8x8xf32>
    %238 = arith.addf %234, %237 : vector<8x8xf32>
    %c1_202 = arith.constant 1 : index
    %c0_203 = arith.constant 0 : index
    %c0_204 = arith.constant 0 : index
    %c0_205 = arith.constant 0 : index
    %239 = vector.load %arg7[%c1_202, %c0_203, %c0_204, %c0_205] : memref<2x4x32x8xf32, #tpu.memory_space<vmem>>, vector<1x1x32x8xf32>
    %240 = vector.shape_cast %239 : vector<1x1x32x8xf32> to vector<32x8xf32>
    %cst_206 = arith.constant dense<0.000000e+00> : vector<8x8xf32>
    %241 = tpu.matmul %224, %240, %cst_206 {dimension_numbers = #tpu.dot_dimension_numbers<[1], [0], [0], [1], [0, 0, 1, 1], [], []>} : vector<8x32xf32>, vector<32x8xf32>, vector<8x8xf32> -> vector<8x8xf32>
    %c1_207 = arith.constant 1 : index
    %c0_208 = arith.constant 0 : index
    %c0_209 = arith.constant 0 : index
    %c0_210 = arith.constant 0 : index
    %242 = vector.load %arg8[%c1_207, %c0_208, %c0_209, %c0_210] : memref<2x4x1x8xf32, #tpu.memory_space<vmem>>, vector<1x1x1x8xf32>
    %243 = vector.shape_cast %242 : vector<1x1x1x8xf32> to vector<1x8xf32>
    %244 = vector.broadcast %243 : vector<1x8xf32> to vector<8x8xf32>
    %245 = arith.addf %241, %244 : vector<8x8xf32>
    %cst_211 = arith.constant dense<0.000000e+00> : vector<8x8xf32>
    %246 = tpu.matmul %231, %238, %cst_211 {dimension_numbers = #tpu.dot_dimension_numbers<[1], [1], [0], [0], [0, 0, 1, 0], [], []>} : vector<8x8xf32>, vector<8x8xf32>, vector<8x8xf32> -> vector<8x8xf32>
    %cst_212 = arith.constant dense<0xFF800000> : vector<8xf32>
    %247 = vector.multi_reduction <maximumf>, %246, %cst_212 [1] : vector<8x8xf32> to vector<8xf32>
    %248 = vector.shape_cast %247 : vector<8xf32> to vector<8x1xf32>
    %249 = vector.broadcast %248 : vector<8x1xf32> to vector<8x8xf32>
    %250 = arith.subf %246, %249 : vector<8x8xf32>
    %251 = math.exp %250 : vector<8x8xf32>
    %cst_213 = arith.constant dense<0.000000e+00> : vector<8xf32>
    %252 = vector.multi_reduction <add>, %251, %cst_213 [1] : vector<8x8xf32> to vector<8xf32>
    %253 = vector.shape_cast %252 : vector<8xf32> to vector<8x1xf32>
    %254 = tpu.reciprocal %253 {approx = true} : vector<8x1xf32> -> vector<8x1xf32>
    %255 = vector.broadcast %254 : vector<8x1xf32> to vector<8x8xf32>
    %256 = arith.mulf %251, %255 : vector<8x8xf32>
    %cst_214 = arith.constant dense<0.000000e+00> : vector<8x8xf32>
    %257 = tpu.matmul %256, %245, %cst_214 {dimension_numbers = #tpu.dot_dimension_numbers<[1], [0], [0], [1], [0, 0, 1, 1], [], []>} : vector<8x8xf32>, vector<8x8xf32>, vector<8x8xf32> -> vector<8x8xf32>
    %c1_215 = arith.constant 1 : index
    %c0_216 = arith.constant 0 : index
    %c0_217 = arith.constant 0 : index
    %c0_218 = arith.constant 0 : index
    %258 = vector.load %arg9[%c1_215, %c0_216, %c0_217, %c0_218] : memref<2x4x8x32xf32, #tpu.memory_space<vmem>>, vector<1x1x8x32xf32>
    %259 = vector.shape_cast %258 : vector<1x1x8x32xf32> to vector<8x32xf32>
    %cst_219 = arith.constant dense<0.000000e+00> : vector<8x32xf32>
    %260 = tpu.matmul %257, %259, %cst_219 {dimension_numbers = #tpu.dot_dimension_numbers<[1], [0], [0], [1], [0, 0, 1, 1], [], []>} : vector<8x8xf32>, vector<8x32xf32>, vector<8x32xf32> -> vector<8x32xf32>
    %c1_220 = arith.constant 1 : index
    %c1_221 = arith.constant 1 : index
    %c0_222 = arith.constant 0 : index
    %c0_223 = arith.constant 0 : index
    %261 = vector.load %arg3[%c1_220, %c1_221, %c0_222, %c0_223] : memref<2x4x32x8xf32, #tpu.memory_space<vmem>>, vector<1x1x32x8xf32>
    %262 = vector.shape_cast %261 : vector<1x1x32x8xf32> to vector<32x8xf32>
    %cst_224 = arith.constant dense<0.000000e+00> : vector<8x8xf32>
    %263 = tpu.matmul %224, %262, %cst_224 {dimension_numbers = #tpu.dot_dimension_numbers<[1], [0], [0], [1], [0, 0, 1, 1], [], []>} : vector<8x32xf32>, vector<32x8xf32>, vector<8x8xf32> -> vector<8x8xf32>
    %c1_225 = arith.constant 1 : index
    %c1_226 = arith.constant 1 : index
    %c0_227 = arith.constant 0 : index
    %c0_228 = arith.constant 0 : index
    %264 = vector.load %arg4[%c1_225, %c1_226, %c0_227, %c0_228] : memref<2x4x1x8xf32, #tpu.memory_space<vmem>>, vector<1x1x1x8xf32>
    %265 = vector.shape_cast %264 : vector<1x1x1x8xf32> to vector<1x8xf32>
    %266 = vector.broadcast %265 : vector<1x8xf32> to vector<8x8xf32>
    %267 = arith.addf %263, %266 : vector<8x8xf32>
    %c1_229 = arith.constant 1 : index
    %c1_230 = arith.constant 1 : index
    %c0_231 = arith.constant 0 : index
    %c0_232 = arith.constant 0 : index
    %268 = vector.load %arg5[%c1_229, %c1_230, %c0_231, %c0_232] : memref<2x4x32x8xf32, #tpu.memory_space<vmem>>, vector<1x1x32x8xf32>
    %269 = vector.shape_cast %268 : vector<1x1x32x8xf32> to vector<32x8xf32>
    %cst_233 = arith.constant dense<0.000000e+00> : vector<8x8xf32>
    %270 = tpu.matmul %224, %269, %cst_233 {dimension_numbers = #tpu.dot_dimension_numbers<[1], [0], [0], [1], [0, 0, 1, 1], [], []>} : vector<8x32xf32>, vector<32x8xf32>, vector<8x8xf32> -> vector<8x8xf32>
    %c1_234 = arith.constant 1 : index
    %c1_235 = arith.constant 1 : index
    %c0_236 = arith.constant 0 : index
    %c0_237 = arith.constant 0 : index
    %271 = vector.load %arg6[%c1_234, %c1_235, %c0_236, %c0_237] : memref<2x4x1x8xf32, #tpu.memory_space<vmem>>, vector<1x1x1x8xf32>
    %272 = vector.shape_cast %271 : vector<1x1x1x8xf32> to vector<1x8xf32>
    %273 = vector.broadcast %272 : vector<1x8xf32> to vector<8x8xf32>
    %274 = arith.addf %270, %273 : vector<8x8xf32>
    %c1_238 = arith.constant 1 : index
    %c1_239 = arith.constant 1 : index
    %c0_240 = arith.constant 0 : index
    %c0_241 = arith.constant 0 : index
    %275 = vector.load %arg7[%c1_238, %c1_239, %c0_240, %c0_241] : memref<2x4x32x8xf32, #tpu.memory_space<vmem>>, vector<1x1x32x8xf32>
    %276 = vector.shape_cast %275 : vector<1x1x32x8xf32> to vector<32x8xf32>
    %cst_242 = arith.constant dense<0.000000e+00> : vector<8x8xf32>
    %277 = tpu.matmul %224, %276, %cst_242 {dimension_numbers = #tpu.dot_dimension_numbers<[1], [0], [0], [1], [0, 0, 1, 1], [], []>} : vector<8x32xf32>, vector<32x8xf32>, vector<8x8xf32> -> vector<8x8xf32>
    %c1_243 = arith.constant 1 : index
    %c1_244 = arith.constant 1 : index
    %c0_245 = arith.constant 0 : index
    %c0_246 = arith.constant 0 : index
    %278 = vector.load %arg8[%c1_243, %c1_244, %c0_245, %c0_246] : memref<2x4x1x8xf32, #tpu.memory_space<vmem>>, vector<1x1x1x8xf32>
    %279 = vector.shape_cast %278 : vector<1x1x1x8xf32> to vector<1x8xf32>
    %280 = vector.broadcast %279 : vector<1x8xf32> to vector<8x8xf32>
    %281 = arith.addf %277, %280 : vector<8x8xf32>
    %cst_247 = arith.constant dense<0.000000e+00> : vector<8x8xf32>
    %282 = tpu.matmul %267, %274, %cst_247 {dimension_numbers = #tpu.dot_dimension_numbers<[1], [1], [0], [0], [0, 0, 1, 0], [], []>} : vector<8x8xf32>, vector<8x8xf32>, vector<8x8xf32> -> vector<8x8xf32>
    %cst_248 = arith.constant dense<0xFF800000> : vector<8xf32>
    %283 = vector.multi_reduction <maximumf>, %282, %cst_248 [1] : vector<8x8xf32> to vector<8xf32>
    %284 = vector.shape_cast %283 : vector<8xf32> to vector<8x1xf32>
    %285 = vector.broadcast %284 : vector<8x1xf32> to vector<8x8xf32>
    %286 = arith.subf %282, %285 : vector<8x8xf32>
    %287 = math.exp %286 : vector<8x8xf32>
    %cst_249 = arith.constant dense<0.000000e+00> : vector<8xf32>
    %288 = vector.multi_reduction <add>, %287, %cst_249 [1] : vector<8x8xf32> to vector<8xf32>
    %289 = vector.shape_cast %288 : vector<8xf32> to vector<8x1xf32>
    %290 = tpu.reciprocal %289 {approx = true} : vector<8x1xf32> -> vector<8x1xf32>
    %291 = vector.broadcast %290 : vector<8x1xf32> to vector<8x8xf32>
    %292 = arith.mulf %287, %291 : vector<8x8xf32>
    %cst_250 = arith.constant dense<0.000000e+00> : vector<8x8xf32>
    %293 = tpu.matmul %292, %281, %cst_250 {dimension_numbers = #tpu.dot_dimension_numbers<[1], [0], [0], [1], [0, 0, 1, 1], [], []>} : vector<8x8xf32>, vector<8x8xf32>, vector<8x8xf32> -> vector<8x8xf32>
    %c1_251 = arith.constant 1 : index
    %c1_252 = arith.constant 1 : index
    %c0_253 = arith.constant 0 : index
    %c0_254 = arith.constant 0 : index
    %294 = vector.load %arg9[%c1_251, %c1_252, %c0_253, %c0_254] : memref<2x4x8x32xf32, #tpu.memory_space<vmem>>, vector<1x1x8x32xf32>
    %295 = vector.shape_cast %294 : vector<1x1x8x32xf32> to vector<8x32xf32>
    %cst_255 = arith.constant dense<0.000000e+00> : vector<8x32xf32>
    %296 = tpu.matmul %293, %295, %cst_255 {dimension_numbers = #tpu.dot_dimension_numbers<[1], [0], [0], [1], [0, 0, 1, 1], [], []>} : vector<8x8xf32>, vector<8x32xf32>, vector<8x32xf32> -> vector<8x32xf32>
    %297 = arith.addf %260, %296 : vector<8x32xf32>
    %c1_256 = arith.constant 1 : index
    %c2_257 = arith.constant 2 : index
    %c0_258 = arith.constant 0 : index
    %c0_259 = arith.constant 0 : index
    %298 = vector.load %arg3[%c1_256, %c2_257, %c0_258, %c0_259] : memref<2x4x32x8xf32, #tpu.memory_space<vmem>>, vector<1x1x32x8xf32>
    %299 = vector.shape_cast %298 : vector<1x1x32x8xf32> to vector<32x8xf32>
    %cst_260 = arith.constant dense<0.000000e+00> : vector<8x8xf32>
    %300 = tpu.matmul %224, %299, %cst_260 {dimension_numbers = #tpu.dot_dimension_numbers<[1], [0], [0], [1], [0, 0, 1, 1], [], []>} : vector<8x32xf32>, vector<32x8xf32>, vector<8x8xf32> -> vector<8x8xf32>
    %c1_261 = arith.constant 1 : index
    %c2_262 = arith.constant 2 : index
    %c0_263 = arith.constant 0 : index
    %c0_264 = arith.constant 0 : index
    %301 = vector.load %arg4[%c1_261, %c2_262, %c0_263, %c0_264] : memref<2x4x1x8xf32, #tpu.memory_space<vmem>>, vector<1x1x1x8xf32>
    %302 = vector.shape_cast %301 : vector<1x1x1x8xf32> to vector<1x8xf32>
    %303 = vector.broadcast %302 : vector<1x8xf32> to vector<8x8xf32>
    %304 = arith.addf %300, %303 : vector<8x8xf32>
    %c1_265 = arith.constant 1 : index
    %c2_266 = arith.constant 2 : index
    %c0_267 = arith.constant 0 : index
    %c0_268 = arith.constant 0 : index
    %305 = vector.load %arg5[%c1_265, %c2_266, %c0_267, %c0_268] : memref<2x4x32x8xf32, #tpu.memory_space<vmem>>, vector<1x1x32x8xf32>
    %306 = vector.shape_cast %305 : vector<1x1x32x8xf32> to vector<32x8xf32>
    %cst_269 = arith.constant dense<0.000000e+00> : vector<8x8xf32>
    %307 = tpu.matmul %224, %306, %cst_269 {dimension_numbers = #tpu.dot_dimension_numbers<[1], [0], [0], [1], [0, 0, 1, 1], [], []>} : vector<8x32xf32>, vector<32x8xf32>, vector<8x8xf32> -> vector<8x8xf32>
    %c1_270 = arith.constant 1 : index
    %c2_271 = arith.constant 2 : index
    %c0_272 = arith.constant 0 : index
    %c0_273 = arith.constant 0 : index
    %308 = vector.load %arg6[%c1_270, %c2_271, %c0_272, %c0_273] : memref<2x4x1x8xf32, #tpu.memory_space<vmem>>, vector<1x1x1x8xf32>
    %309 = vector.shape_cast %308 : vector<1x1x1x8xf32> to vector<1x8xf32>
    %310 = vector.broadcast %309 : vector<1x8xf32> to vector<8x8xf32>
    %311 = arith.addf %307, %310 : vector<8x8xf32>
    %c1_274 = arith.constant 1 : index
    %c2_275 = arith.constant 2 : index
    %c0_276 = arith.constant 0 : index
    %c0_277 = arith.constant 0 : index
    %312 = vector.load %arg7[%c1_274, %c2_275, %c0_276, %c0_277] : memref<2x4x32x8xf32, #tpu.memory_space<vmem>>, vector<1x1x32x8xf32>
    %313 = vector.shape_cast %312 : vector<1x1x32x8xf32> to vector<32x8xf32>
    %cst_278 = arith.constant dense<0.000000e+00> : vector<8x8xf32>
    %314 = tpu.matmul %224, %313, %cst_278 {dimension_numbers = #tpu.dot_dimension_numbers<[1], [0], [0], [1], [0, 0, 1, 1], [], []>} : vector<8x32xf32>, vector<32x8xf32>, vector<8x8xf32> -> vector<8x8xf32>
    %c1_279 = arith.constant 1 : index
    %c2_280 = arith.constant 2 : index
    %c0_281 = arith.constant 0 : index
    %c0_282 = arith.constant 0 : index
    %315 = vector.load %arg8[%c1_279, %c2_280, %c0_281, %c0_282] : memref<2x4x1x8xf32, #tpu.memory_space<vmem>>, vector<1x1x1x8xf32>
    %316 = vector.shape_cast %315 : vector<1x1x1x8xf32> to vector<1x8xf32>
    %317 = vector.broadcast %316 : vector<1x8xf32> to vector<8x8xf32>
    %318 = arith.addf %314, %317 : vector<8x8xf32>
    %cst_283 = arith.constant dense<0.000000e+00> : vector<8x8xf32>
    %319 = tpu.matmul %304, %311, %cst_283 {dimension_numbers = #tpu.dot_dimension_numbers<[1], [1], [0], [0], [0, 0, 1, 0], [], []>} : vector<8x8xf32>, vector<8x8xf32>, vector<8x8xf32> -> vector<8x8xf32>
    %cst_284 = arith.constant dense<0xFF800000> : vector<8xf32>
    %320 = vector.multi_reduction <maximumf>, %319, %cst_284 [1] : vector<8x8xf32> to vector<8xf32>
    %321 = vector.shape_cast %320 : vector<8xf32> to vector<8x1xf32>
    %322 = vector.broadcast %321 : vector<8x1xf32> to vector<8x8xf32>
    %323 = arith.subf %319, %322 : vector<8x8xf32>
    %324 = math.exp %323 : vector<8x8xf32>
    %cst_285 = arith.constant dense<0.000000e+00> : vector<8xf32>
    %325 = vector.multi_reduction <add>, %324, %cst_285 [1] : vector<8x8xf32> to vector<8xf32>
    %326 = vector.shape_cast %325 : vector<8xf32> to vector<8x1xf32>
    %327 = tpu.reciprocal %326 {approx = true} : vector<8x1xf32> -> vector<8x1xf32>
    %328 = vector.broadcast %327 : vector<8x1xf32> to vector<8x8xf32>
    %329 = arith.mulf %324, %328 : vector<8x8xf32>
    %cst_286 = arith.constant dense<0.000000e+00> : vector<8x8xf32>
    %330 = tpu.matmul %329, %318, %cst_286 {dimension_numbers = #tpu.dot_dimension_numbers<[1], [0], [0], [1], [0, 0, 1, 1], [], []>} : vector<8x8xf32>, vector<8x8xf32>, vector<8x8xf32> -> vector<8x8xf32>
    %c1_287 = arith.constant 1 : index
    %c2_288 = arith.constant 2 : index
    %c0_289 = arith.constant 0 : index
    %c0_290 = arith.constant 0 : index
    %331 = vector.load %arg9[%c1_287, %c2_288, %c0_289, %c0_290] : memref<2x4x8x32xf32, #tpu.memory_space<vmem>>, vector<1x1x8x32xf32>
    %332 = vector.shape_cast %331 : vector<1x1x8x32xf32> to vector<8x32xf32>
    %cst_291 = arith.constant dense<0.000000e+00> : vector<8x32xf32>
    %333 = tpu.matmul %330, %332, %cst_291 {dimension_numbers = #tpu.dot_dimension_numbers<[1], [0], [0], [1], [0, 0, 1, 1], [], []>} : vector<8x8xf32>, vector<8x32xf32>, vector<8x32xf32> -> vector<8x32xf32>
    %334 = arith.addf %297, %333 : vector<8x32xf32>
    %c1_292 = arith.constant 1 : index
    %c3_293 = arith.constant 3 : index
    %c0_294 = arith.constant 0 : index
    %c0_295 = arith.constant 0 : index
    %335 = vector.load %arg3[%c1_292, %c3_293, %c0_294, %c0_295] : memref<2x4x32x8xf32, #tpu.memory_space<vmem>>, vector<1x1x32x8xf32>
    %336 = vector.shape_cast %335 : vector<1x1x32x8xf32> to vector<32x8xf32>
    %cst_296 = arith.constant dense<0.000000e+00> : vector<8x8xf32>
    %337 = tpu.matmul %224, %336, %cst_296 {dimension_numbers = #tpu.dot_dimension_numbers<[1], [0], [0], [1], [0, 0, 1, 1], [], []>} : vector<8x32xf32>, vector<32x8xf32>, vector<8x8xf32> -> vector<8x8xf32>
    %c1_297 = arith.constant 1 : index
    %c3_298 = arith.constant 3 : index
    %c0_299 = arith.constant 0 : index
    %c0_300 = arith.constant 0 : index
    %338 = vector.load %arg4[%c1_297, %c3_298, %c0_299, %c0_300] : memref<2x4x1x8xf32, #tpu.memory_space<vmem>>, vector<1x1x1x8xf32>
    %339 = vector.shape_cast %338 : vector<1x1x1x8xf32> to vector<1x8xf32>
    %340 = vector.broadcast %339 : vector<1x8xf32> to vector<8x8xf32>
    %341 = arith.addf %337, %340 : vector<8x8xf32>
    %c1_301 = arith.constant 1 : index
    %c3_302 = arith.constant 3 : index
    %c0_303 = arith.constant 0 : index
    %c0_304 = arith.constant 0 : index
    %342 = vector.load %arg5[%c1_301, %c3_302, %c0_303, %c0_304] : memref<2x4x32x8xf32, #tpu.memory_space<vmem>>, vector<1x1x32x8xf32>
    %343 = vector.shape_cast %342 : vector<1x1x32x8xf32> to vector<32x8xf32>
    %cst_305 = arith.constant dense<0.000000e+00> : vector<8x8xf32>
    %344 = tpu.matmul %224, %343, %cst_305 {dimension_numbers = #tpu.dot_dimension_numbers<[1], [0], [0], [1], [0, 0, 1, 1], [], []>} : vector<8x32xf32>, vector<32x8xf32>, vector<8x8xf32> -> vector<8x8xf32>
    %c1_306 = arith.constant 1 : index
    %c3_307 = arith.constant 3 : index
    %c0_308 = arith.constant 0 : index
    %c0_309 = arith.constant 0 : index
    %345 = vector.load %arg6[%c1_306, %c3_307, %c0_308, %c0_309] : memref<2x4x1x8xf32, #tpu.memory_space<vmem>>, vector<1x1x1x8xf32>
    %346 = vector.shape_cast %345 : vector<1x1x1x8xf32> to vector<1x8xf32>
    %347 = vector.broadcast %346 : vector<1x8xf32> to vector<8x8xf32>
    %348 = arith.addf %344, %347 : vector<8x8xf32>
    %c1_310 = arith.constant 1 : index
    %c3_311 = arith.constant 3 : index
    %c0_312 = arith.constant 0 : index
    %c0_313 = arith.constant 0 : index
    %349 = vector.load %arg7[%c1_310, %c3_311, %c0_312, %c0_313] : memref<2x4x32x8xf32, #tpu.memory_space<vmem>>, vector<1x1x32x8xf32>
    %350 = vector.shape_cast %349 : vector<1x1x32x8xf32> to vector<32x8xf32>
    %cst_314 = arith.constant dense<0.000000e+00> : vector<8x8xf32>
    %351 = tpu.matmul %224, %350, %cst_314 {dimension_numbers = #tpu.dot_dimension_numbers<[1], [0], [0], [1], [0, 0, 1, 1], [], []>} : vector<8x32xf32>, vector<32x8xf32>, vector<8x8xf32> -> vector<8x8xf32>
    %c1_315 = arith.constant 1 : index
    %c3_316 = arith.constant 3 : index
    %c0_317 = arith.constant 0 : index
    %c0_318 = arith.constant 0 : index
    %352 = vector.load %arg8[%c1_315, %c3_316, %c0_317, %c0_318] : memref<2x4x1x8xf32, #tpu.memory_space<vmem>>, vector<1x1x1x8xf32>
    %353 = vector.shape_cast %352 : vector<1x1x1x8xf32> to vector<1x8xf32>
    %354 = vector.broadcast %353 : vector<1x8xf32> to vector<8x8xf32>
    %355 = arith.addf %351, %354 : vector<8x8xf32>
    %cst_319 = arith.constant dense<0.000000e+00> : vector<8x8xf32>
    %356 = tpu.matmul %341, %348, %cst_319 {dimension_numbers = #tpu.dot_dimension_numbers<[1], [1], [0], [0], [0, 0, 1, 0], [], []>} : vector<8x8xf32>, vector<8x8xf32>, vector<8x8xf32> -> vector<8x8xf32>
    %cst_320 = arith.constant dense<0xFF800000> : vector<8xf32>
    %357 = vector.multi_reduction <maximumf>, %356, %cst_320 [1] : vector<8x8xf32> to vector<8xf32>
    %358 = vector.shape_cast %357 : vector<8xf32> to vector<8x1xf32>
    %359 = vector.broadcast %358 : vector<8x1xf32> to vector<8x8xf32>
    %360 = arith.subf %356, %359 : vector<8x8xf32>
    %361 = math.exp %360 : vector<8x8xf32>
    %cst_321 = arith.constant dense<0.000000e+00> : vector<8xf32>
    %362 = vector.multi_reduction <add>, %361, %cst_321 [1] : vector<8x8xf32> to vector<8xf32>
    %363 = vector.shape_cast %362 : vector<8xf32> to vector<8x1xf32>
    %364 = tpu.reciprocal %363 {approx = true} : vector<8x1xf32> -> vector<8x1xf32>
    %365 = vector.broadcast %364 : vector<8x1xf32> to vector<8x8xf32>
    %366 = arith.mulf %361, %365 : vector<8x8xf32>
    %cst_322 = arith.constant dense<0.000000e+00> : vector<8x8xf32>
    %367 = tpu.matmul %366, %355, %cst_322 {dimension_numbers = #tpu.dot_dimension_numbers<[1], [0], [0], [1], [0, 0, 1, 1], [], []>} : vector<8x8xf32>, vector<8x8xf32>, vector<8x8xf32> -> vector<8x8xf32>
    %c1_323 = arith.constant 1 : index
    %c3_324 = arith.constant 3 : index
    %c0_325 = arith.constant 0 : index
    %c0_326 = arith.constant 0 : index
    %368 = vector.load %arg9[%c1_323, %c3_324, %c0_325, %c0_326] : memref<2x4x8x32xf32, #tpu.memory_space<vmem>>, vector<1x1x8x32xf32>
    %369 = vector.shape_cast %368 : vector<1x1x8x32xf32> to vector<8x32xf32>
    %cst_327 = arith.constant dense<0.000000e+00> : vector<8x32xf32>
    %370 = tpu.matmul %367, %369, %cst_327 {dimension_numbers = #tpu.dot_dimension_numbers<[1], [0], [0], [1], [0, 0, 1, 1], [], []>} : vector<8x8xf32>, vector<8x32xf32>, vector<8x32xf32> -> vector<8x32xf32>
    %371 = arith.addf %334, %370 : vector<8x32xf32>
    %c1_328 = arith.constant 1 : index
    %c0_329 = arith.constant 0 : index
    %c0_330 = arith.constant 0 : index
    %372 = vector.load %arg10[%c1_328, %c0_329, %c0_330] : memref<2x1x32xf32, #tpu.memory_space<vmem>>, vector<1x1x32xf32>
    %373 = vector.shape_cast %372 : vector<1x1x32xf32> to vector<1x32xf32>
    %374 = vector.broadcast %373 : vector<1x32xf32> to vector<8x32xf32>
    %375 = arith.addf %371, %374 : vector<8x32xf32>
    %376 = arith.addf %224, %375 : vector<8x32xf32>
    %c1_331 = arith.constant 1 : index
    %c0_332 = arith.constant 0 : index
    %c0_333 = arith.constant 0 : index
    %377 = vector.load %arg11[%c1_331, %c0_332, %c0_333] : memref<2x1x32xf32, #tpu.memory_space<vmem>>, vector<1x1x32xf32>
    %378 = vector.shape_cast %377 : vector<1x1x32xf32> to vector<1x32xf32>
    %c1_334 = arith.constant 1 : index
    %c0_335 = arith.constant 0 : index
    %c0_336 = arith.constant 0 : index
    %379 = vector.load %arg12[%c1_334, %c0_335, %c0_336] : memref<2x1x32xf32, #tpu.memory_space<vmem>>, vector<1x1x32xf32>
    %380 = vector.shape_cast %379 : vector<1x1x32xf32> to vector<1x32xf32>
    %cst_337 = arith.constant dense<0.000000e+00> : vector<8xf32>
    %381 = vector.multi_reduction <add>, %376, %cst_337 [1] : vector<8x32xf32> to vector<8xf32>
    %382 = vector.shape_cast %381 : vector<8xf32> to vector<8x1xf32>
    %cst_338 = arith.constant 3.200000e+01 : f32
    %383 = vector.broadcast %cst_338 : f32 to vector<8x1xf32>
    %384 = arith.divf %382, %383 : vector<8x1xf32>
    %385 = vector.broadcast %384 : vector<8x1xf32> to vector<8x32xf32>
    %386 = arith.subf %376, %385 : vector<8x32xf32>
    %387 = arith.mulf %386, %386 : vector<8x32xf32>
    %cst_339 = arith.constant dense<0.000000e+00> : vector<8xf32>
    %388 = vector.multi_reduction <add>, %387, %cst_339 [1] : vector<8x32xf32> to vector<8xf32>
    %389 = vector.shape_cast %388 : vector<8xf32> to vector<8x1xf32>
    %cst_340 = arith.constant 3.200000e+01 : f32
    %390 = vector.broadcast %cst_340 : f32 to vector<8x1xf32>
    %391 = arith.divf %389, %390 : vector<8x1xf32>
    %392 = vector.broadcast %384 : vector<8x1xf32> to vector<8x32xf32>
    %393 = arith.subf %376, %392 : vector<8x32xf32>
    %cst_341 = arith.constant 9.99999974E-6 : f32
    %394 = vector.broadcast %cst_341 : f32 to vector<8x1xf32>
    %395 = arith.addf %391, %394 : vector<8x1xf32>
    %396 = math.rsqrt %395 : vector<8x1xf32>
    %397 = vector.broadcast %396 : vector<8x1xf32> to vector<8x32xf32>
    %398 = arith.mulf %393, %397 : vector<8x32xf32>
    %399 = vector.broadcast %378 : vector<1x32xf32> to vector<8x32xf32>
    %400 = arith.mulf %398, %399 : vector<8x32xf32>
    %401 = vector.broadcast %380 : vector<1x32xf32> to vector<8x32xf32>
    %402 = arith.addf %400, %401 : vector<8x32xf32>
    %c1_342 = arith.constant 1 : index
    %c0_343 = arith.constant 0 : index
    %c0_344 = arith.constant 0 : index
    %403 = vector.load %arg13[%c1_342, %c0_343, %c0_344] : memref<2x32x64xf32, #tpu.memory_space<vmem>>, vector<1x32x64xf32>
    %404 = vector.shape_cast %403 : vector<1x32x64xf32> to vector<32x64xf32>
    %cst_345 = arith.constant dense<0.000000e+00> : vector<8x64xf32>
    %405 = tpu.matmul %402, %404, %cst_345 {dimension_numbers = #tpu.dot_dimension_numbers<[1], [0], [0], [1], [0, 0, 1, 1], [], []>} : vector<8x32xf32>, vector<32x64xf32>, vector<8x64xf32> -> vector<8x64xf32>
    %c1_346 = arith.constant 1 : index
    %c0_347 = arith.constant 0 : index
    %c0_348 = arith.constant 0 : index
    %406 = vector.load %arg14[%c1_346, %c0_347, %c0_348] : memref<2x1x64xf32, #tpu.memory_space<vmem>>, vector<1x1x64xf32>
    %407 = vector.shape_cast %406 : vector<1x1x64xf32> to vector<1x64xf32>
    %408 = vector.broadcast %407 : vector<1x64xf32> to vector<8x64xf32>
    %409 = arith.addf %405, %408 : vector<8x64xf32>
    %cst_349 = arith.constant 0.000000e+00 : f32
    %410 = vector.broadcast %cst_349 : f32 to vector<8x64xf32>
    %411 = arith.maximumf %409, %410 : vector<8x64xf32>
    %c1_350 = arith.constant 1 : index
    %c0_351 = arith.constant 0 : index
    %c0_352 = arith.constant 0 : index
    %412 = vector.load %arg15[%c1_350, %c0_351, %c0_352] : memref<2x64x32xf32, #tpu.memory_space<vmem>>, vector<1x64x32xf32>
    %413 = vector.shape_cast %412 : vector<1x64x32xf32> to vector<64x32xf32>
    %cst_353 = arith.constant dense<0.000000e+00> : vector<8x32xf32>
    %414 = tpu.matmul %411, %413, %cst_353 {dimension_numbers = #tpu.dot_dimension_numbers<[1], [0], [0], [1], [0, 0, 1, 1], [], []>} : vector<8x64xf32>, vector<64x32xf32>, vector<8x32xf32> -> vector<8x32xf32>
    %c1_354 = arith.constant 1 : index
    %c0_355 = arith.constant 0 : index
    %c0_356 = arith.constant 0 : index
    %415 = vector.load %arg16[%c1_354, %c0_355, %c0_356] : memref<2x1x32xf32, #tpu.memory_space<vmem>>, vector<1x1x32xf32>
    %416 = vector.shape_cast %415 : vector<1x1x32xf32> to vector<1x32xf32>
    %417 = vector.broadcast %416 : vector<1x32xf32> to vector<8x32xf32>
    %418 = arith.addf %414, %417 : vector<8x32xf32>
    %419 = arith.addf %402, %418 : vector<8x32xf32>
    %c1_357 = arith.constant 1 : index
    %c0_358 = arith.constant 0 : index
    %c0_359 = arith.constant 0 : index
    %420 = vector.load %arg17[%c1_357, %c0_358, %c0_359] : memref<2x1x32xf32, #tpu.memory_space<vmem>>, vector<1x1x32xf32>
    %421 = vector.shape_cast %420 : vector<1x1x32xf32> to vector<1x32xf32>
    %c1_360 = arith.constant 1 : index
    %c0_361 = arith.constant 0 : index
    %c0_362 = arith.constant 0 : index
    %422 = vector.load %arg18[%c1_360, %c0_361, %c0_362] : memref<2x1x32xf32, #tpu.memory_space<vmem>>, vector<1x1x32xf32>
    %423 = vector.shape_cast %422 : vector<1x1x32xf32> to vector<1x32xf32>
    %cst_363 = arith.constant dense<0.000000e+00> : vector<8xf32>
    %424 = vector.multi_reduction <add>, %419, %cst_363 [1] : vector<8x32xf32> to vector<8xf32>
    %425 = vector.shape_cast %424 : vector<8xf32> to vector<8x1xf32>
    %cst_364 = arith.constant 3.200000e+01 : f32
    %426 = vector.broadcast %cst_364 : f32 to vector<8x1xf32>
    %427 = arith.divf %425, %426 : vector<8x1xf32>
    %428 = vector.broadcast %427 : vector<8x1xf32> to vector<8x32xf32>
    %429 = arith.subf %419, %428 : vector<8x32xf32>
    %430 = arith.mulf %429, %429 : vector<8x32xf32>
    %cst_365 = arith.constant dense<0.000000e+00> : vector<8xf32>
    %431 = vector.multi_reduction <add>, %430, %cst_365 [1] : vector<8x32xf32> to vector<8xf32>
    %432 = vector.shape_cast %431 : vector<8xf32> to vector<8x1xf32>
    %cst_366 = arith.constant 3.200000e+01 : f32
    %433 = vector.broadcast %cst_366 : f32 to vector<8x1xf32>
    %434 = arith.divf %432, %433 : vector<8x1xf32>
    %435 = vector.broadcast %427 : vector<8x1xf32> to vector<8x32xf32>
    %436 = arith.subf %419, %435 : vector<8x32xf32>
    %cst_367 = arith.constant 9.99999974E-6 : f32
    %437 = vector.broadcast %cst_367 : f32 to vector<8x1xf32>
    %438 = arith.addf %434, %437 : vector<8x1xf32>
    %439 = math.rsqrt %438 : vector<8x1xf32>
    %440 = vector.broadcast %439 : vector<8x1xf32> to vector<8x32xf32>
    %441 = arith.mulf %436, %440 : vector<8x32xf32>
    %442 = vector.broadcast %421 : vector<1x32xf32> to vector<8x32xf32>
    %443 = arith.mulf %441, %442 : vector<8x32xf32>
    %444 = vector.broadcast %423 : vector<1x32xf32> to vector<8x32xf32>
    %445 = arith.addf %443, %444 : vector<8x32xf32>
    %c0_368 = arith.constant 0 : index
    %c0_369 = arith.constant 0 : index
    %c0_370 = arith.constant 0 : index
    %446 = vector.load %arg19[%c0_368, %c0_369, %c0_370] : memref<1x8x32xf32, #tpu.memory_space<vmem>>, vector<1x8x32xf32>
    %447 = vector.shape_cast %446 : vector<1x8x32xf32> to vector<8x32xf32>
    %448 = vector.shape_cast %445 : vector<8x32xf32> to vector<1x8x32xf32>
    tpu.vector_store %arg19[%c0_368, %c0_369, %c0_370], %448 {strides = array<i32>} : memref<1x8x32xf32, #tpu.memory_space<vmem>>, vector<1x8x32xf32>,
    return
  }
  func.func @transform_0(%arg0: i32) -> (i32, i32, i32) {
    %c0_i32 = arith.constant 0 : i32
    %c0_i32_0 = arith.constant 0 : i32
    %c0_i32_1 = arith.constant 0 : i32
    return %arg0, %c0_i32, %c0_i32_0 : i32, i32, i32
  }
  func.func @transform_1(%arg0: i32) -> (i32, i32) {
    %c0_i32 = arith.constant 0 : i32
    %c0_i32_0 = arith.constant 0 : i32
    %c0_i32_1 = arith.constant 0 : i32
    return %c0_i32, %c0_i32_0 : i32, i32
  }
  func.func @transform_2(%arg0: i32) -> (i32, i32, i32, i32) {
    %c0_i32 = arith.constant 0 : i32
    %c0_i32_0 = arith.constant 0 : i32
    %c0_i32_1 = arith.constant 0 : i32
    %c0_i32_2 = arith.constant 0 : i32
    %c0_i32_3 = arith.constant 0 : i32
    return %c0_i32, %c0_i32_0, %c0_i32_1, %c0_i32_2 : i32, i32, i32, i32
  }
  func.func @transform_3(%arg0: i32) -> (i32, i32, i32, i32) {
    %c0_i32 = arith.constant 0 : i32
    %c0_i32_0 = arith.constant 0 : i32
    %c0_i32_1 = arith.constant 0 : i32
    %c0_i32_2 = arith.constant 0 : i32
    %c0_i32_3 = arith.constant 0 : i32
    return %c0_i32, %c0_i32_0, %c0_i32_1, %c0_i32_2 : i32, i32, i32, i32
  }
  func.func @transform_4(%arg0: i32) -> (i32, i32, i32, i32) {
    %c0_i32 = arith.constant 0 : i32
    %c0_i32_0 = arith.constant 0 : i32
    %c0_i32_1 = arith.constant 0 : i32
    %c0_i32_2 = arith.constant 0 : i32
    %c0_i32_3 = arith.constant 0 : i32
    return %c0_i32, %c0_i32_0, %c0_i32_1, %c0_i32_2 : i32, i32, i32, i32
  }
  func.func @transform_5(%arg0: i32) -> (i32, i32, i32, i32) {
    %c0_i32 = arith.constant 0 : i32
    %c0_i32_0 = arith.constant 0 : i32
    %c0_i32_1 = arith.constant 0 : i32
    %c0_i32_2 = arith.constant 0 : i32
    %c0_i32_3 = arith.constant 0 : i32
    return %c0_i32, %c0_i32_0, %c0_i32_1, %c0_i32_2 : i32, i32, i32, i32
  }
  func.func @transform_6(%arg0: i32) -> (i32, i32, i32, i32) {
    %c0_i32 = arith.constant 0 : i32
    %c0_i32_0 = arith.constant 0 : i32
    %c0_i32_1 = arith.constant 0 : i32
    %c0_i32_2 = arith.constant 0 : i32
    %c0_i32_3 = arith.constant 0 : i32
    return %c0_i32, %c0_i32_0, %c0_i32_1, %c0_i32_2 : i32, i32, i32, i32
  }
  func.func @transform_7(%arg0: i32) -> (i32, i32, i32, i32) {
    %c0_i32 = arith.constant 0 : i32
    %c0_i32_0 = arith.constant 0 : i32
    %c0_i32_1 = arith.constant 0 : i32
    %c0_i32_2 = arith.constant 0 : i32
    %c0_i32_3 = arith.constant 0 : i32
    return %c0_i32, %c0_i32_0, %c0_i32_1, %c0_i32_2 : i32, i32, i32, i32
  }
  func.func @transform_8(%arg0: i32) -> (i32, i32, i32, i32) {
    %c0_i32 = arith.constant 0 : i32
    %c0_i32_0 = arith.constant 0 : i32
    %c0_i32_1 = arith.constant 0 : i32
    %c0_i32_2 = arith.constant 0 : i32
    %c0_i32_3 = arith.constant 0 : i32
    return %c0_i32, %c0_i32_0, %c0_i32_1, %c0_i32_2 : i32, i32, i32, i32
  }
  func.func @transform_9(%arg0: i32) -> (i32, i32, i32) {
    %c0_i32 = arith.constant 0 : i32
    %c0_i32_0 = arith.constant 0 : i32
    %c0_i32_1 = arith.constant 0 : i32
    %c0_i32_2 = arith.constant 0 : i32
    return %c0_i32, %c0_i32_0, %c0_i32_1 : i32, i32, i32
  }
  func.func @transform_10(%arg0: i32) -> (i32, i32, i32) {
    %c0_i32 = arith.constant 0 : i32
    %c0_i32_0 = arith.constant 0 : i32
    %c0_i32_1 = arith.constant 0 : i32
    %c0_i32_2 = arith.constant 0 : i32
    return %c0_i32, %c0_i32_0, %c0_i32_1 : i32, i32, i32
  }
  func.func @transform_11(%arg0: i32) -> (i32, i32, i32) {
    %c0_i32 = arith.constant 0 : i32
    %c0_i32_0 = arith.constant 0 : i32
    %c0_i32_1 = arith.constant 0 : i32
    %c0_i32_2 = arith.constant 0 : i32
    return %c0_i32, %c0_i32_0, %c0_i32_1 : i32, i32, i32
  }
  func.func @transform_12(%arg0: i32) -> (i32, i32, i32) {
    %c0_i32 = arith.constant 0 : i32
    %c0_i32_0 = arith.constant 0 : i32
    %c0_i32_1 = arith.constant 0 : i32
    %c0_i32_2 = arith.constant 0 : i32
    return %c0_i32, %c0_i32_0, %c0_i32_1 : i32, i32, i32
  }
  func.func @transform_13(%arg0: i32) -> (i32, i32, i32) {
    %c0_i32 = arith.constant 0 : i32
    %c0_i32_0 = arith.constant 0 : i32
    %c0_i32_1 = arith.constant 0 : i32
    %c0_i32_2 = arith.constant 0 : i32
    return %c0_i32, %c0_i32_0, %c0_i32_1 : i32, i32, i32
  }
  func.func @transform_14(%arg0: i32) -> (i32, i32, i32) {
    %c0_i32 = arith.constant 0 : i32
    %c0_i32_0 = arith.constant 0 : i32
    %c0_i32_1 = arith.constant 0 : i32
    %c0_i32_2 = arith.constant 0 : i32
    return %c0_i32, %c0_i32_0, %c0_i32_1 : i32, i32, i32
  }
  func.func @transform_15(%arg0: i32) -> (i32, i32, i32) {
    %c0_i32 = arith.constant 0 : i32
    %c0_i32_0 = arith.constant 0 : i32
    %c0_i32_1 = arith.constant 0 : i32
    %c0_i32_2 = arith.constant 0 : i32
    return %c0_i32, %c0_i32_0, %c0_i32_1 : i32, i32, i32
  }
  func.func @transform_16(%arg0: i32) -> (i32, i32, i32) {
    %c0_i32 = arith.constant 0 : i32
    %c0_i32_0 = arith.constant 0 : i32
    %c0_i32_1 = arith.constant 0 : i32
    %c0_i32_2 = arith.constant 0 : i32
    return %c0_i32, %c0_i32_0, %c0_i32_1 : i32, i32, i32
  }
  func.func @transform_17(%arg0: i32) -> (i32, i32, i32) {
    %c0_i32 = arith.constant 0 : i32
    %c0_i32_0 = arith.constant 0 : i32
    %c0_i32_1 = arith.constant 0 : i32
    %c0_i32_2 = arith.constant 0 : i32
    return %c0_i32, %c0_i32_0, %c0_i32_1 : i32, i32, i32
  }
  func.func @transform_18(%arg0: i32) -> (i32, i32, i32) {
    %c0_i32 = arith.constant 0 : i32
    %c0_i32_0 = arith.constant 0 : i32
    %c0_i32_1 = arith.constant 0 : i32
    return %arg0, %c0_i32, %c0_i32_0 : i32, i32, i32
  }
}

</mosaic_0001>

<llo_original>
// kernel: encoder_forward.1
$region0: #{encoder_forward.1}
  #allocation0 [shape = 'u32[]', space=smem, size = 0x4, offset = 0x4, fixed_abs, tag = 'smem constant byte address 0x4 - core index']
  #allocation1 [shape = 'u32[144,128]{1,0:T(1,128)}', space=vmem, size = 0x12000, scoped, tag = 'internal scratch']
  %s0 = inlined_call_operand.vmem [shape: f32[2,8,32], index: 0, kind: input, shape index: {}]
  %s1 = inlined_call_operand.vmem [shape: f32[8,32], index: 1, kind: input, shape index: {}]
  %s2 = inlined_call_operand.vmem [shape: f32[2,4,32,8], index: 2, kind: input, shape index: {}]
  %s3 = inlined_call_operand.vmem [shape: f32[2,4,1,8], index: 3, kind: input, shape index: {}]
  %s4 = inlined_call_operand.vmem [shape: f32[2,4,32,8], index: 4, kind: input, shape index: {}]
  %s5 = inlined_call_operand.vmem [shape: f32[2,4,1,8], index: 5, kind: input, shape index: {}]
  %s6 = inlined_call_operand.vmem [shape: f32[2,4,32,8], index: 6, kind: input, shape index: {}]
  %s7 = inlined_call_operand.vmem [shape: f32[2,4,1,8], index: 7, kind: input, shape index: {}]
  %s8 = inlined_call_operand.vmem [shape: f32[2,4,8,32], index: 8, kind: input, shape index: {}]
  %s9 = inlined_call_operand.vmem [shape: f32[2,1,32], index: 9, kind: input, shape index: {}]
  %s10 = inlined_call_operand.vmem [shape: f32[2,1,32], index: 10, kind: input, shape index: {}]
  %s11 = inlined_call_operand.vmem [shape: f32[2,1,32], index: 11, kind: input, shape index: {}]
  %s12 = inlined_call_operand.vmem [shape: f32[2,32,64], index: 12, kind: input, shape index: {}]
  %s13 = inlined_call_operand.vmem [shape: f32[2,1,64], index: 13, kind: input, shape index: {}]
  %s14 = inlined_call_operand.vmem [shape: f32[2,64,32], index: 14, kind: input, shape index: {}]
  %s15 = inlined_call_operand.vmem [shape: f32[2,1,32], index: 15, kind: input, shape index: {}]
  %s16 = inlined_call_operand.vmem [shape: f32[2,1,32], index: 16, kind: input, shape index: {}]
  %s17 = inlined_call_operand.vmem [shape: f32[2,1,32], index: 17, kind: input, shape index: {}]
  %s18 = inlined_call_operand.vmem [shape: f32[2,8,32], index: 18, kind: output, shape index: {}]
  %s19 = sld [smem:[#allocation0]]
  $region105: #{encoder_forward.1} parent=0
    _
  %s21 = ssub.s32 1, %s19
  %s22 = scalar_select 0, %s21, %s19
  loop: start=0, step=1, limit=4
  $region2: #{encoder_forward.1} parent=0 // loop_pre_header
    _
  $region3: #{encoder_forward.1} parent=0 // loop_header
    %s24 = sphi 0, %s28
    %p25 = scmp.ge.s32.totalorder %s24, 4
    %s34 = sphi 0, %s36
    %s37 = sphi 0, %s34
    %s38 = sphi 0, %s37
    %s54 = sphi 0, %s38
    %s58 = sphi 0, %s58
    %s60 = sphi 0, %s58
    %s61 = sphi 0, %s60
    %s75 = sphi 0, %s61
    %s79 = sphi 0, %s79
    %s81 = sphi 0, %s79
    %s82 = sphi 0, %s81
    %s96 = sphi 0, %s82
    %s100 = sphi 0, %s100
    %s102 = sphi 0, %s100
    %s103 = sphi 0, %s102
    %s117 = sphi 0, %s103
    %s121 = sphi 0, %s121
    %s123 = sphi 0, %s121
    %s124 = sphi 0, %s123
    %s138 = sphi 0, %s124
    %s142 = sphi 0, %s142
    %s144 = sphi 0, %s142
    %s145 = sphi 0, %s144
    %s159 = sphi 0, %s145
    %s163 = sphi 0, %s163
    %s165 = sphi 0, %s163
    %s166 = sphi 0, %s165
    %s180 = sphi 0, %s166
    %s184 = sphi 0, %s184
    %s186 = sphi 0, %s184
    %s187 = sphi 0, %s186
    %s201 = sphi 0, %s187
    %s205 = sphi 0, %s205
    %s207 = sphi 0, %s205
    %s208 = sphi 0, %s207
    %s222 = sphi 0, %s208
    %s226 = sphi 0, %s226
    %s228 = sphi 0, %s226
    %s229 = sphi 0, %s228
    %s243 = sphi 0, %s229
    %s247 = sphi 0, %s247
    %s249 = sphi 0, %s247
    %s250 = sphi 0, %s249
    %s264 = sphi 0, %s250
    %s268 = sphi 0, %s268
    %s270 = sphi 0, %s268
    %s271 = sphi 0, %s270
    %s285 = sphi 0, %s271
    %s289 = sphi 0, %s289
    %s291 = sphi 0, %s289
    %s292 = sphi 0, %s291
    %s306 = sphi 0, %s292
    %s310 = sphi 0, %s310
    %s312 = sphi 0, %s310
    %s313 = sphi 0, %s312
    %s327 = sphi 0, %s313
    %s331 = sphi 0, %s331
    %s333 = sphi 0, %s331
    %s334 = sphi 0, %s333
    %s348 = sphi 0, %s334
    %s352 = sphi 0, %s352
    %s354 = sphi 0, %s352
    %s355 = sphi 0, %s354
    %s369 = sphi 0, %s355
    %s373 = sphi 0, %s373
    %s375 = sphi 0, %s373
    %s376 = sphi 0, %s375
    %s390 = sphi 0, %s376
    %s394 = sphi 0, %s394
    %s396 = sphi 0, %s394
    %s397 = sphi 0, %s396
    %s411 = sphi 0, %s397
    %s417 = sphi 0, %s419
    %s420 = sphi 0, %s417
    %s421 = sphi 0, %s420
    %s437 = sphi 0, %s421
  $region4: #{encoder_forward.1} parent=0 // loop_header_branch
    %27 = sbr.rel (%p25) target = $region8
  $region5: #{encoder_forward.1} parent=0 // loop_body
    %s29 = ssub.s32 %s24, 1
    %s30 = ssub.s32 %s24, 2
    %s31 = sadd.s32 %s24, 1
    %s32 = ssub.s32 %s24, %s31
    %p33 = scmp.eq.s32.totalorder %s32, 0
    %s35 = sadd.s32 %s34, 1
    %s36 = scalar_select %p33, %s34, %s35
    %p39 = pneg %p33
    %p40 = scmp.eq.s32.totalorder %s24, 1
    %p41 = por %p39, %p40
    %p42 = scmp.ne.s32.totalorder %s34, %s37
    %p43 = scmp.eq.s32.totalorder %s24, 0
    %p44 = por %p42, %p43
    %p45 = scmp.ne.s32.totalorder %s34, %s37
    %p46 = scmp.eq.s32.totalorder %s29, 1
    %p47 = por %p45, %p46
    %p48 = scmp.ne.s32.totalorder %s37, %s38
    %p49 = scmp.eq.s32.totalorder %s29, 0
    %p50 = por %p48, %p49
    %p51 = scmp.ne.s32.totalorder %s37, %s38
    %p52 = scmp.eq.s32.totalorder %s30, 1
    %p53 = por %p51, %p52
    %p55 = scmp.ne.s32.totalorder %s38, %s54
    %p56 = scmp.eq.s32.totalorder %s30, 0
    %p57 = por %p55, %p56
    %s59 = sadd.s32 %s58, 1
    %p62 = scmp.eq.s32.totalorder %s24, 1
    %p63 = scmp.ne.s32.totalorder %s58, %s60
    %p64 = scmp.eq.s32.totalorder %s24, 0
    %p65 = por %p63, %p64
    %p66 = scmp.ne.s32.totalorder %s58, %s60
    %p67 = scmp.eq.s32.totalorder %s29, 1
    %p68 = por %p66, %p67
    %p69 = scmp.ne.s32.totalorder %s60, %s61
    %p70 = scmp.eq.s32.totalorder %s29, 0
    %p71 = por %p69, %p70
    %p72 = scmp.ne.s32.totalorder %s60, %s61
    %p73 = scmp.eq.s32.totalorder %s30, 1
    %p74 = por %p72, %p73
    %p76 = scmp.ne.s32.totalorder %s61, %s75
    %p77 = scmp.eq.s32.totalorder %s30, 0
    %p78 = por %p76, %p77
    %s80 = sadd.s32 %s79, 1
    %p83 = scmp.eq.s32.totalorder %s24, 1
    %p84 = scmp.ne.s32.totalorder %s79, %s81
    %p85 = scmp.eq.s32.totalorder %s24, 0
    %p86 = por %p84, %p85
    %p87 = scmp.ne.s32.totalorder %s79, %s81
    %p88 = scmp.eq.s32.totalorder %s29, 1
    %p89 = por %p87, %p88
    %p90 = scmp.ne.s32.totalorder %s81, %s82
    %p91 = scmp.eq.s32.totalorder %s29, 0
    %p92 = por %p90, %p91
    %p93 = scmp.ne.s32.totalorder %s81, %s82
    %p94 = scmp.eq.s32.totalorder %s30, 1
    %p95 = por %p93, %p94
    %p97 = scmp.ne.s32.totalorder %s82, %s96
    %p98 = scmp.eq.s32.totalorder %s30, 0
    %p99 = por %p97, %p98
    %s101 = sadd.s32 %s100, 1
    %p104 = scmp.eq.s32.totalorder %s24, 1
    %p105 = scmp.ne.s32.totalorder %s100, %s102
    %p106 = scmp.eq.s32.totalorder %s24, 0
    %p107 = por %p105, %p106
    %p108 = scmp.ne.s32.totalorder %s100, %s102
    %p109 = scmp.eq.s32.totalorder %s29, 1
    %p110 = por %p108, %p109
    %p111 = scmp.ne.s32.totalorder %s102, %s103
    %p112 = scmp.eq.s32.totalorder %s29, 0
    %p113 = por %p111, %p112
    %p114 = scmp.ne.s32.totalorder %s102, %s103
    %p115 = scmp.eq.s32.totalorder %s30, 1
    %p116 = por %p114, %p115
    %p118 = scmp.ne.s32.totalorder %s103, %s117
    %p119 = scmp.eq.s32.totalorder %s30, 0
    %p120 = por %p118, %p119
    %s122 = sadd.s32 %s121, 1
    %p125 = scmp.eq.s32.totalorder %s24, 1
    %p126 = scmp.ne.s32.totalorder %s121, %s123
    %p127 = scmp.eq.s32.totalorder %s24, 0
    %p128 = por %p126, %p127
    %p129 = scmp.ne.s32.totalorder %s121, %s123
    %p130 = scmp.eq.s32.totalorder %s29, 1
    %p131 = por %p129, %p130
    %p132 = scmp.ne.s32.totalorder %s123, %s124
    %p133 = scmp.eq.s32.totalorder %s29, 0
    %p134 = por %p132, %p133
    %p135 = scmp.ne.s32.totalorder %s123, %s124
    %p136 = scmp.eq.s32.totalorder %s30, 1
    %p137 = por %p135, %p136
    %p139 = scmp.ne.s32.totalorder %s124, %s138
    %p140 = scmp.eq.s32.totalorder %s30, 0
    %p141 = por %p139, %p140
    %s143 = sadd.s32 %s142, 1
    %p146 = scmp.eq.s32.totalorder %s24, 1
    %p147 = scmp.ne.s32.totalorder %s142, %s144
    %p148 = scmp.eq.s32.totalorder %s24, 0
    %p149 = por %p147, %p148
    %p150 = scmp.ne.s32.totalorder %s142, %s144
    %p151 = scmp.eq.s32.totalorder %s29, 1
    %p152 = por %p150, %p151
    %p153 = scmp.ne.s32.totalorder %s144, %s145
    %p154 = scmp.eq.s32.totalorder %s29, 0
    %p155 = por %p153, %p154
    %p156 = scmp.ne.s32.totalorder %s144, %s145
    %p157 = scmp.eq.s32.totalorder %s30, 1
    %p158 = por %p156, %p157
    %p160 = scmp.ne.s32.totalorder %s145, %s159
    %p161 = scmp.eq.s32.totalorder %s30, 0
    %p162 = por %p160, %p161
    %s164 = sadd.s32 %s163, 1
    %p167 = scmp.eq.s32.totalorder %s24, 1
    %p168 = scmp.ne.s32.totalorder %s163, %s165
    %p169 = scmp.eq.s32.totalorder %s24, 0
    %p170 = por %p168, %p169
    %p171 = scmp.ne.s32.totalorder %s163, %s165
    %p172 = scmp.eq.s32.totalorder %s29, 1
    %p173 = por %p171, %p172
    %p174 = scmp.ne.s32.totalorder %s165, %s166
    %p175 = scmp.eq.s32.totalorder %s29, 0
    %p176 = por %p174, %p175
    %p177 = scmp.ne.s32.totalorder %s165, %s166
    %p178 = scmp.eq.s32.totalorder %s30, 1
    %p179 = por %p177, %p178
    %p181 = scmp.ne.s32.totalorder %s166, %s180
    %p182 = scmp.eq.s32.totalorder %s30, 0
    %p183 = por %p181, %p182
    %s185 = sadd.s32 %s184, 1
    %p188 = scmp.eq.s32.totalorder %s24, 1
    %p189 = scmp.ne.s32.totalorder %s184, %s186
    %p190 = scmp.eq.s32.totalorder %s24, 0
    %p191 = por %p189, %p190
    %p192 = scmp.ne.s32.totalorder %s184, %s186
    %p193 = scmp.eq.s32.totalorder %s29, 1
    %p194 = por %p192, %p193
    %p195 = scmp.ne.s32.totalorder %s186, %s187
    %p196 = scmp.eq.s32.totalorder %s29, 0
    %p197 = por %p195, %p196
    %p198 = scmp.ne.s32.totalorder %s186, %s187
    %p199 = scmp.eq.s32.totalorder %s30, 1
    %p200 = por %p198, %p199
    %p202 = scmp.ne.s32.totalorder %s187, %s201
    %p203 = scmp.eq.s32.totalorder %s30, 0
    %p204 = por %p202, %p203
    %s206 = sadd.s32 %s205, 1
    %p209 = scmp.eq.s32.totalorder %s24, 1
    %p210 = scmp.ne.s32.totalorder %s205, %s207
    %p211 = scmp.eq.s32.totalorder %s24, 0
    %p212 = por %p210, %p211
    %p213 = scmp.ne.s32.totalorder %s205, %s207
    %p214 = scmp.eq.s32.totalorder %s29, 1
    %p215 = por %p213, %p214
    %p216 = scmp.ne.s32.totalorder %s207, %s208
    %p217 = scmp.eq.s32.totalorder %s29, 0
    %p218 = por %p216, %p217
    %p219 = scmp.ne.s32.totalorder %s207, %s208
    %p220 = scmp.eq.s32.totalorder %s30, 1
    %p221 = por %p219, %p220
    %p223 = scmp.ne.s32.totalorder %s208, %s222
    %p224 = scmp.eq.s32.totalorder %s30, 0
    %p225 = por %p223, %p224
    %s227 = sadd.s32 %s226, 1
    %p230 = scmp.eq.s32.totalorder %s24, 1
    %p231 = scmp.ne.s32.totalorder %s226, %s228
    %p232 = scmp.eq.s32.totalorder %s24, 0
    %p233 = por %p231, %p232
    %p234 = scmp.ne.s32.totalorder %s226, %s228
    %p235 = scmp.eq.s32.totalorder %s29, 1
    %p236 = por %p234, %p235
    %p237 = scmp.ne.s32.totalorder %s228, %s229
    %p238 = scmp.eq.s32.totalorder %s29, 0
    %p239 = por %p237, %p238
    %p240 = scmp.ne.s32.totalorder %s228, %s229
    %p241 = scmp.eq.s32.totalorder %s30, 1
    %p242 = por %p240, %p241
    %p244 = scmp.ne.s32.totalorder %s229, %s243
    %p245 = scmp.eq.s32.totalorder %s30, 0
    %p246 = por %p244, %p245
    %s248 = sadd.s32 %s247, 1
    %p251 = scmp.eq.s32.totalorder %s24, 1
    %p252 = scmp.ne.s32.totalorder %s247, %s249
    %p253 = scmp.eq.s32.totalorder %s24, 0
    %p254 = por %p252, %p253
    %p255 = scmp.ne.s32.totalorder %s247, %s249
    %p256 = scmp.eq.s32.totalorder %s29, 1
    %p257 = por %p255, %p256
    %p258 = scmp.ne.s32.totalorder %s249, %s250
    %p259 = scmp.eq.s32.totalorder %s29, 0
    %p260 = por %p258, %p259
    %p261 = scmp.ne.s32.totalorder %s249, %s250
    %p262 = scmp.eq.s32.totalorder %s30, 1
    %p263 = por %p261, %p262
    %p265 = scmp.ne.s32.totalorder %s250, %s264
    %p266 = scmp.eq.s32.totalorder %s30, 0
    %p267 = por %p265, %p266
    %s269 = sadd.s32 %s268, 1
    %p272 = scmp.eq.s32.totalorder %s24, 1
    %p273 = scmp.ne.s32.totalorder %s268, %s270
    %p274 = scmp.eq.s32.totalorder %s24, 0
    %p275 = por %p273, %p274
    %p276 = scmp.ne.s32.totalorder %s268, %s270
    %p277 = scmp.eq.s32.totalorder %s29, 1
    %p278 = por %p276, %p277
    %p279 = scmp.ne.s32.totalorder %s270, %s271
    %p280 = scmp.eq.s32.totalorder %s29, 0
    %p281 = por %p279, %p280
    %p282 = scmp.ne.s32.totalorder %s270, %s271
    %p283 = scmp.eq.s32.totalorder %s30, 1
    %p284 = por %p282, %p283
    %p286 = scmp.ne.s32.totalorder %s271, %s285
    %p287 = scmp.eq.s32.totalorder %s30, 0
    %p288 = por %p286, %p287
    %s290 = sadd.s32 %s289, 1
    %p293 = scmp.eq.s32.totalorder %s24, 1
    %p294 = scmp.ne.s32.totalorder %s289, %s291
    %p295 = scmp.eq.s32.totalorder %s24, 0
    %p296 = por %p294, %p295
    %p297 = scmp.ne.s32.totalorder %s289, %s291
    %p298 = scmp.eq.s32.totalorder %s29, 1
    %p299 = por %p297, %p298
    %p300 = scmp.ne.s32.totalorder %s291, %s292
    %p301 = scmp.eq.s32.totalorder %s29, 0
    %p302 = por %p300, %p301
    %p303 = scmp.ne.s32.totalorder %s291, %s292
    %p304 = scmp.eq.s32.totalorder %s30, 1
    %p305 = por %p303, %p304
    %p307 = scmp.ne.s32.totalorder %s292, %s306
    %p308 = scmp.eq.s32.totalorder %s30, 0
    %p309 = por %p307, %p308
    %s311 = sadd.s32 %s310, 1
    %p314 = scmp.eq.s32.totalorder %s24, 1
    %p315 = scmp.ne.s32.totalorder %s310, %s312
    %p316 = scmp.eq.s32.totalorder %s24, 0
    %p317 = por %p315, %p316
    %p318 = scmp.ne.s32.totalorder %s310, %s312
    %p319 = scmp.eq.s32.totalorder %s29, 1
    %p320 = por %p318, %p319
    %p321 = scmp.ne.s32.totalorder %s312, %s313
    %p322 = scmp.eq.s32.totalorder %s29, 0
    %p323 = por %p321, %p322
    %p324 = scmp.ne.s32.totalorder %s312, %s313
    %p325 = scmp.eq.s32.totalorder %s30, 1
    %p326 = por %p324, %p325
    %p328 = scmp.ne.s32.totalorder %s313, %s327
    %p329 = scmp.eq.s32.totalorder %s30, 0
    %p330 = por %p328, %p329
    %s332 = sadd.s32 %s331, 1
    %p335 = scmp.eq.s32.totalorder %s24, 1
    %p336 = scmp.ne.s32.totalorder %s331, %s333
    %p337 = scmp.eq.s32.totalorder %s24, 0
    %p338 = por %p336, %p337
    %p339 = scmp.ne.s32.totalorder %s331, %s333
    %p340 = scmp.eq.s32.totalorder %s29, 1
    %p341 = por %p339, %p340
    %p342 = scmp.ne.s32.totalorder %s333, %s334
    %p343 = scmp.eq.s32.totalorder %s29, 0
    %p344 = por %p342, %p343
    %p345 = scmp.ne.s32.totalorder %s333, %s334
    %p346 = scmp.eq.s32.totalorder %s30, 1
    %p347 = por %p345, %p346
    %p349 = scmp.ne.s32.totalorder %s334, %s348
    %p350 = scmp.eq.s32.totalorder %s30, 0
    %p351 = por %p349, %p350
    %s353 = sadd.s32 %s352, 1
    %p356 = scmp.eq.s32.totalorder %s24, 1
    %p357 = scmp.ne.s32.totalorder %s352, %s354
    %p358 = scmp.eq.s32.totalorder %s24, 0
    %p359 = por %p357, %p358
    %p360 = scmp.ne.s32.totalorder %s352, %s354
    %p361 = scmp.eq.s32.totalorder %s29, 1
    %p362 = por %p360, %p361
    %p363 = scmp.ne.s32.totalorder %s354, %s355
    %p364 = scmp.eq.s32.totalorder %s29, 0
    %p365 = por %p363, %p364
    %p366 = scmp.ne.s32.totalorder %s354, %s355
    %p367 = scmp.eq.s32.totalorder %s30, 1
    %p368 = por %p366, %p367
    %p370 = scmp.ne.s32.totalorder %s355, %s369
    %p371 = scmp.eq.s32.totalorder %s30, 0
    %p372 = por %p370, %p371
    %s374 = sadd.s32 %s373, 1
    %p377 = scmp.eq.s32.totalorder %s24, 1
    %p378 = scmp.ne.s32.totalorder %s373, %s375
    %p379 = scmp.eq.s32.totalorder %s24, 0
    %p380 = por %p378, %p379
    %p381 = scmp.ne.s32.totalorder %s373, %s375
    %p382 = scmp.eq.s32.totalorder %s29, 1
    %p383 = por %p381, %p382
    %p384 = scmp.ne.s32.totalorder %s375, %s376
    %p385 = scmp.eq.s32.totalorder %s29, 0
    %p386 = por %p384, %p385
    %p387 = scmp.ne.s32.totalorder %s375, %s376
    %p388 = scmp.eq.s32.totalorder %s30, 1
    %p389 = por %p387, %p388
    %p391 = scmp.ne.s32.totalorder %s376, %s390
    %p392 = scmp.eq.s32.totalorder %s30, 0
    %p393 = por %p391, %p392
    %s395 = sadd.s32 %s394, 1
    %p398 = scmp.eq.s32.totalorder %s24, 1
    %p399 = scmp.ne.s32.totalorder %s394, %s396
    %p400 = scmp.eq.s32.totalorder %s24, 0
    %p401 = por %p399, %p400
    %p402 = scmp.ne.s32.totalorder %s394, %s396
    %p403 = scmp.eq.s32.totalorder %s29, 1
    %p404 = por %p402, %p403
    %p405 = scmp.ne.s32.totalorder %s396, %s397
    %p406 = scmp.eq.s32.totalorder %s29, 0
    %p407 = por %p405, %p406
    %p408 = scmp.ne.s32.totalorder %s396, %s397
    %p409 = scmp.eq.s32.totalorder %s30, 1
    %p410 = por %p408, %p409
    %p412 = scmp.ne.s32.totalorder %s397, %s411
    %p413 = scmp.eq.s32.totalorder %s30, 0
    %p414 = por %p412, %p413
    %s415 = ssub.s32 %s24, %s31
    %p416 = scmp.eq.s32.totalorder %s415, 0
    %s418 = sadd.s32 %s417, 1
    %s419 = scalar_select %p416, %s417, %s418
    %p422 = pneg %p416
    %p423 = scmp.eq.s32.totalorder %s24, 1
    %p424 = por %p422, %p423
    %p425 = scmp.ne.s32.totalorder %s417, %s420
    %p426 = scmp.eq.s32.totalorder %s24, 0
    %p427 = por %p425, %p426
    %p428 = scmp.ne.s32.totalorder %s417, %s420
    %p429 = scmp.eq.s32.totalorder %s29, 1
    %p430 = por %p428, %p429
    %p431 = scmp.ne.s32.totalorder %s420, %s421
    %p432 = scmp.eq.s32.totalorder %s29, 0
    %p433 = por %p431, %p432
    %p434 = scmp.ne.s32.totalorder %s420, %s421
    %p435 = scmp.eq.s32.totalorder %s30, 1
    %p436 = por %p434, %p435
    %p438 = scmp.ne.s32.totalorder %s421, %s437
    %p439 = scmp.eq.s32.totalorder %s30, 0
    %p440 = por %p438, %p439
    %p441 = scmp.le.s32.totalorder 1, %s24
    %p442 = scmp.lt.s32.totalorder %s24, 3
    %p443 = pnand %p441, %p442
    %p444 = pneg %p443
    // Predicated region
    $region9: #{encoder_forward.1} parent=5 // pred_check
      _
    $region10: #{encoder_forward.1} parent=5 // pred_check_branch
      %446 = sbr.rel (%p443) target = $region12
    $region11: #{encoder_forward.1} parent=5 // pred_region
      %s447 = ssub.s32 %s24, 1
      // Predicated region
      $region13: #{encoder_forward.1} parent=11 // pred_check
        %p448 = pneg %p71
      $region14: #{encoder_forward.1} parent=11 // pred_check_branch
        %450 = sbr.rel (%p448) target = $region16
      $region15: #{encoder_forward.1} parent=11 // pred_region
        _
      $region16: #{encoder_forward.1} parent=11 // pred_fallthru
        _
      // Predicated region
      $region17: #{encoder_forward.1} parent=11 // pred_check
        %p451 = pneg %p92
      $region18: #{encoder_forward.1} parent=11 // pred_check_branch
        %453 = sbr.rel (%p451) target = $region20
      $region19: #{encoder_forward.1} parent=11 // pred_region
        _
      $region20: #{encoder_forward.1} parent=11 // pred_fallthru
        _
      // Predicated region
      $region21: #{encoder_forward.1} parent=11 // pred_check
        %p454 = pneg %p113
      $region22: #{encoder_forward.1} parent=11 // pred_check_branch
        %456 = sbr.rel (%p454) target = $region24
      $region23: #{encoder_forward.1} parent=11 // pred_region
        _
      $region24: #{encoder_forward.1} parent=11 // pred_fallthru
        _
      // Predicated region
      $region25: #{encoder_forward.1} parent=11 // pred_check
        %p457 = pneg %p134
      $region26: #{encoder_forward.1} parent=11 // pred_check_branch
        %459 = sbr.rel (%p457) target = $region28
      $region27: #{encoder_forward.1} parent=11 // pred_region
        _
      $region28: #{encoder_forward.1} parent=11 // pred_fallthru
        _
      // Predicated region
      $region29: #{encoder_forward.1} parent=11 // pred_check
        %p460 = pneg %p155
      $region30: #{encoder_forward.1} parent=11 // pred_check_branch
        %462 = sbr.rel (%p460) target = $region32
      $region31: #{encoder_forward.1} parent=11 // pred_region
        _
      $region32: #{encoder_forward.1} parent=11 // pred_fallthru
        _
      // Predicated region
      $region33: #{encoder_forward.1} parent=11 // pred_check
        %p463 = pneg %p176
      $region34: #{encoder_forward.1} parent=11 // pred_check_branch
        %465 = sbr.rel (%p463) target = $region36
      $region35: #{encoder_forward.1} parent=11 // pred_region
        _
      $region36: #{encoder_forward.1} parent=11 // pred_fallthru
        _
      // Predicated region
      $region37: #{encoder_forward.1} parent=11 // pred_check
        %p466 = pneg %p197
      $region38: #{encoder_forward.1} parent=11 // pred_check_branch
        %468 = sbr.rel (%p466) target = $region40
      $region39: #{encoder_forward.1} parent=11 // pred_region
        _
      $region40: #{encoder_forward.1} parent=11 // pred_fallthru
        _
      // Predicated region
      $region41: #{encoder_forward.1} parent=11 // pred_check
        %p469 = pneg %p218
      $region42: #{encoder_forward.1} parent=11 // pred_check_branch
        %471 = sbr.rel (%p469) target = $region44
      $region43: #{encoder_forward.1} parent=11 // pred_region
        _
      $region44: #{encoder_forward.1} parent=11 // pred_fallthru
        _
      // Predicated region
      $region45: #{encoder_forward.1} parent=11 // pred_check
        %p472 = pneg %p239
      $region46: #{encoder_forward.1} parent=11 // pred_check_branch
        %474 = sbr.rel (%p472) target = $region48
      $region47: #{encoder_forward.1} parent=11 // pred_region
        _
      $region48: #{encoder_forward.1} parent=11 // pred_fallthru
        _
      // Predicated region
      $region49: #{encoder_forward.1} parent=11 // pred_check
        %p475 = pneg %p260
      $region50: #{encoder_forward.1} parent=11 // pred_check_branch
        %477 = sbr.rel (%p475) target = $region52
      $region51: #{encoder_forward.1} parent=11 // pred_region
        _
      $region52: #{encoder_forward.1} parent=11 // pred_fallthru
        _
      // Predicated region
      $region53: #{encoder_forward.1} parent=11 // pred_check
        %p478 = pneg %p281
      $region54: #{encoder_forward.1} parent=11 // pred_check_branch
        %480 = sbr.rel (%p478) target = $region56
      $region55: #{encoder_forward.1} parent=11 // pred_region
        _
      $region56: #{encoder_forward.1} parent=11 // pred_fallthru
        _
      // Predicated region
      $region57: #{encoder_forward.1} parent=11 // pred_check
        %p481 = pneg %p302
      $region58: #{encoder_forward.1} parent=11 // pred_check_branch
        %483 = sbr.rel (%p481) target = $region60
      $region59: #{encoder_forward.1} parent=11 // pred_region
        _
      $region60: #{encoder_forward.1} parent=11 // pred_fallthru
        _
      // Predicated region
      $region61: #{encoder_forward.1} parent=11 // pred_check
        %p484 = pneg %p323
      $region62: #{encoder_forward.1} parent=11 // pred_check_branch
        %486 = sbr.rel (%p484) target = $region64
      $region63: #{encoder_forward.1} parent=11 // pred_region
        _
      $region64: #{encoder_forward.1} parent=11 // pred_fallthru
        _
      // Predicated region
      $region65: #{encoder_forward.1} parent=11 // pred_check
        %p487 = pneg %p344
      $region66: #{encoder_forward.1} parent=11 // pred_check_branch
        %489 = sbr.rel (%p487) target = $region68
      $region67: #{encoder_forward.1} parent=11 // pred_region
        _
      $region68: #{encoder_forward.1} parent=11 // pred_fallthru
        _
      // Predicated region
      $region69: #{encoder_forward.1} parent=11 // pred_check
        %p490 = pneg %p365
      $region70: #{encoder_forward.1} parent=11 // pred_check_branch
        %492 = sbr.rel (%p490) target = $region72
      $region71: #{encoder_forward.1} parent=11 // pred_region
        _
      $region72: #{encoder_forward.1} parent=11 // pred_fallthru
        _
      // Predicated region
      $region73: #{encoder_forward.1} parent=11 // pred_check
        %p493 = pneg %p386
      $region74: #{encoder_forward.1} parent=11 // pred_check_branch
        %495 = sbr.rel (%p493) target = $region76
      $region75: #{encoder_forward.1} parent=11 // pred_region
        _
      $region76: #{encoder_forward.1} parent=11 // pred_fallthru
        _
      // Predicated region
      $region77: #{encoder_forward.1} parent=11 // pred_check
        %p496 = pneg %p407
      $region78: #{encoder_forward.1} parent=11 // pred_check_branch
        %498 = sbr.rel (%p496) target = $region80
      $region79: #{encoder_forward.1} parent=11 // pred_region
        _
      $region80: #{encoder_forward.1} parent=11 // pred_fallthru
        _
    $region12: #{encoder_forward.1} parent=5 // pred_fallthru
      _
    %p499 = scmp.lt.s32.totalorder %s24, 2
    // Predicated region
    $region81: #{encoder_forward.1} parent=5 // pred_check
      %p500 = pneg %p499
    $region82: #{encoder_forward.1} parent=5 // pred_check_branch
      %502 = sbr.rel (%p500) target = $region84
    $region83: #{encoder_forward.1} parent=5 // pred_region
      // Predicated region
      $region85: #{encoder_forward.1} parent=83 // pred_check
        %p503 = pneg %p44
      $region86: #{encoder_forward.1} parent=83 // pred_check_branch
        %505 = sbr.rel (%p503) target = $region88
      $region87: #{encoder_forward.1} parent=83 // pred_region
        %p506 = scmp.lt.s32.totalorder %s24, 1
        %s507 = scalar_select %p506, %s24, 1
        %s508 = smul.addr %s507, 8
        %s509 = scalar_lea.vmem %s0, %s508
      $region88: #{encoder_forward.1} parent=83 // pred_fallthru
        _
    $region84: #{encoder_forward.1} parent=5 // pred_fallthru
      _
    %p510 = scmp.le.s32.totalorder 1, %s24
    %p511 = scmp.lt.s32.totalorder %s24, 3
    %p512 = pnand %p510, %p511
    %p513 = pneg %p512
    // Predicated region
    $region89: #{encoder_forward.1} parent=5 // pred_check
      _
    $region90: #{encoder_forward.1} parent=5 // pred_check_branch
      %515 = sbr.rel (%p512) target = $region92
    $region91: #{encoder_forward.1} parent=5 // pred_region
      %s516 = ssub.s32 %s24, 1
      %p517 = scmp.lt.s32.totalorder %s29, 1
      %s518 = scalar_select %p517, %s29, 1
      %s519 = smul.addr %s518, 8
      %s520 = scalar_lea.vmem %s0, %s519
      %p521 = pneg %p50
      %p522 = pneg %p47
      %p523 = pneg %p71
      %p524 = pneg %p68
      %p525 = pneg %p92
      %p526 = pneg %p89
      %p527 = pneg %p113
      %p528 = pneg %p110
      %p529 = pneg %p134
      %p530 = pneg %p131
      %p531 = pneg %p155
      %p532 = pneg %p152
      %p533 = pneg %p176
      %p534 = pneg %p173
      %p535 = pneg %p197
      %p536 = pneg %p194
      %p537 = pneg %p218
      %p538 = pneg %p215
      %p539 = pneg %p239
      %p540 = pneg %p236
      %p541 = pneg %p260
      %p542 = pneg %p257
      %p543 = pneg %p281
      %p544 = pneg %p278
      %p545 = pneg %p302
      %p546 = pneg %p299
      %p547 = pneg %p323
      %p548 = pneg %p320
      %p549 = pneg %p344
      %p550 = pneg %p341
      %p551 = pneg %p365
      %p552 = pneg %p362
      %p553 = pneg %p386
      %p554 = pneg %p383
      %p555 = pneg %p407
      %p556 = pneg %p404
      %p557 = pneg %p433
      %p558 = pneg %p430
      %p559 = scmp.lt.s32.totalorder %s29, 1
      %s560 = scalar_select %p559, %s29, 1
      %s561 = smul.addr %s560, 8
      %s562 = scalar_lea.vmem %s18, %s561
      %p563 = scmp.lt.s32.totalorder %s29, 1
      %s564 = scalar_select %p563, %s29, 1
      %s565 = smul.addr %s564, 8
      %s566 = scalar_lea.vmem %s0, %s565
      %p567 = scmp.lt.s32.totalorder %s29, 1
      %s568 = scalar_select %p567, %s29, 1
      %s569 = smul.addr %s568, 8
      %s570 = scalar_lea.vmem %s18, %s569
      %v571 = vld [vmem:[%s566] sm:$0xff]
      %v572 = vld [vmem:[%s1] sm:$0xff]
      %v573 = vadd.f32 %v571, %v572
      %v574 = vld [vmem:[%s2] sm:$0xff]
      %v575 = vld [vmem:[%s2 + $0x8] sm:$0xff]
      %v576 = vld [vmem:[%s2 + $0x10] sm:$0xff]
      %v577 = vld [vmem:[%s2 + $0x18] sm:$0xff]
      %v578 = vld [vmem:[%s3] sm:$0x1]
      %v580 = vlaneseq
      %v581 = vshrl.u32 %v580, 7
      %v582 = vsub.s32 0, %v581
      %v583 = vrot.slane %v578, %v582
      %vm585 = vcmask 261120
      %v587 = vsel %vm585, %v573, 0
      %589 = vmatprep.subr.mxu0 0.0
      %590 = vmatpush1.msra.mxu0 %v574
      %591 = vmatprep.subr.mxu0 0.0
      %592 = vmatpush1.msra.mxu0 %v575
      %593 = vmatprep.subr.mxu0 0.0
      %594 = vmatpush1.msra.mxu0 %v576
      %595 = vmatprep.subr.mxu0 0.0
      %596 = vmatpush1.msra.mxu0 %v577
      %597 = vmatprep.subr.mxu0 0.0
      %598 = vmatpush1.msra.mxu0 0.0
      %599 = vmatprep.subr.mxu0 0.0
      %600 = vmatpush1.msra.mxu0 0.0
      %601 = vmatprep.subr.mxu0 0.0
      %602 = vmatpush1.msra.mxu0 0.0
      %603 = vmatprep.subr.mxu0 0.0
      %604 = vmatpush1.msra.mxu0 0.0
      %605 = vmatprep.subr.mxu0 0.0
      %606 = vmatpush1.msra.mxu0 0.0
      %607 = vmatprep.subr.mxu0 0.0
      %608 = vmatpush1.msra.mxu0 0.0
      %609 = vmatprep.subr.mxu0 0.0
      %610 = vmatpush1.msra.mxu0 0.0
      %611 = vmatprep.subr.mxu0 0.0
      %612 = vmatpush1.msra.mxu0 0.0
      %613 = vmatprep.subr.mxu0 0.0
      %614 = vmatpush1.msra.mxu0 0.0
      %615 = vmatprep.subr.mxu0 0.0
      %616 = vmatpush1.msra.mxu0 0.0
      %617 = vmatprep.subr.mxu0 0.0
      %618 = vmatpush1.msra.mxu0 0.0
      %619 = vmatprep.subr.mxu0 0.0
      %620 = vmatpush1.msra.mxu0 0.0
      %621 = vmatprep.subr.mxu0 0.0
      %622 = vmatpush1.msra.mxu0 0.0
      %623 = vmatprep.subr.mxu0 0.0
      %624 = vmatpush1.msra.mxu0 0.0
      %625 = vmatprep.subr.mxu0 0.0
      %626 = vmatpush1.msra.mxu0 0.0
      %627 = vmatprep.subr.mxu0 0.0
      %628 = vmatpush1.msra.mxu0 0.0
      %629 = vmatprep.subr.mxu0 0.0
      %630 = vmatpush1.msra.mxu0 0.0
      %631 = vmatprep.subr.mxu0 0.0
      %632 = vmatpush1.msra.mxu0 0.0
      %633 = vmatprep.subr.mxu0 0.0
      %634 = vmatpush1.msra.mxu0 0.0
      %635 = vmatprep.subr.mxu0 0.0
      %636 = vmatpush1.msra.mxu0 0.0
      %637 = vmatprep.subr.mxu0 0.0
      %638 = vmatpush1.msra.mxu0 0.0
      %639 = vmatprep.subr.mxu0 0.0
      %640 = vmatpush1.msra.mxu0 0.0
      %641 = vmatprep.subr.mxu0 0.0
      %642 = vmatpush1.msra.mxu0 0.0
      %643 = vmatprep.subr.mxu0 0.0
      %644 = vmatpush1.msra.mxu0 0.0
      %645 = vmatprep.subr.mxu0 0.0
      %646 = vmatpush1.msra.mxu0 0.0
      %647 = vmatprep.subr.mxu0 0.0
      %648 = vmatpush1.msra.mxu0 0.0
      %649 = vmatprep.subr.mxu0 0.0
      %650 = vmatpush1.msra.mxu0 0.0
      %651 = vmatprep.subr.mxu0 0.0
      %652 = vmatpush1.msra.mxu0 0.0
      %653 = vmatprep.mubr.f32.mxu0 0.0
      %654 = vmatmul.mubr.f32.gmra.mrb[0].mxu0 %v587
      %v655 = vpop.f32.mrb[0].mxu0
      %v656 = vadd.f32 %v583, %v655
      %v657 = vpop.f32.mrb[0].mxu0
      %658 = vdwg.mxu0
      %v659 = vld [vmem:[%s4] sm:$0xff]
      %v660 = vld [vmem:[%s4 + $0x8] sm:$0xff]
      %v661 = vld [vmem:[%s4 + $0x10] sm:$0xff]
      %v662 = vld [vmem:[%s4 + $0x18] sm:$0xff]
      %v663 = vld [vmem:[%s5] sm:$0x1]
      %v665 = vlaneseq
      %v666 = vshrl.u32 %v665, 7
      %v667 = vsub.s32 0, %v666
      %v668 = vrot.slane %v663, %v667
      %670 = vmatprep.subr.mxu0 0.0
      %671 = vmatpush1.msra.mxu0 %v659
      %672 = vmatprep.subr.mxu0 0.0
      %673 = vmatpush1.msra.mxu0 %v660
      %674 = vmatprep.subr.mxu0 0.0
      %675 = vmatpush1.msra.mxu0 %v661
      %676 = vmatprep.subr.mxu0 0.0
      %677 = vmatpush1.msra.mxu0 %v662
      %678 = vmatprep.subr.mxu0 0.0
      %679 = vmatpush1.msra.mxu0 0.0
      %680 = vmatprep.subr.mxu0 0.0
      %681 = vmatpush1.msra.mxu0 0.0
      %682 = vmatprep.subr.mxu0 0.0
      %683 = vmatpush1.msra.mxu0 0.0
      %684 = vmatprep.subr.mxu0 0.0
      %685 = vmatpush1.msra.mxu0 0.0
      %686 = vmatprep.subr.mxu0 0.0
      %687 = vmatpush1.msra.mxu0 0.0
      %688 = vmatprep.subr.mxu0 0.0
      %689 = vmatpush1.msra.mxu0 0.0
      %690 = vmatprep.subr.mxu0 0.0
      %691 = vmatpush1.msra.mxu0 0.0
      %692 = vmatprep.subr.mxu0 0.0
      %693 = vmatpush1.msra.mxu0 0.0
      %694 = vmatprep.subr.mxu0 0.0
      %695 = vmatpush1.msra.mxu0 0.0
      %696 = vmatprep.subr.mxu0 0.0
      %697 = vmatpush1.msra.mxu0 0.0
      %698 = vmatprep.subr.mxu0 0.0
      %699 = vmatpush1.msra.mxu0 0.0
      %700 = vmatprep.subr.mxu0 0.0
      %701 = vmatpush1.msra.mxu0 0.0
      %702 = vmatprep.subr.mxu0 0.0
      %703 = vmatpush1.msra.mxu0 0.0
      %704 = vmatprep.subr.mxu0 0.0
      %705 = vmatpush1.msra.mxu0 0.0
      %706 = vmatprep.subr.mxu0 0.0
      %707 = vmatpush1.msra.mxu0 0.0
      %708 = vmatprep.subr.mxu0 0.0
      %709 = vmatpush1.msra.mxu0 0.0
      %710 = vmatprep.subr.mxu0 0.0
      %711 = vmatpush1.msra.mxu0 0.0
      %712 = vmatprep.subr.mxu0 0.0
      %713 = vmatpush1.msra.mxu0 0.0
      %714 = vmatprep.subr.mxu0 0.0
      %715 = vmatpush1.msra.mxu0 0.0
      %716 = vmatprep.subr.mxu0 0.0
      %717 = vmatpush1.msra.mxu0 0.0
      %718 = vmatprep.subr.mxu0 0.0
      %719 = vmatpush1.msra.mxu0 0.0
      %720 = vmatprep.subr.mxu0 0.0
      %721 = vmatpush1.msra.mxu0 0.0
      %722 = vmatprep.subr.mxu0 0.0
      %723 = vmatpush1.msra.mxu0 0.0
      %724 = vmatprep.subr.mxu0 0.0
      %725 = vmatpush1.msra.mxu0 0.0
      %726 = vmatprep.subr.mxu0 0.0
      %727 = vmatpush1.msra.mxu0 0.0
      %728 = vmatprep.subr.mxu0 0.0
      %729 = vmatpush1.msra.mxu0 0.0
      %730 = vmatprep.subr.mxu0 0.0
      %731 = vmatpush1.msra.mxu0 0.0
      %732 = vmatprep.subr.mxu0 0.0
      %733 = vmatpush1.msra.mxu0 0.0
      %734 = vmatprep.mubr.f32.mxu0 0.0
      %735 = vmatmul.mubr.f32.gmra.mrb[0].mxu0 %v587
      %v736 = vpop.f32.mrb[0].mxu0
      %v737 = vadd.f32 %v668, %v736
      %v738 = vpop.f32.mrb[0].mxu0
      %739 = vdwg.mxu0
      %v740 = vld [vmem:[%s6] sm:$0xff]
      %v741 = vld [vmem:[%s6 + $0x8] sm:$0xff]
      %v742 = vld [vmem:[%s6 + $0x10] sm:$0xff]
      %v743 = vld [vmem:[%s6 + $0x18] sm:$0xff]
      %v744 = vld [vmem:[%s7] sm:$0x1]
      %v746 = vlaneseq
      %v747 = vshrl.u32 %v746, 7
      %v748 = vsub.s32 0, %v747
      %v749 = vrot.slane %v744, %v748
      %751 = vmatprep.subr.mxu0 0.0
      %752 = vmatpush1.msra.mxu0 %v740
      %753 = vmatprep.subr.mxu0 0.0
      %754 = vmatpush1.msra.mxu0 %v741
      %755 = vmatprep.subr.mxu0 0.0
      %756 = vmatpush1.msra.mxu0 %v742
      %757 = vmatprep.subr.mxu0 0.0
      %758 = vmatpush1.msra.mxu0 %v743
      %759 = vmatprep.subr.mxu0 0.0
      %760 = vmatpush1.msra.mxu0 0.0
      %761 = vmatprep.subr.mxu0 0.0
      %762 = vmatpush1.msra.mxu0 0.0
      %763 = vmatprep.subr.mxu0 0.0
      %764 = vmatpush1.msra.mxu0 0.0
      %765 = vmatprep.subr.mxu0 0.0
      %766 = vmatpush1.msra.mxu0 0.0
      %767 = vmatprep.subr.mxu0 0.0
      %768 = vmatpush1.msra.mxu0 0.0
      %769 = vmatprep.subr.mxu0 0.0
      %770 = vmatpush1.msra.mxu0 0.0
      %771 = vmatprep.subr.mxu0 0.0
      %772 = vmatpush1.msra.mxu0 0.0
      %773 = vmatprep.subr.mxu0 0.0
      %774 = vmatpush1.msra.mxu0 0.0
      %775 = vmatprep.subr.mxu0 0.0
      %776 = vmatpush1.msra.mxu0 0.0
      %777 = vmatprep.subr.mxu0 0.0
      %778 = vmatpush1.msra.mxu0 0.0
      %779 = vmatprep.subr.mxu0 0.0
      %780 = vmatpush1.msra.mxu0 0.0
      %781 = vmatprep.subr.mxu0 0.0
      %782 = vmatpush1.msra.mxu0 0.0
      %783 = vmatprep.subr.mxu0 0.0
      %784 = vmatpush1.msra.mxu0 0.0
      %785 = vmatprep.subr.mxu0 0.0
      %786 = vmatpush1.msra.mxu0 0.0
      %787 = vmatprep.subr.mxu0 0.0
      %788 = vmatpush1.msra.mxu0 0.0
      %789 = vmatprep.subr.mxu0 0.0
      %790 = vmatpush1.msra.mxu0 0.0
      %791 = vmatprep.subr.mxu0 0.0
      %792 = vmatpush1.msra.mxu0 0.0
      %793 = vmatprep.subr.mxu0 0.0
      %794 = vmatpush1.msra.mxu0 0.0
      %795 = vmatprep.subr.mxu0 0.0
      %796 = vmatpush1.msra.mxu0 0.0
      %797 = vmatprep.subr.mxu0 0.0
      %798 = vmatpush1.msra.mxu0 0.0
      %799 = vmatprep.subr.mxu0 0.0
      %800 = vmatpush1.msra.mxu0 0.0
      %801 = vmatprep.subr.mxu0 0.0
      %802 = vmatpush1.msra.mxu0 0.0
      %803 = vmatprep.subr.mxu0 0.0
      %804 = vmatpush1.msra.mxu0 0.0
      %805 = vmatprep.subr.mxu0 0.0
      %806 = vmatpush1.msra.mxu0 0.0
      %807 = vmatprep.subr.mxu0 0.0
      %808 = vmatpush1.msra.mxu0 0.0
      %809 = vmatprep.subr.mxu0 0.0
      %810 = vmatpush1.msra.mxu0 0.0
      %811 = vmatprep.subr.mxu0 0.0
      %812 = vmatpush1.msra.mxu0 0.0
      %813 = vmatprep.subr.mxu0 0.0
      %814 = vmatpush1.msra.mxu0 0.0
      %815 = vmatprep.mubr.f32.mxu0 0.0
      %816 = vmatmul.mubr.f32.gmra.mrb[0].mxu0 %v587
      %v817 = vpop.f32.mrb[0].mxu0
      %v818 = vadd.f32 %v749, %v817
      %v819 = vpop.f32.mrb[0].mxu0
      %820 = vdwg.mxu0
      %vm821 = vcmask 64512
      %v823 = vsel %vm821, %v656, 0
      %v826 = vsel %vm821, %v737, 0
      %828 = vmatprep.subr.mxu0 0.0
      %829 = vmatpush1.xpose.msra.mxu0 %v826
      %830 = vmatprep.subr.mxu0 0.0
      %831 = vmatpush1.xpose.msra.mxu0 0.0
      %832 = vmatprep.subr.mxu0 0.0
      %833 = vmatpush1.xpose.msra.mxu0 0.0
      %834 = vmatprep.subr.mxu0 0.0
      %835 = vmatpush1.xpose.msra.mxu0 0.0
      %836 = vmatprep.subr.mxu0 0.0
      %837 = vmatpush1.xpose.msra.mxu0 0.0
      %838 = vmatprep.subr.mxu0 0.0
      %839 = vmatpush1.xpose.msra.mxu0 0.0
      %840 = vmatprep.subr.mxu0 0.0
      %841 = vmatpush1.xpose.msra.mxu0 0.0
      %842 = vmatprep.subr.mxu0 0.0
      %843 = vmatpush1.xpose.msra.mxu0 0.0
      %844 = vmatprep.subr.mxu0 0.0
      %845 = vmatpush1.xpose.msra.mxu0 0.0
      %846 = vmatprep.subr.mxu0 0.0
      %847 = vmatpush1.xpose.msra.mxu0 0.0
      %848 = vmatprep.subr.mxu0 0.0
      %849 = vmatpush1.xpose.msra.mxu0 0.0
      %850 = vmatprep.subr.mxu0 0.0
      %851 = vmatpush1.xpose.msra.mxu0 0.0
      %852 = vmatprep.subr.mxu0 0.0
      %853 = vmatpush1.xpose.msra.mxu0 0.0
      %854 = vmatprep.subr.mxu0 0.0
      %855 = vmatpush1.xpose.msra.mxu0 0.0
      %856 = vmatprep.subr.mxu0 0.0
      %857 = vmatpush1.xpose.msra.mxu0 0.0
      %858 = vmatprep.subr.mxu0 0.0
      %859 = vmatpush1.xpose.msra.mxu0 0.0
      %860 = vmatprep.subr.mxu0 0.0
      %861 = vmatpush1.xpose.msra.mxu0 0.0
      %862 = vmatprep.subr.mxu0 0.0
      %863 = vmatpush1.xpose.msra.mxu0 0.0
      %864 = vmatprep.subr.mxu0 0.0
      %865 = vmatpush1.xpose.msra.mxu0 0.0
      %866 = vmatprep.subr.mxu0 0.0
      %867 = vmatpush1.xpose.msra.mxu0 0.0
      %868 = vmatprep.subr.mxu0 0.0
      %869 = vmatpush1.xpose.msra.mxu0 0.0
      %870 = vmatprep.subr.mxu0 0.0
      %871 = vmatpush1.xpose.msra.mxu0 0.0
      %872 = vmatprep.subr.mxu0 0.0
      %873 = vmatpush1.xpose.msra.mxu0 0.0
      %874 = vmatprep.subr.mxu0 0.0
      %875 = vmatpush1.xpose.msra.mxu0 0.0
      %876 = vmatprep.subr.mxu0 0.0
      %877 = vmatpush1.xpose.msra.mxu0 0.0
      %878 = vmatprep.subr.mxu0 0.0
      %879 = vmatpush1.xpose.msra.mxu0 0.0
      %880 = vmatprep.subr.mxu0 0.0
      %881 = vmatpush1.xpose.msra.mxu0 0.0
      %882 = vmatprep.subr.mxu0 0.0
      %883 = vmatpush1.xpose.msra.mxu0 0.0
      %884 = vmatprep.subr.mxu0 0.0
      %885 = vmatpush1.xpose.msra.mxu0 0.0
      %886 = vmatprep.subr.mxu0 0.0
      %887 = vmatpush1.xpose.msra.mxu0 0.0
      %888 = vmatprep.subr.mxu0 0.0
      %889 = vmatpush1.xpose.msra.mxu0 0.0
      %890 = vmatprep.subr.mxu0 0.0
      %891 = vmatpush1.xpose.msra.mxu0 0.0
      %892 = vmatprep.mubr.f32.mxu0 0.0
      %893 = vmatmul.mubr.f32.gmra.mrb[0].mxu0 %v823
      %v894 = vpop.f32.mrb[0].mxu0
      %v895 = vadd.f32 0.0, %v894
      %v896 = vpop.f32.mrb[0].mxu0
      %897 = vdwg.mxu0
      %v898 = vsel %vm821, %v895, -inf
      %899 = vmax.xlane.f32.xlu0 %v898
      %v900 = vpop.xlane.xlu0 %899
      %v901 = vsub.f32 %v895, %v900
      %v902 = vmul.f32 %v901, 1.442695
      %v903 = vpow.pop %v902
      %v904 = vsel %vm821, %v903, 0.0
      %905 = vadd.xlane.f32.xlu0 %v904
      %v906 = vpop.xlane.xlu0 %905
      %v907 = vrcp.pop %v906
      %v908 = vmul.f32 %v903, %v907
      %v910 = vsel %vm821, %v908, 0
      %912 = vmatprep.subr.mxu0 0.0
      %913 = vmatpush1.msra.mxu0 %v818
      %914 = vmatprep.subr.mxu0 0.0
      %915 = vmatpush1.msra.mxu0 0.0
      %916 = vmatprep.subr.mxu0 0.0
      %917 = vmatpush1.msra.mxu0 0.0
      %918 = vmatprep.subr.mxu0 0.0
      %919 = vmatpush1.msra.mxu0 0.0
      %920 = vmatprep.subr.mxu0 0.0
      %921 = vmatpush1.msra.mxu0 0.0
      %922 = vmatprep.subr.mxu0 0.0
      %923 = vmatpush1.msra.mxu0 0.0
      %924 = vmatprep.subr.mxu0 0.0
      %925 = vmatpush1.msra.mxu0 0.0
      %926 = vmatprep.subr.mxu0 0.0
      %927 = vmatpush1.msra.mxu0 0.0
      %928 = vmatprep.subr.mxu0 0.0
      %929 = vmatpush1.msra.mxu0 0.0
      %930 = vmatprep.subr.mxu0 0.0
      %931 = vmatpush1.msra.mxu0 0.0
      %932 = vmatprep.subr.mxu0 0.0
      %933 = vmatpush1.msra.mxu0 0.0
      %934 = vmatprep.subr.mxu0 0.0
      %935 = vmatpush1.msra.mxu0 0.0
      %936 = vmatprep.subr.mxu0 0.0
      %937 = vmatpush1.msra.mxu0 0.0
      %938 = vmatprep.subr.mxu0 0.0
      %939 = vmatpush1.msra.mxu0 0.0
      %940 = vmatprep.subr.mxu0 0.0
      %941 = vmatpush1.msra.mxu0 0.0
      %942 = vmatprep.subr.mxu0 0.0
      %943 = vmatpush1.msra.mxu0 0.0
      %944 = vmatprep.subr.mxu0 0.0
      %945 = vmatpush1.msra.mxu0 0.0
      %946 = vmatprep.subr.mxu0 0.0
      %947 = vmatpush1.msra.mxu0 0.0
      %948 = vmatprep.subr.mxu0 0.0
      %949 = vmatpush1.msra.mxu0 0.0
      %950 = vmatprep.subr.mxu0 0.0
      %951 = vmatpush1.msra.mxu0 0.0
      %952 = vmatprep.subr.mxu0 0.0
      %953 = vmatpush1.msra.mxu0 0.0
      %954 = vmatprep.subr.mxu0 0.0
      %955 = vmatpush1.msra.mxu0 0.0
      %956 = vmatprep.subr.mxu0 0.0
      %957 = vmatpush1.msra.mxu0 0.0
      %958 = vmatprep.subr.mxu0 0.0
      %959 = vmatpush1.msra.mxu0 0.0
      %960 = vmatprep.subr.mxu0 0.0
      %961 = vmatpush1.msra.mxu0 0.0
      %962 = vmatprep.subr.mxu0 0.0
      %963 = vmatpush1.msra.mxu0 0.0
      %964 = vmatprep.subr.mxu0 0.0
      %965 = vmatpush1.msra.mxu0 0.0
      %966 = vmatprep.subr.mxu0 0.0
      %967 = vmatpush1.msra.mxu0 0.0
      %968 = vmatprep.subr.mxu0 0.0
      %969 = vmatpush1.msra.mxu0 0.0
      %970 = vmatprep.subr.mxu0 0.0
      %971 = vmatpush1.msra.mxu0 0.0
      %972 = vmatprep.subr.mxu0 0.0
      %973 = vmatpush1.msra.mxu0 0.0
      %974 = vmatprep.subr.mxu0 0.0
      %975 = vmatpush1.msra.mxu0 0.0
      %976 = vmatprep.mubr.f32.mxu0 0.0
      %977 = vmatmul.mubr.f32.gmra.mrb[0].mxu0 %v910
      %v978 = vpop.f32.mrb[0].mxu0
      %v979 = vadd.f32 0.0, %v978
      %v980 = vpop.f32.mrb[0].mxu0
      %981 = vdwg.mxu0
      %v982 = vld [vmem:[%s8] sm:$0xff]
      %s983 = scalar_lea.vmem %s2, 32
      %v984 = vld [vmem:[%s983] sm:$0xff]
      %v985 = vld [vmem:[%s983 + $0x8] sm:$0xff]
      %v986 = vld [vmem:[%s983 + $0x10] sm:$0xff]
      %v987 = vld [vmem:[%s983 + $0x18] sm:$0xff]
      %s988 = scalar_lea.vmem %s3, 1
      %v989 = vld [vmem:[%s988] sm:$0x1]
      %v991 = vlaneseq
      %v992 = vshrl.u32 %v991, 7
      %v993 = vsub.s32 0, %v992
      %v994 = vrot.slane %v989, %v993
      %996 = vmatprep.subr.mxu0 0.0
      %997 = vmatpush1.msra.mxu0 %v984
      %998 = vmatprep.subr.mxu0 0.0
      %999 = vmatpush1.msra.mxu0 %v985
      %1000 = vmatprep.subr.mxu0 0.0
      %1001 = vmatpush1.msra.mxu0 %v986
      %1002 = vmatprep.subr.mxu0 0.0
      %1003 = vmatpush1.msra.mxu0 %v987
      %1004 = vmatprep.subr.mxu0 0.0
      %1005 = vmatpush1.msra.mxu0 0.0
      %1006 = vmatprep.subr.mxu0 0.0
      %1007 = vmatpush1.msra.mxu0 0.0
      %1008 = vmatprep.subr.mxu0 0.0
      %1009 = vmatpush1.msra.mxu0 0.0
      %1010 = vmatprep.subr.mxu0 0.0
      %1011 = vmatpush1.msra.mxu0 0.0
      %1012 = vmatprep.subr.mxu0 0.0
      %1013 = vmatpush1.msra.mxu0 0.0
      %1014 = vmatprep.subr.mxu0 0.0
      %1015 = vmatpush1.msra.mxu0 0.0
      %1016 = vmatprep.subr.mxu0 0.0
      %1017 = vmatpush1.msra.mxu0 0.0
      %1018 = vmatprep.subr.mxu0 0.0
      %1019 = vmatpush1.msra.mxu0 0.0
      %1020 = vmatprep.subr.mxu0 0.0
      %1021 = vmatpush1.msra.mxu0 0.0
      %1022 = vmatprep.subr.mxu0 0.0
      %1023 = vmatpush1.msra.mxu0 0.0
      %1024 = vmatprep.subr.mxu0 0.0
      %1025 = vmatpush1.msra.mxu0 0.0
      %1026 = vmatprep.subr.mxu0 0.0
      %1027 = vmatpush1.msra.mxu0 0.0
      %1028 = vmatprep.subr.mxu0 0.0
      %1029 = vmatpush1.msra.mxu0 0.0
      %1030 = vmatprep.subr.mxu0 0.0
      %1031 = vmatpush1.msra.mxu0 0.0
      %1032 = vmatprep.subr.mxu0 0.0
      %1033 = vmatpush1.msra.mxu0 0.0
      %1034 = vmatprep.subr.mxu0 0.0
      %1035 = vmatpush1.msra.mxu0 0.0
      %1036 = vmatprep.subr.mxu0 0.0
      %1037 = vmatpush1.msra.mxu0 0.0
      %1038 = vmatprep.subr.mxu0 0.0
      %1039 = vmatpush1.msra.mxu0 0.0
      %1040 = vmatprep.subr.mxu0 0.0
      %1041 = vmatpush1.msra.mxu0 0.0
      %1042 = vmatprep.subr.mxu0 0.0
      %1043 = vmatpush1.msra.mxu0 0.0
      %1044 = vmatprep.subr.mxu0 0.0
      %1045 = vmatpush1.msra.mxu0 0.0
      %1046 = vmatprep.subr.mxu0 0.0
      %1047 = vmatpush1.msra.mxu0 0.0
      %1048 = vmatprep.subr.mxu0 0.0
      %1049 = vmatpush1.msra.mxu0 0.0
      %1050 = vmatprep.subr.mxu0 0.0
      %1051 = vmatpush1.msra.mxu0 0.0
      %1052 = vmatprep.subr.mxu0 0.0
      %1053 = vmatpush1.msra.mxu0 0.0
      %1054 = vmatprep.subr.mxu0 0.0
      %1055 = vmatpush1.msra.mxu0 0.0
      %1056 = vmatprep.subr.mxu0 0.0
      %1057 = vmatpush1.msra.mxu0 0.0
      %1058 = vmatprep.subr.mxu0 0.0
      %1059 = vmatpush1.msra.mxu0 0.0
      %1060 = vmatprep.mubr.f32.mxu0 0.0
      %1061 = vmatmul.mubr.f32.gmra.mrb[0].mxu0 %v587
      %v1062 = vpop.f32.mrb[0].mxu0
      %v1063 = vadd.f32 %v994, %v1062
      %v1064 = vpop.f32.mrb[0].mxu0
      %1065 = vdwg.mxu0
      %s1066 = scalar_lea.vmem %s4, 32
      %v1067 = vld [vmem:[%s1066] sm:$0xff]
      %v1068 = vld [vmem:[%s1066 + $0x8] sm:$0xff]
      %v1069 = vld [vmem:[%s1066 + $0x10] sm:$0xff]
      %v1070 = vld [vmem:[%s1066 + $0x18] sm:$0xff]
      %s1071 = scalar_lea.vmem %s5, 1
      %v1072 = vld [vmem:[%s1071] sm:$0x1]
      %v1074 = vlaneseq
      %v1075 = vshrl.u32 %v1074, 7
      %v1076 = vsub.s32 0, %v1075
      %v1077 = vrot.slane %v1072, %v1076
      %1079 = vmatprep.subr.mxu0 0.0
      %1080 = vmatpush1.msra.mxu0 %v1067
      %1081 = vmatprep.subr.mxu0 0.0
      %1082 = vmatpush1.msra.mxu0 %v1068
      %1083 = vmatprep.subr.mxu0 0.0
      %1084 = vmatpush1.msra.mxu0 %v1069
      %1085 = vmatprep.subr.mxu0 0.0
      %1086 = vmatpush1.msra.mxu0 %v1070
      %1087 = vmatprep.subr.mxu0 0.0
      %1088 = vmatpush1.msra.mxu0 0.0
      %1089 = vmatprep.subr.mxu0 0.0
      %1090 = vmatpush1.msra.mxu0 0.0
      %1091 = vmatprep.subr.mxu0 0.0
      %1092 = vmatpush1.msra.mxu0 0.0
      %1093 = vmatprep.subr.mxu0 0.0
      %1094 = vmatpush1.msra.mxu0 0.0
      %1095 = vmatprep.subr.mxu0 0.0
      %1096 = vmatpush1.msra.mxu0 0.0
      %1097 = vmatprep.subr.mxu0 0.0
      %1098 = vmatpush1.msra.mxu0 0.0
      %1099 = vmatprep.subr.mxu0 0.0
      %1100 = vmatpush1.msra.mxu0 0.0
      %1101 = vmatprep.subr.mxu0 0.0
      %1102 = vmatpush1.msra.mxu0 0.0
      %1103 = vmatprep.subr.mxu0 0.0
      %1104 = vmatpush1.msra.mxu0 0.0
      %1105 = vmatprep.subr.mxu0 0.0
      %1106 = vmatpush1.msra.mxu0 0.0
      %1107 = vmatprep.subr.mxu0 0.0
      %1108 = vmatpush1.msra.mxu0 0.0
      %1109 = vmatprep.subr.mxu0 0.0
      %1110 = vmatpush1.msra.mxu0 0.0
      %1111 = vmatprep.subr.mxu0 0.0
      %1112 = vmatpush1.msra.mxu0 0.0
      %1113 = vmatprep.subr.mxu0 0.0
      %1114 = vmatpush1.msra.mxu0 0.0
      %1115 = vmatprep.subr.mxu0 0.0
      %1116 = vmatpush1.msra.mxu0 0.0
      %1117 = vmatprep.subr.mxu0 0.0
      %1118 = vmatpush1.msra.mxu0 0.0
      %1119 = vmatprep.subr.mxu0 0.0
      %1120 = vmatpush1.msra.mxu0 0.0
      %1121 = vmatprep.subr.mxu0 0.0
      %1122 = vmatpush1.msra.mxu0 0.0
      %1123 = vmatprep.subr.mxu0 0.0
      %1124 = vmatpush1.msra.mxu0 0.0
      %1125 = vmatprep.subr.mxu0 0.0
      %1126 = vmatpush1.msra.mxu0 0.0
      %1127 = vmatprep.subr.mxu0 0.0
      %1128 = vmatpush1.msra.mxu0 0.0
      %1129 = vmatprep.subr.mxu0 0.0
      %1130 = vmatpush1.msra.mxu0 0.0
      %1131 = vmatprep.subr.mxu0 0.0
      %1132 = vmatpush1.msra.mxu0 0.0
      %1133 = vmatprep.subr.mxu0 0.0
      %1134 = vmatpush1.msra.mxu0 0.0
      %1135 = vmatprep.subr.mxu0 0.0
      %1136 = vmatpush1.msra.mxu0 0.0
      %1137 = vmatprep.subr.mxu0 0.0
      %1138 = vmatpush1.msra.mxu0 0.0
      %1139 = vmatprep.subr.mxu0 0.0
      %1140 = vmatpush1.msra.mxu0 0.0
      %1141 = vmatprep.subr.mxu0 0.0
      %1142 = vmatpush1.msra.mxu0 0.0
      %1143 = vmatprep.mubr.f32.mxu0 0.0
      %1144 = vmatmul.mubr.f32.gmra.mrb[0].mxu0 %v587
      %v1145 = vpop.f32.mrb[0].mxu0
      %v1146 = vadd.f32 %v1077, %v1145
      %v1147 = vpop.f32.mrb[0].mxu0
      %1148 = vdwg.mxu0
      %s1149 = scalar_lea.vmem %s6, 32
      %v1150 = vld [vmem:[%s1149] sm:$0xff]
      %v1151 = vld [vmem:[%s1149 + $0x8] sm:$0xff]
      %v1152 = vld [vmem:[%s1149 + $0x10] sm:$0xff]
      %v1153 = vld [vmem:[%s1149 + $0x18] sm:$0xff]
      %s1154 = scalar_lea.vmem %s7, 1
      %v1155 = vld [vmem:[%s1154] sm:$0x1]
      %v1157 = vlaneseq
      %v1158 = vshrl.u32 %v1157, 7
      %v1159 = vsub.s32 0, %v1158
      %v1160 = vrot.slane %v1155, %v1159
      %1162 = vmatprep.subr.mxu0 0.0
      %1163 = vmatpush1.msra.mxu0 %v1150
      %1164 = vmatprep.subr.mxu0 0.0
      %1165 = vmatpush1.msra.mxu0 %v1151
      %1166 = vmatprep.subr.mxu0 0.0
      %1167 = vmatpush1.msra.mxu0 %v1152
      %1168 = vmatprep.subr.mxu0 0.0
      %1169 = vmatpush1.msra.mxu0 %v1153
      %1170 = vmatprep.subr.mxu0 0.0
      %1171 = vmatpush1.msra.mxu0 0.0
      %1172 = vmatprep.subr.mxu0 0.0
      %1173 = vmatpush1.msra.mxu0 0.0
      %1174 = vmatprep.subr.mxu0 0.0
      %1175 = vmatpush1.msra.mxu0 0.0
      %1176 = vmatprep.subr.mxu0 0.0
      %1177 = vmatpush1.msra.mxu0 0.0
      %1178 = vmatprep.subr.mxu0 0.0
      %1179 = vmatpush1.msra.mxu0 0.0
      %1180 = vmatprep.subr.mxu0 0.0
      %1181 = vmatpush1.msra.mxu0 0.0
      %1182 = vmatprep.subr.mxu0 0.0
      %1183 = vmatpush1.msra.mxu0 0.0
      %1184 = vmatprep.subr.mxu0 0.0
      %1185 = vmatpush1.msra.mxu0 0.0
      %1186 = vmatprep.subr.mxu0 0.0
      %1187 = vmatpush1.msra.mxu0 0.0
      %1188 = vmatprep.subr.mxu0 0.0
      %1189 = vmatpush1.msra.mxu0 0.0
      %1190 = vmatprep.subr.mxu0 0.0
      %1191 = vmatpush1.msra.mxu0 0.0
      %1192 = vmatprep.subr.mxu0 0.0
      %1193 = vmatpush1.msra.mxu0 0.0
      %1194 = vmatprep.subr.mxu0 0.0
      %1195 = vmatpush1.msra.mxu0 0.0
      %1196 = vmatprep.subr.mxu0 0.0
      %1197 = vmatpush1.msra.mxu0 0.0
      %1198 = vmatprep.subr.mxu0 0.0
      %1199 = vmatpush1.msra.mxu0 0.0
      %1200 = vmatprep.subr.mxu0 0.0
      %1201 = vmatpush1.msra.mxu0 0.0
      %1202 = vmatprep.subr.mxu0 0.0
      %1203 = vmatpush1.msra.mxu0 0.0
      %1204 = vmatprep.subr.mxu0 0.0
      %1205 = vmatpush1.msra.mxu0 0.0
      %1206 = vmatprep.subr.mxu0 0.0
      %1207 = vmatpush1.msra.mxu0 0.0
      %1208 = vmatprep.subr.mxu0 0.0
      %1209 = vmatpush1.msra.mxu0 0.0
      %1210 = vmatprep.subr.mxu0 0.0
      %1211 = vmatpush1.msra.mxu0 0.0
      %1212 = vmatprep.subr.mxu0 0.0
      %1213 = vmatpush1.msra.mxu0 0.0
      %1214 = vmatprep.subr.mxu0 0.0
      %1215 = vmatpush1.msra.mxu0 0.0
      %1216 = vmatprep.subr.mxu0 0.0
      %1217 = vmatpush1.msra.mxu0 0.0
      %1218 = vmatprep.subr.mxu0 0.0
      %1219 = vmatpush1.msra.mxu0 0.0
      %1220 = vmatprep.subr.mxu0 0.0
      %1221 = vmatpush1.msra.mxu0 0.0
      %1222 = vmatprep.subr.mxu0 0.0
      %1223 = vmatpush1.msra.mxu0 0.0
      %1224 = vmatprep.subr.mxu0 0.0
      %1225 = vmatpush1.msra.mxu0 0.0
      %1226 = vmatprep.mubr.f32.mxu0 0.0
      %1227 = vmatmul.mubr.f32.gmra.mrb[0].mxu0 %v587
      %v1228 = vpop.f32.mrb[0].mxu0
      %v1229 = vadd.f32 %v1160, %v1228
      %v1230 = vpop.f32.mrb[0].mxu0
      %1231 = vdwg.mxu0
      %v1233 = vsel %vm821, %v1063, 0
      %v1236 = vsel %vm821, %v1146, 0
      %1238 = vmatprep.subr.mxu0 0.0
      %1239 = vmatpush1.xpose.msra.mxu0 %v1236
      %1240 = vmatprep.subr.mxu0 0.0
      %1241 = vmatpush1.xpose.msra.mxu0 0.0
      %1242 = vmatprep.subr.mxu0 0.0
      %1243 = vmatpush1.xpose.msra.mxu0 0.0
      %1244 = vmatprep.subr.mxu0 0.0
      %1245 = vmatpush1.xpose.msra.mxu0 0.0
      %1246 = vmatprep.subr.mxu0 0.0
      %1247 = vmatpush1.xpose.msra.mxu0 0.0
      %1248 = vmatprep.subr.mxu0 0.0
      %1249 = vmatpush1.xpose.msra.mxu0 0.0
      %1250 = vmatprep.subr.mxu0 0.0
      %1251 = vmatpush1.xpose.msra.mxu0 0.0
      %1252 = vmatprep.subr.mxu0 0.0
      %1253 = vmatpush1.xpose.msra.mxu0 0.0
      %1254 = vmatprep.subr.mxu0 0.0
      %1255 = vmatpush1.xpose.msra.mxu0 0.0
      %1256 = vmatprep.subr.mxu0 0.0
      %1257 = vmatpush1.xpose.msra.mxu0 0.0
      %1258 = vmatprep.subr.mxu0 0.0
      %1259 = vmatpush1.xpose.msra.mxu0 0.0
      %1260 = vmatprep.subr.mxu0 0.0
      %1261 = vmatpush1.xpose.msra.mxu0 0.0
      %1262 = vmatprep.subr.mxu0 0.0
      %1263 = vmatpush1.xpose.msra.mxu0 0.0
      %1264 = vmatprep.subr.mxu0 0.0
      %1265 = vmatpush1.xpose.msra.mxu0 0.0
      %1266 = vmatprep.subr.mxu0 0.0
      %1267 = vmatpush1.xpose.msra.mxu0 0.0
      %1268 = vmatprep.subr.mxu0 0.0
      %1269 = vmatpush1.xpose.msra.mxu0 0.0
      %1270 = vmatprep.subr.mxu0 0.0
      %1271 = vmatpush1.xpose.msra.mxu0 0.0
      %1272 = vmatprep.subr.mxu0 0.0
      %1273 = vmatpush1.xpose.msra.mxu0 0.0
      %1274 = vmatprep.subr.mxu0 0.0
      %1275 = vmatpush1.xpose.msra.mxu0 0.0
      %1276 = vmatprep.subr.mxu0 0.0
      %1277 = vmatpush1.xpose.msra.mxu0 0.0
      %1278 = vmatprep.subr.mxu0 0.0
      %1279 = vmatpush1.xpose.msra.mxu0 0.0
      %1280 = vmatprep.subr.mxu0 0.0
      %1281 = vmatpush1.xpose.msra.mxu0 0.0
      %1282 = vmatprep.subr.mxu0 0.0
      %1283 = vmatpush1.xpose.msra.mxu0 0.0
      %1284 = vmatprep.subr.mxu0 0.0
      %1285 = vmatpush1.xpose.msra.mxu0 0.0
      %1286 = vmatprep.subr.mxu0 0.0
      %1287 = vmatpush1.xpose.msra.mxu0 0.0
      %1288 = vmatprep.subr.mxu0 0.0
      %1289 = vmatpush1.xpose.msra.mxu0 0.0
      %1290 = vmatprep.subr.mxu0 0.0
      %1291 = vmatpush1.xpose.msra.mxu0 0.0
      %1292 = vmatprep.subr.mxu0 0.0
      %1293 = vmatpush1.xpose.msra.mxu0 0.0
      %1294 = vmatprep.subr.mxu0 0.0
      %1295 = vmatpush1.xpose.msra.mxu0 0.0
      %1296 = vmatprep.subr.mxu0 0.0
      %1297 = vmatpush1.xpose.msra.mxu0 0.0
      %1298 = vmatprep.subr.mxu0 0.0
      %1299 = vmatpush1.xpose.msra.mxu0 0.0
      %1300 = vmatprep.subr.mxu0 0.0
      %1301 = vmatpush1.xpose.msra.mxu0 0.0
      %1302 = vmatprep.mubr.f32.mxu0 0.0
      %1303 = vmatmul.mubr.f32.gmra.mrb[0].mxu0 %v1233
      %v1304 = vpop.f32.mrb[0].mxu0
      %v1305 = vadd.f32 0.0, %v1304
      %v1306 = vpop.f32.mrb[0].mxu0
      %1307 = vdwg.mxu0
      %v1308 = vsel %vm821, %v1305, -inf
      %1309 = vmax.xlane.f32.xlu0 %v1308
      %v1310 = vpop.xlane.xlu0 %1309
      %v1311 = vsub.f32 %v1305, %v1310
      %v1312 = vmul.f32 %v1311, 1.442695
      %v1313 = vpow.pop %v1312
      %v1314 = vsel %vm821, %v1313, 0.0
      %1315 = vadd.xlane.f32.xlu0 %v1314
      %v1316 = vpop.xlane.xlu0 %1315
      %v1317 = vrcp.pop %v1316
      %v1318 = vmul.f32 %v1313, %v1317
      %v1320 = vsel %vm821, %v1318, 0
      %1322 = vmatprep.subr.mxu0 0.0
      %1323 = vmatpush1.msra.mxu0 %v1229
      %1324 = vmatprep.subr.mxu0 0.0
      %1325 = vmatpush1.msra.mxu0 0.0
      %1326 = vmatprep.subr.mxu0 0.0
      %1327 = vmatpush1.msra.mxu0 0.0
      %1328 = vmatprep.subr.mxu0 0.0
      %1329 = vmatpush1.msra.mxu0 0.0
      %1330 = vmatprep.subr.mxu0 0.0
      %1331 = vmatpush1.msra.mxu0 0.0
      %1332 = vmatprep.subr.mxu0 0.0
      %1333 = vmatpush1.msra.mxu0 0.0
      %1334 = vmatprep.subr.mxu0 0.0
      %1335 = vmatpush1.msra.mxu0 0.0
      %1336 = vmatprep.subr.mxu0 0.0
      %1337 = vmatpush1.msra.mxu0 0.0
      %1338 = vmatprep.subr.mxu0 0.0
      %1339 = vmatpush1.msra.mxu0 0.0
      %1340 = vmatprep.subr.mxu0 0.0
      %1341 = vmatpush1.msra.mxu0 0.0
      %1342 = vmatprep.subr.mxu0 0.0
      %1343 = vmatpush1.msra.mxu0 0.0
      %1344 = vmatprep.subr.mxu0 0.0
      %1345 = vmatpush1.msra.mxu0 0.0
      %1346 = vmatprep.subr.mxu0 0.0
      %1347 = vmatpush1.msra.mxu0 0.0
      %1348 = vmatprep.subr.mxu0 0.0
      %1349 = vmatpush1.msra.mxu0 0.0
      %1350 = vmatprep.subr.mxu0 0.0
      %1351 = vmatpush1.msra.mxu0 0.0
      %1352 = vmatprep.subr.mxu0 0.0
      %1353 = vmatpush1.msra.mxu0 0.0
      %1354 = vmatprep.subr.mxu0 0.0
      %1355 = vmatpush1.msra.mxu0 0.0
      %1356 = vmatprep.subr.mxu0 0.0
      %1357 = vmatpush1.msra.mxu0 0.0
      %1358 = vmatprep.subr.mxu0 0.0
      %1359 = vmatpush1.msra.mxu0 0.0
      %1360 = vmatprep.subr.mxu0 0.0
      %1361 = vmatpush1.msra.mxu0 0.0
      %1362 = vmatprep.subr.mxu0 0.0
      %1363 = vmatpush1.msra.mxu0 0.0
      %1364 = vmatprep.subr.mxu0 0.0
      %1365 = vmatpush1.msra.mxu0 0.0
      %1366 = vmatprep.subr.mxu0 0.0
      %1367 = vmatpush1.msra.mxu0 0.0
      %1368 = vmatprep.subr.mxu0 0.0
      %1369 = vmatpush1.msra.mxu0 0.0
      %1370 = vmatprep.subr.mxu0 0.0
      %1371 = vmatpush1.msra.mxu0 0.0
      %1372 = vmatprep.subr.mxu0 0.0
      %1373 = vmatpush1.msra.mxu0 0.0
      %1374 = vmatprep.subr.mxu0 0.0
      %1375 = vmatpush1.msra.mxu0 0.0
      %1376 = vmatprep.subr.mxu0 0.0
      %1377 = vmatpush1.msra.mxu0 0.0
      %1378 = vmatprep.subr.mxu0 0.0
      %1379 = vmatpush1.msra.mxu0 0.0
      %1380 = vmatprep.subr.mxu0 0.0
      %1381 = vmatpush1.msra.mxu0 0.0
      %1382 = vmatprep.subr.mxu0 0.0
      %1383 = vmatpush1.msra.mxu0 0.0
      %1384 = vmatprep.subr.mxu0 0.0
      %1385 = vmatpush1.msra.mxu0 0.0
      %1386 = vmatprep.mubr.f32.mxu0 0.0
      %1387 = vmatmul.mubr.f32.gmra.mrb[0].mxu0 %v1320
      %v1388 = vpop.f32.mrb[0].mxu0
      %v1389 = vadd.f32 0.0, %v1388
      %v1390 = vpop.f32.mrb[0].mxu0
      %1391 = vdwg.mxu0
      %s1392 = scalar_lea.vmem %s8, 8
      %v1393 = vld [vmem:[%s1392] sm:$0xff]
      %v1395 = vsel %vm821, %v1389, 0
      %1397 = vmatprep.subr.mxu0 0.0
      %1398 = vmatpush1.msra.mxu0 %v1393
      %1399 = vmatprep.subr.mxu0 0.0
      %1400 = vmatpush1.msra.mxu0 0.0
      %1401 = vmatprep.subr.mxu0 0.0
      %1402 = vmatpush1.msra.mxu0 0.0
      %1403 = vmatprep.subr.mxu0 0.0
      %1404 = vmatpush1.msra.mxu0 0.0
      %1405 = vmatprep.subr.mxu0 0.0
      %1406 = vmatpush1.msra.mxu0 0.0
      %1407 = vmatprep.subr.mxu0 0.0
      %1408 = vmatpush1.msra.mxu0 0.0
      %1409 = vmatprep.subr.mxu0 0.0
      %1410 = vmatpush1.msra.mxu0 0.0
      %1411 = vmatprep.subr.mxu0 0.0
      %1412 = vmatpush1.msra.mxu0 0.0
      %1413 = vmatprep.subr.mxu0 0.0
      %1414 = vmatpush1.msra.mxu0 0.0
      %1415 = vmatprep.subr.mxu0 0.0
      %1416 = vmatpush1.msra.mxu0 0.0
      %1417 = vmatprep.subr.mxu0 0.0
      %1418 = vmatpush1.msra.mxu0 0.0
      %1419 = vmatprep.subr.mxu0 0.0
      %1420 = vmatpush1.msra.mxu0 0.0
      %1421 = vmatprep.subr.mxu0 0.0
      %1422 = vmatpush1.msra.mxu0 0.0
      %1423 = vmatprep.subr.mxu0 0.0
      %1424 = vmatpush1.msra.mxu0 0.0
      %1425 = vmatprep.subr.mxu0 0.0
      %1426 = vmatpush1.msra.mxu0 0.0
      %1427 = vmatprep.subr.mxu0 0.0
      %1428 = vmatpush1.msra.mxu0 0.0
      %1429 = vmatprep.subr.mxu0 0.0
      %1430 = vmatpush1.msra.mxu0 0.0
      %1431 = vmatprep.subr.mxu0 0.0
      %1432 = vmatpush1.msra.mxu0 0.0
      %1433 = vmatprep.subr.mxu0 0.0
      %1434 = vmatpush1.msra.mxu0 0.0
      %1435 = vmatprep.subr.mxu0 0.0
      %1436 = vmatpush1.msra.mxu0 0.0
      %1437 = vmatprep.subr.mxu0 0.0
      %1438 = vmatpush1.msra.mxu0 0.0
      %1439 = vmatprep.subr.mxu0 0.0
      %1440 = vmatpush1.msra.mxu0 0.0
      %1441 = vmatprep.subr.mxu0 0.0
      %1442 = vmatpush1.msra.mxu0 0.0
      %1443 = vmatprep.subr.mxu0 0.0
      %1444 = vmatpush1.msra.mxu0 0.0
      %1445 = vmatprep.subr.mxu0 0.0
      %1446 = vmatpush1.msra.mxu0 0.0
      %1447 = vmatprep.subr.mxu0 0.0
      %1448 = vmatpush1.msra.mxu0 0.0
      %1449 = vmatprep.subr.mxu0 0.0
      %1450 = vmatpush1.msra.mxu0 0.0
      %1451 = vmatprep.subr.mxu0 0.0
      %1452 = vmatpush1.msra.mxu0 0.0
      %1453 = vmatprep.subr.mxu0 0.0
      %1454 = vmatpush1.msra.mxu0 0.0
      %1455 = vmatprep.subr.mxu0 0.0
      %1456 = vmatpush1.msra.mxu0 0.0
      %1457 = vmatprep.subr.mxu0 0.0
      %1458 = vmatpush1.msra.mxu0 0.0
      %1459 = vmatprep.subr.mxu0 0.0
      %1460 = vmatpush1.msra.mxu0 0.0
      %1461 = vmatprep.mubr.f32.mxu0 0.0
      %1462 = vmatmul.mubr.f32.gmra.mrb[0].mxu0 %v1395
      %v1463 = vpop.f32.mrb[0].mxu0
      %v1464 = vadd.f32 0.0, %v1463
      %v1465 = vpop.f32.mrb[0].mxu0
      %1466 = vdwg.mxu0
      %v1468 = vsel %vm821, %v979, 0
      %1470 = vmatprep.subr.mxu0 0.0
      %1471 = vmatpush1.msra.mxu0 %v982
      %1472 = vmatprep.subr.mxu0 0.0
      %1473 = vmatpush1.msra.mxu0 0.0
      %1474 = vmatprep.subr.mxu0 0.0
      %1475 = vmatpush1.msra.mxu0 0.0
      %1476 = vmatprep.subr.mxu0 0.0
      %1477 = vmatpush1.msra.mxu0 0.0
      %1478 = vmatprep.subr.mxu0 0.0
      %1479 = vmatpush1.msra.mxu0 0.0
      %1480 = vmatprep.subr.mxu0 0.0
      %1481 = vmatpush1.msra.mxu0 0.0
      %1482 = vmatprep.subr.mxu0 0.0
      %1483 = vmatpush1.msra.mxu0 0.0
      %1484 = vmatprep.subr.mxu0 0.0
      %1485 = vmatpush1.msra.mxu0 0.0
      %1486 = vmatprep.subr.mxu0 0.0
      %1487 = vmatpush1.msra.mxu0 0.0
      %1488 = vmatprep.subr.mxu0 0.0
      %1489 = vmatpush1.msra.mxu0 0.0
      %1490 = vmatprep.subr.mxu0 0.0
      %1491 = vmatpush1.msra.mxu0 0.0
      %1492 = vmatprep.subr.mxu0 0.0
      %1493 = vmatpush1.msra.mxu0 0.0
      %1494 = vmatprep.subr.mxu0 0.0
      %1495 = vmatpush1.msra.mxu0 0.0
      %1496 = vmatprep.subr.mxu0 0.0
      %1497 = vmatpush1.msra.mxu0 0.0
      %1498 = vmatprep.subr.mxu0 0.0
      %1499 = vmatpush1.msra.mxu0 0.0
      %1500 = vmatprep.subr.mxu0 0.0
      %1501 = vmatpush1.msra.mxu0 0.0
      %1502 = vmatprep.subr.mxu0 0.0
      %1503 = vmatpush1.msra.mxu0 0.0
      %1504 = vmatprep.subr.mxu0 0.0
      %1505 = vmatpush1.msra.mxu0 0.0
      %1506 = vmatprep.subr.mxu0 0.0
      %1507 = vmatpush1.msra.mxu0 0.0
      %1508 = vmatprep.subr.mxu0 0.0
      %1509 = vmatpush1.msra.mxu0 0.0
      %1510 = vmatprep.subr.mxu0 0.0
      %1511 = vmatpush1.msra.mxu0 0.0
      %1512 = vmatprep.subr.mxu0 0.0
      %1513 = vmatpush1.msra.mxu0 0.0
      %1514 = vmatprep.subr.mxu0 0.0
      %1515 = vmatpush1.msra.mxu0 0.0
      %1516 = vmatprep.subr.mxu0 0.0
      %1517 = vmatpush1.msra.mxu0 0.0
      %1518 = vmatprep.subr.mxu0 0.0
      %1519 = vmatpush1.msra.mxu0 0.0
      %1520 = vmatprep.subr.mxu0 0.0
      %1521 = vmatpush1.msra.mxu0 0.0
      %1522 = vmatprep.subr.mxu0 0.0
      %1523 = vmatpush1.msra.mxu0 0.0
      %1524 = vmatprep.subr.mxu0 0.0
      %1525 = vmatpush1.msra.mxu0 0.0
      %1526 = vmatprep.subr.mxu0 0.0
      %1527 = vmatpush1.msra.mxu0 0.0
      %1528 = vmatprep.subr.mxu0 0.0
      %1529 = vmatpush1.msra.mxu0 0.0
      %1530 = vmatprep.subr.mxu0 0.0
      %1531 = vmatpush1.msra.mxu0 0.0
      %1532 = vmatprep.subr.mxu0 0.0
      %1533 = vmatpush1.msra.mxu0 0.0
      %1534 = vmatprep.mubr.f32.mxu0 0.0
      %1535 = vmatmul.mubr.f32.gmra.mrb[0].mxu0 %v1468
      %v1536 = vpop.f32.mrb[0].mxu0
      %v1537 = vadd.f32 %v1464, %v1536
      %v1538 = vpop.f32.mrb[0].mxu0
      %1539 = vdwg.mxu0
      %s1540 = scalar_lea.vmem %s2, 64
      %v1541 = vld [vmem:[%s1540] sm:$0xff]
      %v1542 = vld [vmem:[%s1540 + $0x8] sm:$0xff]
      %v1543 = vld [vmem:[%s1540 + $0x10] sm:$0xff]
      %v1544 = vld [vmem:[%s1540 + $0x18] sm:$0xff]
      %s1545 = scalar_lea.vmem %s3, 2
      %v1546 = vld [vmem:[%s1545] sm:$0x1]
      %v1548 = vlaneseq
      %v1549 = vshrl.u32 %v1548, 7
      %v1550 = vsub.s32 0, %v1549
      %v1551 = vrot.slane %v1546, %v1550
      %1553 = vmatprep.subr.mxu0 0.0
      %1554 = vmatpush1.msra.mxu0 %v1541
      %1555 = vmatprep.subr.mxu0 0.0
      %1556 = vmatpush1.msra.mxu0 %v1542
      %1557 = vmatprep.subr.mxu0 0.0
      %1558 = vmatpush1.msra.mxu0 %v1543
      %1559 = vmatprep.subr.mxu0 0.0
      %1560 = vmatpush1.msra.mxu0 %v1544
      %1561 = vmatprep.subr.mxu0 0.0
      %1562 = vmatpush1.msra.mxu0 0.0
      %1563 = vmatprep.subr.mxu0 0.0
      %1564 = vmatpush1.msra.mxu0 0.0
      %1565 = vmatprep.subr.mxu0 0.0
      %1566 = vmatpush1.msra.mxu0 0.0
      %1567 = vmatprep.subr.mxu0 0.0
      %1568 = vmatpush1.msra.mxu0 0.0
      %1569 = vmatprep.subr.mxu0 0.0
      %1570 = vmatpush1.msra.mxu0 0.0
      %1571 = vmatprep.subr.mxu0 0.0
      %1572 = vmatpush1.msra.mxu0 0.0
      %1573 = vmatprep.subr.mxu0 0.0
      %1574 = vmatpush1.msra.mxu0 0.0
      %1575 = vmatprep.subr.mxu0 0.0
      %1576 = vmatpush1.msra.mxu0 0.0
      %1577 = vmatprep.subr.mxu0 0.0
      %1578 = vmatpush1.msra.mxu0 0.0
      %1579 = vmatprep.subr.mxu0 0.0
      %1580 = vmatpush1.msra.mxu0 0.0
      %1581 = vmatprep.subr.mxu0 0.0
      %1582 = vmatpush1.msra.mxu0 0.0
      %1583 = vmatprep.subr.mxu0 0.0
      %1584 = vmatpush1.msra.mxu0 0.0
      %1585 = vmatprep.subr.mxu0 0.0
      %1586 = vmatpush1.msra.mxu0 0.0
      %1587 = vmatprep.subr.mxu0 0.0
      %1588 = vmatpush1.msra.mxu0 0.0
      %1589 = vmatprep.subr.mxu0 0.0
      %1590 = vmatpush1.msra.mxu0 0.0
      %1591 = vmatprep.subr.mxu0 0.0
      %1592 = vmatpush1.msra.mxu0 0.0
      %1593 = vmatprep.subr.mxu0 0.0
      %1594 = vmatpush1.msra.mxu0 0.0
      %1595 = vmatprep.subr.mxu0 0.0
      %1596 = vmatpush1.msra.mxu0 0.0
      %1597 = vmatprep.subr.mxu0 0.0
      %1598 = vmatpush1.msra.mxu0 0.0
      %1599 = vmatprep.subr.mxu0 0.0
      %1600 = vmatpush1.msra.mxu0 0.0
      %1601 = vmatprep.subr.mxu0 0.0
      %1602 = vmatpush1.msra.mxu0 0.0
      %1603 = vmatprep.subr.mxu0 0.0
      %1604 = vmatpush1.msra.mxu0 0.0
      %1605 = vmatprep.subr.mxu0 0.0
      %1606 = vmatpush1.msra.mxu0 0.0
      %1607 = vmatprep.subr.mxu0 0.0
      %1608 = vmatpush1.msra.mxu0 0.0
      %1609 = vmatprep.subr.mxu0 0.0
      %1610 = vmatpush1.msra.mxu0 0.0
      %1611 = vmatprep.subr.mxu0 0.0
      %1612 = vmatpush1.msra.mxu0 0.0
      %1613 = vmatprep.subr.mxu0 0.0
      %1614 = vmatpush1.msra.mxu0 0.0
      %1615 = vmatprep.subr.mxu0 0.0
      %1616 = vmatpush1.msra.mxu0 0.0
      %1617 = vmatprep.mubr.f32.mxu0 0.0
      %1618 = vmatmul.mubr.f32.gmra.mrb[0].mxu0 %v587
      %v1619 = vpop.f32.mrb[0].mxu0
      %v1620 = vadd.f32 %v1551, %v1619
      %v1621 = vpop.f32.mrb[0].mxu0
      %1622 = vdwg.mxu0
      %s1623 = scalar_lea.vmem %s4, 64
      %v1624 = vld [vmem:[%s1623] sm:$0xff]
      %v1625 = vld [vmem:[%s1623 + $0x8] sm:$0xff]
      %v1626 = vld [vmem:[%s1623 + $0x10] sm:$0xff]
      %v1627 = vld [vmem:[%s1623 + $0x18] sm:$0xff]
      %s1628 = scalar_lea.vmem %s5, 2
      %v1629 = vld [vmem:[%s1628] sm:$0x1]
      %v1631 = vlaneseq
      %v1632 = vshrl.u32 %v1631, 7
      %v1633 = vsub.s32 0, %v1632
      %v1634 = vrot.slane %v1629, %v1633
      %1636 = vmatprep.subr.mxu0 0.0
      %1637 = vmatpush1.msra.mxu0 %v1624
      %1638 = vmatprep.subr.mxu0 0.0
      %1639 = vmatpush1.msra.mxu0 %v1625
      %1640 = vmatprep.subr.mxu0 0.0
      %1641 = vmatpush1.msra.mxu0 %v1626
      %1642 = vmatprep.subr.mxu0 0.0
      %1643 = vmatpush1.msra.mxu0 %v1627
      %1644 = vmatprep.subr.mxu0 0.0
      %1645 = vmatpush1.msra.mxu0 0.0
      %1646 = vmatprep.subr.mxu0 0.0
      %1647 = vmatpush1.msra.mxu0 0.0
      %1648 = vmatprep.subr.mxu0 0.0
      %1649 = vmatpush1.msra.mxu0 0.0
      %1650 = vmatprep.subr.mxu0 0.0
      %1651 = vmatpush1.msra.mxu0 0.0
      %1652 = vmatprep.subr.mxu0 0.0
      %1653 = vmatpush1.msra.mxu0 0.0
      %1654 = vmatprep.subr.mxu0 0.0
      %1655 = vmatpush1.msra.mxu0 0.0
      %1656 = vmatprep.subr.mxu0 0.0
      %1657 = vmatpush1.msra.mxu0 0.0
      %1658 = vmatprep.subr.mxu0 0.0
      %1659 = vmatpush1.msra.mxu0 0.0
      %1660 = vmatprep.subr.mxu0 0.0
      %1661 = vmatpush1.msra.mxu0 0.0
      %1662 = vmatprep.subr.mxu0 0.0
      %1663 = vmatpush1.msra.mxu0 0.0
      %1664 = vmatprep.subr.mxu0 0.0
      %1665 = vmatpush1.msra.mxu0 0.0
      %1666 = vmatprep.subr.mxu0 0.0
      %1667 = vmatpush1.msra.mxu0 0.0
      %1668 = vmatprep.subr.mxu0 0.0
      %1669 = vmatpush1.msra.mxu0 0.0
      %1670 = vmatprep.subr.mxu0 0.0
      %1671 = vmatpush1.msra.mxu0 0.0
      %1672 = vmatprep.subr.mxu0 0.0
      %1673 = vmatpush1.msra.mxu0 0.0
      %1674 = vmatprep.subr.mxu0 0.0
      %1675 = vmatpush1.msra.mxu0 0.0
      %1676 = vmatprep.subr.mxu0 0.0
      %1677 = vmatpush1.msra.mxu0 0.0
      %1678 = vmatprep.subr.mxu0 0.0
      %1679 = vmatpush1.msra.mxu0 0.0
      %1680 = vmatprep.subr.mxu0 0.0
      %1681 = vmatpush1.msra.mxu0 0.0
      %1682 = vmatprep.subr.mxu0 0.0
      %1683 = vmatpush1.msra.mxu0 0.0
      %1684 = vmatprep.subr.mxu0 0.0
      %1685 = vmatpush1.msra.mxu0 0.0
      %1686 = vmatprep.subr.mxu0 0.0
      %1687 = vmatpush1.msra.mxu0 0.0
      %1688 = vmatprep.subr.mxu0 0.0
      %1689 = vmatpush1.msra.mxu0 0.0
      %1690 = vmatprep.subr.mxu0 0.0
      %1691 = vmatpush1.msra.mxu0 0.0
      %1692 = vmatprep.subr.mxu0 0.0
      %1693 = vmatpush1.msra.mxu0 0.0
      %1694 = vmatprep.subr.mxu0 0.0
      %1695 = vmatpush1.msra.mxu0 0.0
      %1696 = vmatprep.subr.mxu0 0.0
      %1697 = vmatpush1.msra.mxu0 0.0
      %1698 = vmatprep.subr.mxu0 0.0
      %1699 = vmatpush1.msra.mxu0 0.0
      %1700 = vmatprep.mubr.f32.mxu0 0.0
      %1701 = vmatmul.mubr.f32.gmra.mrb[0].mxu0 %v587
      %v1702 = vpop.f32.mrb[0].mxu0
      %v1703 = vadd.f32 %v1634, %v1702
      %v1704 = vpop.f32.mrb[0].mxu0
      %1705 = vdwg.mxu0
      %s1706 = scalar_lea.vmem %s6, 64
      %v1707 = vld [vmem:[%s1706] sm:$0xff]
      %v1708 = vld [vmem:[%s1706 + $0x8] sm:$0xff]
      %v1709 = vld [vmem:[%s1706 + $0x10] sm:$0xff]
      %v1710 = vld [vmem:[%s1706 + $0x18] sm:$0xff]
      %s1711 = scalar_lea.vmem %s7, 2
      %v1712 = vld [vmem:[%s1711] sm:$0x1]
      %v1714 = vlaneseq
      %v1715 = vshrl.u32 %v1714, 7
      %v1716 = vsub.s32 0, %v1715
      %v1717 = vrot.slane %v1712, %v1716
      %1719 = vmatprep.subr.mxu0 0.0
      %1720 = vmatpush1.msra.mxu0 %v1707
      %1721 = vmatprep.subr.mxu0 0.0
      %1722 = vmatpush1.msra.mxu0 %v1708
      %1723 = vmatprep.subr.mxu0 0.0
      %1724 = vmatpush1.msra.mxu0 %v1709
      %1725 = vmatprep.subr.mxu0 0.0
      %1726 = vmatpush1.msra.mxu0 %v1710
      %1727 = vmatprep.subr.mxu0 0.0
      %1728 = vmatpush1.msra.mxu0 0.0
      %1729 = vmatprep.subr.mxu0 0.0
      %1730 = vmatpush1.msra.mxu0 0.0
      %1731 = vmatprep.subr.mxu0 0.0
      %1732 = vmatpush1.msra.mxu0 0.0
      %1733 = vmatprep.subr.mxu0 0.0
      %1734 = vmatpush1.msra.mxu0 0.0
      %1735 = vmatprep.subr.mxu0 0.0
      %1736 = vmatpush1.msra.mxu0 0.0
      %1737 = vmatprep.subr.mxu0 0.0
      %1738 = vmatpush1.msra.mxu0 0.0
      %1739 = vmatprep.subr.mxu0 0.0
      %1740 = vmatpush1.msra.mxu0 0.0
      %1741 = vmatprep.subr.mxu0 0.0
      %1742 = vmatpush1.msra.mxu0 0.0
      %1743 = vmatprep.subr.mxu0 0.0
      %1744 = vmatpush1.msra.mxu0 0.0
      %1745 = vmatprep.subr.mxu0 0.0
      %1746 = vmatpush1.msra.mxu0 0.0
      %1747 = vmatprep.subr.mxu0 0.0
      %1748 = vmatpush1.msra.mxu0 0.0
      %1749 = vmatprep.subr.mxu0 0.0
      %1750 = vmatpush1.msra.mxu0 0.0
      %1751 = vmatprep.subr.mxu0 0.0
      %1752 = vmatpush1.msra.mxu0 0.0
      %1753 = vmatprep.subr.mxu0 0.0
      %1754 = vmatpush1.msra.mxu0 0.0
      %1755 = vmatprep.subr.mxu0 0.0
      %1756 = vmatpush1.msra.mxu0 0.0
      %1757 = vmatprep.subr.mxu0 0.0
      %1758 = vmatpush1.msra.mxu0 0.0
      %1759 = vmatprep.subr.mxu0 0.0
      %1760 = vmatpush1.msra.mxu0 0.0
      %1761 = vmatprep.subr.mxu0 0.0
      %1762 = vmatpush1.msra.mxu0 0.0
      %1763 = vmatprep.subr.mxu0 0.0
      %1764 = vmatpush1.msra.mxu0 0.0
      %1765 = vmatprep.subr.mxu0 0.0
      %1766 = vmatpush1.msra.mxu0 0.0
      %1767 = vmatprep.subr.mxu0 0.0
      %1768 = vmatpush1.msra.mxu0 0.0
      %1769 = vmatprep.subr.mxu0 0.0
      %1770 = vmatpush1.msra.mxu0 0.0
      %1771 = vmatprep.subr.mxu0 0.0
      %1772 = vmatpush1.msra.mxu0 0.0
      %1773 = vmatprep.subr.mxu0 0.0
      %1774 = vmatpush1.msra.mxu0 0.0
      %1775 = vmatprep.subr.mxu0 0.0
      %1776 = vmatpush1.msra.mxu0 0.0
      %1777 = vmatprep.subr.mxu0 0.0
      %1778 = vmatpush1.msra.mxu0 0.0
      %1779 = vmatprep.subr.mxu0 0.0
      %1780 = vmatpush1.msra.mxu0 0.0
      %1781 = vmatprep.subr.mxu0 0.0
      %1782 = vmatpush1.msra.mxu0 0.0
      %1783 = vmatprep.mubr.f32.mxu0 0.0
      %1784 = vmatmul.mubr.f32.gmra.mrb[0].mxu0 %v587
      %v1785 = vpop.f32.mrb[0].mxu0
      %v1786 = vadd.f32 %v1717, %v1785
      %v1787 = vpop.f32.mrb[0].mxu0
      %1788 = vdwg.mxu0
      %v1790 = vsel %vm821, %v1620, 0
      %v1793 = vsel %vm821, %v1703, 0
      %1795 = vmatprep.subr.mxu0 0.0
      %1796 = vmatpush1.xpose.msra.mxu0 %v1793
      %1797 = vmatprep.subr.mxu0 0.0
      %1798 = vmatpush1.xpose.msra.mxu0 0.0
      %1799 = vmatprep.subr.mxu0 0.0
      %1800 = vmatpush1.xpose.msra.mxu0 0.0
      %1801 = vmatprep.subr.mxu0 0.0
      %1802 = vmatpush1.xpose.msra.mxu0 0.0
      %1803 = vmatprep.subr.mxu0 0.0
      %1804 = vmatpush1.xpose.msra.mxu0 0.0
      %1805 = vmatprep.subr.mxu0 0.0
      %1806 = vmatpush1.xpose.msra.mxu0 0.0
      %1807 = vmatprep.subr.mxu0 0.0
      %1808 = vmatpush1.xpose.msra.mxu0 0.0
      %1809 = vmatprep.subr.mxu0 0.0
      %1810 = vmatpush1.xpose.msra.mxu0 0.0
      %1811 = vmatprep.subr.mxu0 0.0
      %1812 = vmatpush1.xpose.msra.mxu0 0.0
      %1813 = vmatprep.subr.mxu0 0.0
      %1814 = vmatpush1.xpose.msra.mxu0 0.0
      %1815 = vmatprep.subr.mxu0 0.0
      %1816 = vmatpush1.xpose.msra.mxu0 0.0
      %1817 = vmatprep.subr.mxu0 0.0
      %1818 = vmatpush1.xpose.msra.mxu0 0.0
      %1819 = vmatprep.subr.mxu0 0.0
      %1820 = vmatpush1.xpose.msra.mxu0 0.0
      %1821 = vmatprep.subr.mxu0 0.0
      %1822 = vmatpush1.xpose.msra.mxu0 0.0
      %1823 = vmatprep.subr.mxu0 0.0
      %1824 = vmatpush1.xpose.msra.mxu0 0.0
      %1825 = vmatprep.subr.mxu0 0.0
      %1826 = vmatpush1.xpose.msra.mxu0 0.0
      %1827 = vmatprep.subr.mxu0 0.0
      %1828 = vmatpush1.xpose.msra.mxu0 0.0
      %1829 = vmatprep.subr.mxu0 0.0
      %1830 = vmatpush1.xpose.msra.mxu0 0.0
      %1831 = vmatprep.subr.mxu0 0.0
      %1832 = vmatpush1.xpose.msra.mxu0 0.0
      %1833 = vmatprep.subr.mxu0 0.0
      %1834 = vmatpush1.xpose.msra.mxu0 0.0
      %1835 = vmatprep.subr.mxu0 0.0
      %1836 = vmatpush1.xpose.msra.mxu0 0.0
      %1837 = vmatprep.subr.mxu0 0.0
      %1838 = vmatpush1.xpose.msra.mxu0 0.0
      %1839 = vmatprep.subr.mxu0 0.0
      %1840 = vmatpush1.xpose.msra.mxu0 0.0
      %1841 = vmatprep.subr.mxu0 0.0
      %1842 = vmatpush1.xpose.msra.mxu0 0.0
      %1843 = vmatprep.subr.mxu0 0.0
      %1844 = vmatpush1.xpose.msra.mxu0 0.0
      %1845 = vmatprep.subr.mxu0 0.0
      %1846 = vmatpush1.xpose.msra.mxu0 0.0
      %1847 = vmatprep.subr.mxu0 0.0
      %1848 = vmatpush1.xpose.msra.mxu0 0.0
      %1849 = vmatprep.subr.mxu0 0.0
      %1850 = vmatpush1.xpose.msra.mxu0 0.0
      %1851 = vmatprep.subr.mxu0 0.0
      %1852 = vmatpush1.xpose.msra.mxu0 0.0
      %1853 = vmatprep.subr.mxu0 0.0
      %1854 = vmatpush1.xpose.msra.mxu0 0.0
      %1855 = vmatprep.subr.mxu0 0.0
      %1856 = vmatpush1.xpose.msra.mxu0 0.0
      %1857 = vmatprep.subr.mxu0 0.0
      %1858 = vmatpush1.xpose.msra.mxu0 0.0
      %1859 = vmatprep.mubr.f32.mxu0 0.0
      %1860 = vmatmul.mubr.f32.gmra.mrb[0].mxu0 %v1790
      %v1861 = vpop.f32.mrb[0].mxu0
      %v1862 = vadd.f32 0.0, %v1861
      %v1863 = vpop.f32.mrb[0].mxu0
      %1864 = vdwg.mxu0
      %v1865 = vsel %vm821, %v1862, -inf
      %1866 = vmax.xlane.f32.xlu0 %v1865
      %v1867 = vpop.xlane.xlu0 %1866
      %v1868 = vsub.f32 %v1862, %v1867
      %v1869 = vmul.f32 %v1868, 1.442695
      %v1870 = vpow.pop %v1869
      %v1871 = vsel %vm821, %v1870, 0.0
      %1872 = vadd.xlane.f32.xlu0 %v1871
      %v1873 = vpop.xlane.xlu0 %1872
      %v1874 = vrcp.pop %v1873
      %v1875 = vmul.f32 %v1870, %v1874
      %v1877 = vsel %vm821, %v1875, 0
      %1879 = vmatprep.subr.mxu0 0.0
      %1880 = vmatpush1.msra.mxu0 %v1786
      %1881 = vmatprep.subr.mxu0 0.0
      %1882 = vmatpush1.msra.mxu0 0.0
      %1883 = vmatprep.subr.mxu0 0.0
      %1884 = vmatpush1.msra.mxu0 0.0
      %1885 = vmatprep.subr.mxu0 0.0
      %1886 = vmatpush1.msra.mxu0 0.0
      %1887 = vmatprep.subr.mxu0 0.0
      %1888 = vmatpush1.msra.mxu0 0.0
      %1889 = vmatprep.subr.mxu0 0.0
      %1890 = vmatpush1.msra.mxu0 0.0
      %1891 = vmatprep.subr.mxu0 0.0
      %1892 = vmatpush1.msra.mxu0 0.0
      %1893 = vmatprep.subr.mxu0 0.0
      %1894 = vmatpush1.msra.mxu0 0.0
      %1895 = vmatprep.subr.mxu0 0.0
      %1896 = vmatpush1.msra.mxu0 0.0
      %1897 = vmatprep.subr.mxu0 0.0
      %1898 = vmatpush1.msra.mxu0 0.0
      %1899 = vmatprep.subr.mxu0 0.0
      %1900 = vmatpush1.msra.mxu0 0.0
      %1901 = vmatprep.subr.mxu0 0.0
      %1902 = vmatpush1.msra.mxu0 0.0
      %1903 = vmatprep.subr.mxu0 0.0
      %1904 = vmatpush1.msra.mxu0 0.0
      %1905 = vmatprep.subr.mxu0 0.0
      %1906 = vmatpush1.msra.mxu0 0.0
      %1907 = vmatprep.subr.mxu0 0.0
      %1908 = vmatpush1.msra.mxu0 0.0
      %1909 = vmatprep.subr.mxu0 0.0
      %1910 = vmatpush1.msra.mxu0 0.0
      %1911 = vmatprep.subr.mxu0 0.0
      %1912 = vmatpush1.msra.mxu0 0.0
      %1913 = vmatprep.subr.mxu0 0.0
      %1914 = vmatpush1.msra.mxu0 0.0
      %1915 = vmatprep.subr.mxu0 0.0
      %1916 = vmatpush1.msra.mxu0 0.0
      %1917 = vmatprep.subr.mxu0 0.0
      %1918 = vmatpush1.msra.mxu0 0.0
      %1919 = vmatprep.subr.mxu0 0.0
      %1920 = vmatpush1.msra.mxu0 0.0
      %1921 = vmatprep.subr.mxu0 0.0
      %1922 = vmatpush1.msra.mxu0 0.0
      %1923 = vmatprep.subr.mxu0 0.0
      %1924 = vmatpush1.msra.mxu0 0.0
      %1925 = vmatprep.subr.mxu0 0.0
      %1926 = vmatpush1.msra.mxu0 0.0
      %1927 = vmatprep.subr.mxu0 0.0
      %1928 = vmatpush1.msra.mxu0 0.0
      %1929 = vmatprep.subr.mxu0 0.0
      %1930 = vmatpush1.msra.mxu0 0.0
      %1931 = vmatprep.subr.mxu0 0.0
      %1932 = vmatpush1.msra.mxu0 0.0
      %1933 = vmatprep.subr.mxu0 0.0
      %1934 = vmatpush1.msra.mxu0 0.0
      %1935 = vmatprep.subr.mxu0 0.0
      %1936 = vmatpush1.msra.mxu0 0.0
      %1937 = vmatprep.subr.mxu0 0.0
      %1938 = vmatpush1.msra.mxu0 0.0
      %1939 = vmatprep.subr.mxu0 0.0
      %1940 = vmatpush1.msra.mxu0 0.0
      %1941 = vmatprep.subr.mxu0 0.0
      %1942 = vmatpush1.msra.mxu0 0.0
      %1943 = vmatprep.mubr.f32.mxu0 0.0
      %1944 = vmatmul.mubr.f32.gmra.mrb[0].mxu0 %v1877
      %v1945 = vpop.f32.mrb[0].mxu0
      %v1946 = vadd.f32 0.0, %v1945
      %v1947 = vpop.f32.mrb[0].mxu0
      %1948 = vdwg.mxu0
      %s1949 = scalar_lea.vmem %s8, 16
      %v1950 = vld [vmem:[%s1949] sm:$0xff]
      %v1952 = vsel %vm821, %v1946, 0
      %1954 = vmatprep.subr.mxu0 0.0
      %1955 = vmatpush1.msra.mxu0 %v1950
      %1956 = vmatprep.subr.mxu0 0.0
      %1957 = vmatpush1.msra.mxu0 0.0
      %1958 = vmatprep.subr.mxu0 0.0
      %1959 = vmatpush1.msra.mxu0 0.0
      %1960 = vmatprep.subr.mxu0 0.0
      %1961 = vmatpush1.msra.mxu0 0.0
      %1962 = vmatprep.subr.mxu0 0.0
      %1963 = vmatpush1.msra.mxu0 0.0
      %1964 = vmatprep.subr.mxu0 0.0
      %1965 = vmatpush1.msra.mxu0 0.0
      %1966 = vmatprep.subr.mxu0 0.0
      %1967 = vmatpush1.msra.mxu0 0.0
      %1968 = vmatprep.subr.mxu0 0.0
      %1969 = vmatpush1.msra.mxu0 0.0
      %1970 = vmatprep.subr.mxu0 0.0
      %1971 = vmatpush1.msra.mxu0 0.0
      %1972 = vmatprep.subr.mxu0 0.0
      %1973 = vmatpush1.msra.mxu0 0.0
      %1974 = vmatprep.subr.mxu0 0.0
      %1975 = vmatpush1.msra.mxu0 0.0
      %1976 = vmatprep.subr.mxu0 0.0
      %1977 = vmatpush1.msra.mxu0 0.0
      %1978 = vmatprep.subr.mxu0 0.0
      %1979 = vmatpush1.msra.mxu0 0.0
      %1980 = vmatprep.subr.mxu0 0.0
      %1981 = vmatpush1.msra.mxu0 0.0
      %1982 = vmatprep.subr.mxu0 0.0
      %1983 = vmatpush1.msra.mxu0 0.0
      %1984 = vmatprep.subr.mxu0 0.0
      %1985 = vmatpush1.msra.mxu0 0.0
      %1986 = vmatprep.subr.mxu0 0.0
      %1987 = vmatpush1.msra.mxu0 0.0
      %1988 = vmatprep.subr.mxu0 0.0
      %1989 = vmatpush1.msra.mxu0 0.0
      %1990 = vmatprep.subr.mxu0 0.0
      %1991 = vmatpush1.msra.mxu0 0.0
      %1992 = vmatprep.subr.mxu0 0.0
      %1993 = vmatpush1.msra.mxu0 0.0
      %1994 = vmatprep.subr.mxu0 0.0
      %1995 = vmatpush1.msra.mxu0 0.0
      %1996 = vmatprep.subr.mxu0 0.0
      %1997 = vmatpush1.msra.mxu0 0.0
      %1998 = vmatprep.subr.mxu0 0.0
      %1999 = vmatpush1.msra.mxu0 0.0
      %2000 = vmatprep.subr.mxu0 0.0
      %2001 = vmatpush1.msra.mxu0 0.0
      %2002 = vmatprep.subr.mxu0 0.0
      %2003 = vmatpush1.msra.mxu0 0.0
      %2004 = vmatprep.subr.mxu0 0.0
      %2005 = vmatpush1.msra.mxu0 0.0
      %2006 = vmatprep.subr.mxu0 0.0
      %2007 = vmatpush1.msra.mxu0 0.0
      %2008 = vmatprep.subr.mxu0 0.0
      %2009 = vmatpush1.msra.mxu0 0.0
      %2010 = vmatprep.subr.mxu0 0.0
      %2011 = vmatpush1.msra.mxu0 0.0
      %2012 = vmatprep.subr.mxu0 0.0
      %2013 = vmatpush1.msra.mxu0 0.0
      %2014 = vmatprep.subr.mxu0 0.0
      %2015 = vmatpush1.msra.mxu0 0.0
      %2016 = vmatprep.subr.mxu0 0.0
      %2017 = vmatpush1.msra.mxu0 0.0
      %2018 = vmatprep.mubr.f32.mxu0 0.0
      %2019 = vmatmul.mubr.f32.gmra.mrb[0].mxu0 %v1952
      %v2020 = vpop.f32.mrb[0].mxu0
      %v2021 = vadd.f32 0.0, %v2020
      %v2022 = vpop.f32.mrb[0].mxu0
      %2023 = vdwg.mxu0
      %v2024 = vadd.f32 %v1537, %v2021
      %s2025 = scalar_lea.vmem %s2, 96
      %v2026 = vld [vmem:[%s2025] sm:$0xff]
      %v2027 = vld [vmem:[%s2025 + $0x8] sm:$0xff]
      %v2028 = vld [vmem:[%s2025 + $0x10] sm:$0xff]
      %v2029 = vld [vmem:[%s2025 + $0x18] sm:$0xff]
      %s2030 = scalar_lea.vmem %s3, 3
      %v2031 = vld [vmem:[%s2030] sm:$0x1]
      %v2033 = vlaneseq
      %v2034 = vshrl.u32 %v2033, 7
      %v2035 = vsub.s32 0, %v2034
      %v2036 = vrot.slane %v2031, %v2035
      %2038 = vmatprep.subr.mxu0 0.0
      %2039 = vmatpush1.msra.mxu0 %v2026
      %2040 = vmatprep.subr.mxu0 0.0
      %2041 = vmatpush1.msra.mxu0 %v2027
      %2042 = vmatprep.subr.mxu0 0.0
      %2043 = vmatpush1.msra.mxu0 %v2028
      %2044 = vmatprep.subr.mxu0 0.0
      %2045 = vmatpush1.msra.mxu0 %v2029
      %2046 = vmatprep.subr.mxu0 0.0
      %2047 = vmatpush1.msra.mxu0 0.0
      %2048 = vmatprep.subr.mxu0 0.0
      %2049 = vmatpush1.msra.mxu0 0.0
      %2050 = vmatprep.subr.mxu0 0.0
      %2051 = vmatpush1.msra.mxu0 0.0
      %2052 = vmatprep.subr.mxu0 0.0
      %2053 = vmatpush1.msra.mxu0 0.0
      %2054 = vmatprep.subr.mxu0 0.0
      %2055 = vmatpush1.msra.mxu0 0.0
      %2056 = vmatprep.subr.mxu0 0.0
      %2057 = vmatpush1.msra.mxu0 0.0
      %2058 = vmatprep.subr.mxu0 0.0
      %2059 = vmatpush1.msra.mxu0 0.0
      %2060 = vmatprep.subr.mxu0 0.0
      %2061 = vmatpush1.msra.mxu0 0.0
      %2062 = vmatprep.subr.mxu0 0.0
      %2063 = vmatpush1.msra.mxu0 0.0
      %2064 = vmatprep.subr.mxu0 0.0
      %2065 = vmatpush1.msra.mxu0 0.0
      %2066 = vmatprep.subr.mxu0 0.0
      %2067 = vmatpush1.msra.mxu0 0.0
      %2068 = vmatprep.subr.mxu0 0.0
      %2069 = vmatpush1.msra.mxu0 0.0
      %2070 = vmatprep.subr.mxu0 0.0
      %2071 = vmatpush1.msra.mxu0 0.0
      %2072 = vmatprep.subr.mxu0 0.0
      %2073 = vmatpush1.msra.mxu0 0.0
      %2074 = vmatprep.subr.mxu0 0.0
      %2075 = vmatpush1.msra.mxu0 0.0
      %2076 = vmatprep.subr.mxu0 0.0
      %2077 = vmatpush1.msra.mxu0 0.0
      %2078 = vmatprep.subr.mxu0 0.0
      %2079 = vmatpush1.msra.mxu0 0.0
      %2080 = vmatprep.subr.mxu0 0.0
      %2081 = vmatpush1.msra.mxu0 0.0
      %2082 = vmatprep.subr.mxu0 0.0
      %2083 = vmatpush1.msra.mxu0 0.0
      %2084 = vmatprep.subr.mxu0 0.0
      %2085 = vmatpush1.msra.mxu0 0.0
      %2086 = vmatprep.subr.mxu0 0.0
      %2087 = vmatpush1.msra.mxu0 0.0
      %2088 = vmatprep.subr.mxu0 0.0
      %2089 = vmatpush1.msra.mxu0 0.0
      %2090 = vmatprep.subr.mxu0 0.0
      %2091 = vmatpush1.msra.mxu0 0.0
      %2092 = vmatprep.subr.mxu0 0.0
      %2093 = vmatpush1.msra.mxu0 0.0
      %2094 = vmatprep.subr.mxu0 0.0
      %2095 = vmatpush1.msra.mxu0 0.0
      %2096 = vmatprep.subr.mxu0 0.0
      %2097 = vmatpush1.msra.mxu0 0.0
      %2098 = vmatprep.subr.mxu0 0.0
      %2099 = vmatpush1.msra.mxu0 0.0
      %2100 = vmatprep.subr.mxu0 0.0
      %2101 = vmatpush1.msra.mxu0 0.0
      %2102 = vmatprep.mubr.f32.mxu0 0.0
      %2103 = vmatmul.mubr.f32.gmra.mrb[0].mxu0 %v587
      %v2104 = vpop.f32.mrb[0].mxu0
      %v2105 = vadd.f32 %v2036, %v2104
      %v2106 = vpop.f32.mrb[0].mxu0
      %2107 = vdwg.mxu0
      %s2108 = scalar_lea.vmem %s4, 96
      %v2109 = vld [vmem:[%s2108] sm:$0xff]
      %v2110 = vld [vmem:[%s2108 + $0x8] sm:$0xff]
      %v2111 = vld [vmem:[%s2108 + $0x10] sm:$0xff]
      %v2112 = vld [vmem:[%s2108 + $0x18] sm:$0xff]
      %s2113 = scalar_lea.vmem %s5, 3
      %v2114 = vld [vmem:[%s2113] sm:$0x1]
      %v2116 = vlaneseq
      %v2117 = vshrl.u32 %v2116, 7
      %v2118 = vsub.s32 0, %v2117
      %v2119 = vrot.slane %v2114, %v2118
      %2121 = vmatprep.subr.mxu0 0.0
      %2122 = vmatpush1.msra.mxu0 %v2109
      %2123 = vmatprep.subr.mxu0 0.0
      %2124 = vmatpush1.msra.mxu0 %v2110
      %2125 = vmatprep.subr.mxu0 0.0
      %2126 = vmatpush1.msra.mxu0 %v2111
      %2127 = vmatprep.subr.mxu0 0.0
      %2128 = vmatpush1.msra.mxu0 %v2112
      %2129 = vmatprep.subr.mxu0 0.0
      %2130 = vmatpush1.msra.mxu0 0.0
      %2131 = vmatprep.subr.mxu0 0.0
      %2132 = vmatpush1.msra.mxu0 0.0
      %2133 = vmatprep.subr.mxu0 0.0
      %2134 = vmatpush1.msra.mxu0 0.0
      %2135 = vmatprep.subr.mxu0 0.0
      %2136 = vmatpush1.msra.mxu0 0.0
      %2137 = vmatprep.subr.mxu0 0.0
      %2138 = vmatpush1.msra.mxu0 0.0
      %2139 = vmatprep.subr.mxu0 0.0
      %2140 = vmatpush1.msra.mxu0 0.0
      %2141 = vmatprep.subr.mxu0 0.0
      %2142 = vmatpush1.msra.mxu0 0.0
      %2143 = vmatprep.subr.mxu0 0.0
      %2144 = vmatpush1.msra.mxu0 0.0
      %2145 = vmatprep.subr.mxu0 0.0
      %2146 = vmatpush1.msra.mxu0 0.0
      %2147 = vmatprep.subr.mxu0 0.0
      %2148 = vmatpush1.msra.mxu0 0.0
      %2149 = vmatprep.subr.mxu0 0.0
      %2150 = vmatpush1.msra.mxu0 0.0
      %2151 = vmatprep.subr.mxu0 0.0
      %2152 = vmatpush1.msra.mxu0 0.0
      %2153 = vmatprep.subr.mxu0 0.0
      %2154 = vmatpush1.msra.mxu0 0.0
      %2155 = vmatprep.subr.mxu0 0.0
      %2156 = vmatpush1.msra.mxu0 0.0
      %2157 = vmatprep.subr.mxu0 0.0
      %2158 = vmatpush1.msra.mxu0 0.0
      %2159 = vmatprep.subr.mxu0 0.0
      %2160 = vmatpush1.msra.mxu0 0.0
      %2161 = vmatprep.subr.mxu0 0.0
      %2162 = vmatpush1.msra.mxu0 0.0
      %2163 = vmatprep.subr.mxu0 0.0
      %2164 = vmatpush1.msra.mxu0 0.0
      %2165 = vmatprep.subr.mxu0 0.0
      %2166 = vmatpush1.msra.mxu0 0.0
      %2167 = vmatprep.subr.mxu0 0.0
      %2168 = vmatpush1.msra.mxu0 0.0
      %2169 = vmatprep.subr.mxu0 0.0
      %2170 = vmatpush1.msra.mxu0 0.0
      %2171 = vmatprep.subr.mxu0 0.0
      %2172 = vmatpush1.msra.mxu0 0.0
      %2173 = vmatprep.subr.mxu0 0.0
      %2174 = vmatpush1.msra.mxu0 0.0
      %2175 = vmatprep.subr.mxu0 0.0
      %2176 = vmatpush1.msra.mxu0 0.0
      %2177 = vmatprep.subr.mxu0 0.0
      %2178 = vmatpush1.msra.mxu0 0.0
      %2179 = vmatprep.subr.mxu0 0.0
      %2180 = vmatpush1.msra.mxu0 0.0
      %2181 = vmatprep.subr.mxu0 0.0
      %2182 = vmatpush1.msra.mxu0 0.0
      %2183 = vmatprep.subr.mxu0 0.0
      %2184 = vmatpush1.msra.mxu0 0.0
      %2185 = vmatprep.mubr.f32.mxu0 0.0
      %2186 = vmatmul.mubr.f32.gmra.mrb[0].mxu0 %v587
      %v2187 = vpop.f32.mrb[0].mxu0
      %v2188 = vadd.f32 %v2119, %v2187
      %v2189 = vpop.f32.mrb[0].mxu0
      %2190 = vdwg.mxu0
      %s2191 = scalar_lea.vmem %s6, 96
      %v2192 = vld [vmem:[%s2191] sm:$0xff]
      %v2193 = vld [vmem:[%s2191 + $0x8] sm:$0xff]
      %v2194 = vld [vmem:[%s2191 + $0x10] sm:$0xff]
      %v2195 = vld [vmem:[%s2191 + $0x18] sm:$0xff]
      %s2196 = scalar_lea.vmem %s7, 3
      %v2197 = vld [vmem:[%s2196] sm:$0x1]
      %v2199 = vlaneseq
      %v2200 = vshrl.u32 %v2199, 7
      %v2201 = vsub.s32 0, %v2200
      %v2202 = vrot.slane %v2197, %v2201
      %2204 = vmatprep.subr.mxu0 0.0
      %2205 = vmatpush1.msra.mxu0 %v2192
      %2206 = vmatprep.subr.mxu0 0.0
      %2207 = vmatpush1.msra.mxu0 %v2193
      %2208 = vmatprep.subr.mxu0 0.0
      %2209 = vmatpush1.msra.mxu0 %v2194
      %2210 = vmatprep.subr.mxu0 0.0
      %2211 = vmatpush1.msra.mxu0 %v2195
      %2212 = vmatprep.subr.mxu0 0.0
      %2213 = vmatpush1.msra.mxu0 0.0
      %2214 = vmatprep.subr.mxu0 0.0
      %2215 = vmatpush1.msra.mxu0 0.0
      %2216 = vmatprep.subr.mxu0 0.0
      %2217 = vmatpush1.msra.mxu0 0.0
      %2218 = vmatprep.subr.mxu0 0.0
      %2219 = vmatpush1.msra.mxu0 0.0
      %2220 = vmatprep.subr.mxu0 0.0
      %2221 = vmatpush1.msra.mxu0 0.0
      %2222 = vmatprep.subr.mxu0 0.0
      %2223 = vmatpush1.msra.mxu0 0.0
      %2224 = vmatprep.subr.mxu0 0.0
      %2225 = vmatpush1.msra.mxu0 0.0
      %2226 = vmatprep.subr.mxu0 0.0
      %2227 = vmatpush1.msra.mxu0 0.0
      %2228 = vmatprep.subr.mxu0 0.0
      %2229 = vmatpush1.msra.mxu0 0.0
      %2230 = vmatprep.subr.mxu0 0.0
      %2231 = vmatpush1.msra.mxu0 0.0
      %2232 = vmatprep.subr.mxu0 0.0
      %2233 = vmatpush1.msra.mxu0 0.0
      %2234 = vmatprep.subr.mxu0 0.0
      %2235 = vmatpush1.msra.mxu0 0.0
      %2236 = vmatprep.subr.mxu0 0.0
      %2237 = vmatpush1.msra.mxu0 0.0
      %2238 = vmatprep.subr.mxu0 0.0
      %2239 = vmatpush1.msra.mxu0 0.0
      %2240 = vmatprep.subr.mxu0 0.0
      %2241 = vmatpush1.msra.mxu0 0.0
      %2242 = vmatprep.subr.mxu0 0.0
      %2243 = vmatpush1.msra.mxu0 0.0
      %2244 = vmatprep.subr.mxu0 0.0
      %2245 = vmatpush1.msra.mxu0 0.0
      %2246 = vmatprep.subr.mxu0 0.0
      %2247 = vmatpush1.msra.mxu0 0.0
      %2248 = vmatprep.subr.mxu0 0.0
      %2249 = vmatpush1.msra.mxu0 0.0
      %2250 = vmatprep.subr.mxu0 0.0
      %2251 = vmatpush1.msra.mxu0 0.0
      %2252 = vmatprep.subr.mxu0 0.0
      %2253 = vmatpush1.msra.mxu0 0.0
      %2254 = vmatprep.subr.mxu0 0.0
      %2255 = vmatpush1.msra.mxu0 0.0
      %2256 = vmatprep.subr.mxu0 0.0
      %2257 = vmatpush1.msra.mxu0 0.0
      %2258 = vmatprep.subr.mxu0 0.0
      %2259 = vmatpush1.msra.mxu0 0.0
      %2260 = vmatprep.subr.mxu0 0.0
      %2261 = vmatpush1.msra.mxu0 0.0
      %2262 = vmatprep.subr.mxu0 0.0
      %2263 = vmatpush1.msra.mxu0 0.0
      %2264 = vmatprep.subr.mxu0 0.0
      %2265 = vmatpush1.msra.mxu0 0.0
      %2266 = vmatprep.subr.mxu0 0.0
      %2267 = vmatpush1.msra.mxu0 0.0
      %2268 = vmatprep.mubr.f32.mxu0 0.0
      %2269 = vmatmul.mubr.f32.gmra.mrb[0].mxu0 %v587
      %v2270 = vpop.f32.mrb[0].mxu0
      %v2271 = vadd.f32 %v2202, %v2270
      %v2272 = vpop.f32.mrb[0].mxu0
      %2273 = vdwg.mxu0
      %v2275 = vsel %vm821, %v2105, 0
      %v2278 = vsel %vm821, %v2188, 0
      %2280 = vmatprep.subr.mxu0 0.0
      %2281 = vmatpush1.xpose.msra.mxu0 %v2278
      %2282 = vmatprep.subr.mxu0 0.0
      %2283 = vmatpush1.xpose.msra.mxu0 0.0
      %2284 = vmatprep.subr.mxu0 0.0
      %2285 = vmatpush1.xpose.msra.mxu0 0.0
      %2286 = vmatprep.subr.mxu0 0.0
      %2287 = vmatpush1.xpose.msra.mxu0 0.0
      %2288 = vmatprep.subr.mxu0 0.0
      %2289 = vmatpush1.xpose.msra.mxu0 0.0
      %2290 = vmatprep.subr.mxu0 0.0
      %2291 = vmatpush1.xpose.msra.mxu0 0.0
      %2292 = vmatprep.subr.mxu0 0.0
      %2293 = vmatpush1.xpose.msra.mxu0 0.0
      %2294 = vmatprep.subr.mxu0 0.0
      %2295 = vmatpush1.xpose.msra.mxu0 0.0
      %2296 = vmatprep.subr.mxu0 0.0
      %2297 = vmatpush1.xpose.msra.mxu0 0.0
      %2298 = vmatprep.subr.mxu0 0.0
      %2299 = vmatpush1.xpose.msra.mxu0 0.0
      %2300 = vmatprep.subr.mxu0 0.0
      %2301 = vmatpush1.xpose.msra.mxu0 0.0
      %2302 = vmatprep.subr.mxu0 0.0
      %2303 = vmatpush1.xpose.msra.mxu0 0.0
      %2304 = vmatprep.subr.mxu0 0.0
      %2305 = vmatpush1.xpose.msra.mxu0 0.0
      %2306 = vmatprep.subr.mxu0 0.0
      %2307 = vmatpush1.xpose.msra.mxu0 0.0
      %2308 = vmatprep.subr.mxu0 0.0
      %2309 = vmatpush1.xpose.msra.mxu0 0.0
      %2310 = vmatprep.subr.mxu0 0.0
      %2311 = vmatpush1.xpose.msra.mxu0 0.0
      %2312 = vmatprep.subr.mxu0 0.0
      %2313 = vmatpush1.xpose.msra.mxu0 0.0
      %2314 = vmatprep.subr.mxu0 0.0
      %2315 = vmatpush1.xpose.msra.mxu0 0.0
      %2316 = vmatprep.subr.mxu0 0.0
      %2317 = vmatpush1.xpose.msra.mxu0 0.0
      %2318 = vmatprep.subr.mxu0 0.0
      %2319 = vmatpush1.xpose.msra.mxu0 0.0
      %2320 = vmatprep.subr.mxu0 0.0
      %2321 = vmatpush1.xpose.msra.mxu0 0.0
      %2322 = vmatprep.subr.mxu0 0.0
      %2323 = vmatpush1.xpose.msra.mxu0 0.0
      %2324 = vmatprep.subr.mxu0 0.0
      %2325 = vmatpush1.xpose.msra.mxu0 0.0
      %2326 = vmatprep.subr.mxu0 0.0
      %2327 = vmatpush1.xpose.msra.mxu0 0.0
      %2328 = vmatprep.subr.mxu0 0.0
      %2329 = vmatpush1.xpose.msra.mxu0 0.0
      %2330 = vmatprep.subr.mxu0 0.0
      %2331 = vmatpush1.xpose.msra.mxu0 0.0
      %2332 = vmatprep.subr.mxu0 0.0
      %2333 = vmatpush1.xpose.msra.mxu0 0.0
      %2334 = vmatprep.subr.mxu0 0.0
      %2335 = vmatpush1.xpose.msra.mxu0 0.0
      %2336 = vmatprep.subr.mxu0 0.0
      %2337 = vmatpush1.xpose.msra.mxu0 0.0
      %2338 = vmatprep.subr.mxu0 0.0
      %2339 = vmatpush1.xpose.msra.mxu0 0.0
      %2340 = vmatprep.subr.mxu0 0.0
      %2341 = vmatpush1.xpose.msra.mxu0 0.0
      %2342 = vmatprep.subr.mxu0 0.0
      %2343 = vmatpush1.xpose.msra.mxu0 0.0
      %2344 = vmatprep.mubr.f32.mxu0 0.0
      %2345 = vmatmul.mubr.f32.gmra.mrb[0].mxu0 %v2275
      %v2346 = vpop.f32.mrb[0].mxu0
      %v2347 = vadd.f32 0.0, %v2346
      %v2348 = vpop.f32.mrb[0].mxu0
      %2349 = vdwg.mxu0
      %v2350 = vsel %vm821, %v2347, -inf
      %2351 = vmax.xlane.f32.xlu0 %v2350
      %v2352 = vpop.xlane.xlu0 %2351
      %v2353 = vsub.f32 %v2347, %v2352
      %v2354 = vmul.f32 %v2353, 1.442695
      %v2355 = vpow.pop %v2354
      %v2356 = vsel %vm821, %v2355, 0.0
      %2357 = vadd.xlane.f32.xlu0 %v2356
      %v2358 = vpop.xlane.xlu0 %2357
      %v2359 = vrcp.pop %v2358
      %v2360 = vmul.f32 %v2355, %v2359
      %v2362 = vsel %vm821, %v2360, 0
      %2364 = vmatprep.subr.mxu0 0.0
      %2365 = vmatpush1.msra.mxu0 %v2271
      %2366 = vmatprep.subr.mxu0 0.0
      %2367 = vmatpush1.msra.mxu0 0.0
      %2368 = vmatprep.subr.mxu0 0.0
      %2369 = vmatpush1.msra.mxu0 0.0
      %2370 = vmatprep.subr.mxu0 0.0
      %2371 = vmatpush1.msra.mxu0 0.0
      %2372 = vmatprep.subr.mxu0 0.0
      %2373 = vmatpush1.msra.mxu0 0.0
      %2374 = vmatprep.subr.mxu0 0.0
      %2375 = vmatpush1.msra.mxu0 0.0
      %2376 = vmatprep.subr.mxu0 0.0
      %2377 = vmatpush1.msra.mxu0 0.0
      %2378 = vmatprep.subr.mxu0 0.0
      %2379 = vmatpush1.msra.mxu0 0.0
      %2380 = vmatprep.subr.mxu0 0.0
      %2381 = vmatpush1.msra.mxu0 0.0
      %2382 = vmatprep.subr.mxu0 0.0
      %2383 = vmatpush1.msra.mxu0 0.0
      %2384 = vmatprep.subr.mxu0 0.0
      %2385 = vmatpush1.msra.mxu0 0.0
      %2386 = vmatprep.subr.mxu0 0.0
      %2387 = vmatpush1.msra.mxu0 0.0
      %2388 = vmatprep.subr.mxu0 0.0
      %2389 = vmatpush1.msra.mxu0 0.0
      %2390 = vmatprep.subr.mxu0 0.0
      %2391 = vmatpush1.msra.mxu0 0.0
      %2392 = vmatprep.subr.mxu0 0.0
      %2393 = vmatpush1.msra.mxu0 0.0
      %2394 = vmatprep.subr.mxu0 0.0
      %2395 = vmatpush1.msra.mxu0 0.0
      %2396 = vmatprep.subr.mxu0 0.0
      %2397 = vmatpush1.msra.mxu0 0.0
      %2398 = vmatprep.subr.mxu0 0.0
      %2399 = vmatpush1.msra.mxu0 0.0
      %2400 = vmatprep.subr.mxu0 0.0
      %2401 = vmatpush1.msra.mxu0 0.0
      %2402 = vmatprep.subr.mxu0 0.0
      %2403 = vmatpush1.msra.mxu0 0.0
      %2404 = vmatprep.subr.mxu0 0.0
      %2405 = vmatpush1.msra.mxu0 0.0
      %2406 = vmatprep.subr.mxu0 0.0
      %2407 = vmatpush1.msra.mxu0 0.0
      %2408 = vmatprep.subr.mxu0 0.0
      %2409 = vmatpush1.msra.mxu0 0.0
      %2410 = vmatprep.subr.mxu0 0.0
      %2411 = vmatpush1.msra.mxu0 0.0
      %2412 = vmatprep.subr.mxu0 0.0
      %2413 = vmatpush1.msra.mxu0 0.0
      %2414 = vmatprep.subr.mxu0 0.0
      %2415 = vmatpush1.msra.mxu0 0.0
      %2416 = vmatprep.subr.mxu0 0.0
      %2417 = vmatpush1.msra.mxu0 0.0
      %2418 = vmatprep.subr.mxu0 0.0
      %2419 = vmatpush1.msra.mxu0 0.0
      %2420 = vmatprep.subr.mxu0 0.0
      %2421 = vmatpush1.msra.mxu0 0.0
      %2422 = vmatprep.subr.mxu0 0.0
      %2423 = vmatpush1.msra.mxu0 0.0
      %2424 = vmatprep.subr.mxu0 0.0
      %2425 = vmatpush1.msra.mxu0 0.0
      %2426 = vmatprep.subr.mxu0 0.0
      %2427 = vmatpush1.msra.mxu0 0.0
      %2428 = vmatprep.mubr.f32.mxu0 0.0
      %2429 = vmatmul.mubr.f32.gmra.mrb[0].mxu0 %v2362
      %v2430 = vpop.f32.mrb[0].mxu0
      %v2431 = vadd.f32 0.0, %v2430
      %v2432 = vpop.f32.mrb[0].mxu0
      %2433 = vdwg.mxu0
      %s2434 = scalar_lea.vmem %s8, 24
      %v2435 = vld [vmem:[%s2434] sm:$0xff]
      %v2437 = vsel %vm821, %v2431, 0
      %2439 = vmatprep.subr.mxu0 0.0
      %2440 = vmatpush1.msra.mxu0 %v2435
      %2441 = vmatprep.subr.mxu0 0.0
      %2442 = vmatpush1.msra.mxu0 0.0
      %2443 = vmatprep.subr.mxu0 0.0
      %2444 = vmatpush1.msra.mxu0 0.0
      %2445 = vmatprep.subr.mxu0 0.0
      %2446 = vmatpush1.msra.mxu0 0.0
      %2447 = vmatprep.subr.mxu0 0.0
      %2448 = vmatpush1.msra.mxu0 0.0
      %2449 = vmatprep.subr.mxu0 0.0
      %2450 = vmatpush1.msra.mxu0 0.0
      %2451 = vmatprep.subr.mxu0 0.0
      %2452 = vmatpush1.msra.mxu0 0.0
      %2453 = vmatprep.subr.mxu0 0.0
      %2454 = vmatpush1.msra.mxu0 0.0
      %2455 = vmatprep.subr.mxu0 0.0
      %2456 = vmatpush1.msra.mxu0 0.0
      %2457 = vmatprep.subr.mxu0 0.0
      %2458 = vmatpush1.msra.mxu0 0.0
      %2459 = vmatprep.subr.mxu0 0.0
      %2460 = vmatpush1.msra.mxu0 0.0
      %2461 = vmatprep.subr.mxu0 0.0
      %2462 = vmatpush1.msra.mxu0 0.0
      %2463 = vmatprep.subr.mxu0 0.0
      %2464 = vmatpush1.msra.mxu0 0.0
      %2465 = vmatprep.subr.mxu0 0.0
      %2466 = vmatpush1.msra.mxu0 0.0
      %2467 = vmatprep.subr.mxu0 0.0
      %2468 = vmatpush1.msra.mxu0 0.0
      %2469 = vmatprep.subr.mxu0 0.0
      %2470 = vmatpush1.msra.mxu0 0.0
      %2471 = vmatprep.subr.mxu0 0.0
      %2472 = vmatpush1.msra.mxu0 0.0
      %2473 = vmatprep.subr.mxu0 0.0
      %2474 = vmatpush1.msra.mxu0 0.0
      %2475 = vmatprep.subr.mxu0 0.0
      %2476 = vmatpush1.msra.mxu0 0.0
      %2477 = vmatprep.subr.mxu0 0.0
      %2478 = vmatpush1.msra.mxu0 0.0
      %2479 = vmatprep.subr.mxu0 0.0
      %2480 = vmatpush1.msra.mxu0 0.0
      %2481 = vmatprep.subr.mxu0 0.0
      %2482 = vmatpush1.msra.mxu0 0.0
      %2483 = vmatprep.subr.mxu0 0.0
      %2484 = vmatpush1.msra.mxu0 0.0
      %2485 = vmatprep.subr.mxu0 0.0
      %2486 = vmatpush1.msra.mxu0 0.0
      %2487 = vmatprep.subr.mxu0 0.0
      %2488 = vmatpush1.msra.mxu0 0.0
      %2489 = vmatprep.subr.mxu0 0.0
      %2490 = vmatpush1.msra.mxu0 0.0
      %2491 = vmatprep.subr.mxu0 0.0
      %2492 = vmatpush1.msra.mxu0 0.0
      %2493 = vmatprep.subr.mxu0 0.0
      %2494 = vmatpush1.msra.mxu0 0.0
      %2495 = vmatprep.subr.mxu0 0.0
      %2496 = vmatpush1.msra.mxu0 0.0
      %2497 = vmatprep.subr.mxu0 0.0
      %2498 = vmatpush1.msra.mxu0 0.0
      %2499 = vmatprep.subr.mxu0 0.0
      %2500 = vmatpush1.msra.mxu0 0.0
      %2501 = vmatprep.subr.mxu0 0.0
      %2502 = vmatpush1.msra.mxu0 0.0
      %2503 = vmatprep.mubr.f32.mxu0 0.0
      %2504 = vmatmul.mubr.f32.gmra.mrb[0].mxu0 %v2437
      %v2505 = vpop.f32.mrb[0].mxu0
      %v2506 = vadd.f32 0.0, %v2505
      %v2507 = vpop.f32.mrb[0].mxu0
      %2508 = vdwg.mxu0
      %v2509 = vadd.f32 %v2024, %v2506
      %v2510 = vld [vmem:[%s9] sm:$0x1]
      %v2512 = vlaneseq
      %v2513 = vshrl.u32 %v2512, 7
      %v2514 = vsub.s32 0, %v2513
      %v2515 = vrot.slane %v2510, %v2514
      %v2517 = vadd.f32 %v2509, %v2515
      %v2518 = vadd.f32 %v573, %v2517
      %v2519 = vld [vmem:[%s10] sm:$0x1]
      %v2520 = vld [vmem:[%s11] sm:$0x1]
      %v2521 = vsel %vm585, %v2518, 0.0
      %2522 = vadd.xlane.f32.xlu0 %v2521
      %v2523 = vpop.xlane.xlu0 %2522
      %v2524 = vrcp.pop 32.0
      %v2525 = vmul.f32 %v2523, %v2524
      %v2526 = vsub.f32 %v2518, %v2525
      %v2527 = vmul.f32 %v2526, %v2526
      %v2528 = vsel %vm585, %v2527, 0.0
      %2529 = vadd.xlane.f32.xlu0 %v2528
      %v2530 = vpop.xlane.xlu0 %2529
      %v2531 = vmul.f32 %v2530, %v2524
      %v2532 = vadd.f32 %v2531, 1e-05
      %v2533 = vrsqrt.pop %v2532
      %v2534 = vmul.f32 %v2526, %v2533
      %v2536 = vlaneseq
      %v2537 = vshrl.u32 %v2536, 7
      %v2538 = vsub.s32 0, %v2537
      %v2539 = vrot.slane %v2519, %v2538
      %v2541 = vmul.f32 %v2534, %v2539
      %v2543 = vlaneseq
      %v2544 = vshrl.u32 %v2543, 7
      %v2545 = vsub.s32 0, %v2544
      %v2546 = vrot.slane %v2520, %v2545
      %v2548 = vadd.f32 %v2541, %v2546
      %v2549 = vld [vmem:[%s12] sm:$0xff]
      %v2550 = vld [vmem:[%s12 + $0x8] sm:$0xff]
      %v2551 = vld [vmem:[%s12 + $0x10] sm:$0xff]
      %v2552 = vld [vmem:[%s12 + $0x18] sm:$0xff]
      %v2553 = vld [vmem:[%s13] sm:$0x1]
      %v2555 = vlaneseq
      %v2556 = vshrl.u32 %v2555, 7
      %v2557 = vsub.s32 0, %v2556
      %v2558 = vrot.slane %v2553, %v2557
      %v2561 = vsel %vm585, %v2548, 0
      %2563 = vmatprep.subr.mxu0 0.0
      %2564 = vmatpush1.msra.mxu0 %v2549
      %2565 = vmatprep.subr.mxu0 0.0
      %2566 = vmatpush1.msra.mxu0 %v2550
      %2567 = vmatprep.subr.mxu0 0.0
      %2568 = vmatpush1.msra.mxu0 %v2551
      %2569 = vmatprep.subr.mxu0 0.0
      %2570 = vmatpush1.msra.mxu0 %v2552
      %2571 = vmatprep.subr.mxu0 0.0
      %2572 = vmatpush1.msra.mxu0 0.0
      %2573 = vmatprep.subr.mxu0 0.0
      %2574 = vmatpush1.msra.mxu0 0.0
      %2575 = vmatprep.subr.mxu0 0.0
      %2576 = vmatpush1.msra.mxu0 0.0
      %2577 = vmatprep.subr.mxu0 0.0
      %2578 = vmatpush1.msra.mxu0 0.0
      %2579 = vmatprep.subr.mxu0 0.0
      %2580 = vmatpush1.msra.mxu0 0.0
      %2581 = vmatprep.subr.mxu0 0.0
      %2582 = vmatpush1.msra.mxu0 0.0
      %2583 = vmatprep.subr.mxu0 0.0
      %2584 = vmatpush1.msra.mxu0 0.0
      %2585 = vmatprep.subr.mxu0 0.0
      %2586 = vmatpush1.msra.mxu0 0.0
      %2587 = vmatprep.subr.mxu0 0.0
      %2588 = vmatpush1.msra.mxu0 0.0
      %2589 = vmatprep.subr.mxu0 0.0
      %2590 = vmatpush1.msra.mxu0 0.0
      %2591 = vmatprep.subr.mxu0 0.0
      %2592 = vmatpush1.msra.mxu0 0.0
      %2593 = vmatprep.subr.mxu0 0.0
      %2594 = vmatpush1.msra.mxu0 0.0
      %2595 = vmatprep.subr.mxu0 0.0
      %2596 = vmatpush1.msra.mxu0 0.0
      %2597 = vmatprep.subr.mxu0 0.0
      %2598 = vmatpush1.msra.mxu0 0.0
      %2599 = vmatprep.subr.mxu0 0.0
      %2600 = vmatpush1.msra.mxu0 0.0
      %2601 = vmatprep.subr.mxu0 0.0
      %2602 = vmatpush1.msra.mxu0 0.0
      %2603 = vmatprep.subr.mxu0 0.0
      %2604 = vmatpush1.msra.mxu0 0.0
      %2605 = vmatprep.subr.mxu0 0.0
      %2606 = vmatpush1.msra.mxu0 0.0
      %2607 = vmatprep.subr.mxu0 0.0
      %2608 = vmatpush1.msra.mxu0 0.0
      %2609 = vmatprep.subr.mxu0 0.0
      %2610 = vmatpush1.msra.mxu0 0.0
      %2611 = vmatprep.subr.mxu0 0.0
      %2612 = vmatpush1.msra.mxu0 0.0
      %2613 = vmatprep.subr.mxu0 0.0
      %2614 = vmatpush1.msra.mxu0 0.0
      %2615 = vmatprep.subr.mxu0 0.0
      %2616 = vmatpush1.msra.mxu0 0.0
      %2617 = vmatprep.subr.mxu0 0.0
      %2618 = vmatpush1.msra.mxu0 0.0
      %2619 = vmatprep.subr.mxu0 0.0
      %2620 = vmatpush1.msra.mxu0 0.0
      %2621 = vmatprep.subr.mxu0 0.0
      %2622 = vmatpush1.msra.mxu0 0.0
      %2623 = vmatprep.subr.mxu0 0.0
      %2624 = vmatpush1.msra.mxu0 0.0
      %2625 = vmatprep.subr.mxu0 0.0
      %2626 = vmatpush1.msra.mxu0 0.0
      %2627 = vmatprep.mubr.f32.mxu0 0.0
      %2628 = vmatmul.mubr.f32.gmra.mrb[0].mxu0 %v2561
      %v2629 = vpop.f32.mrb[0].mxu0
      %v2630 = vadd.f32 %v2558, %v2629
      %v2631 = vpop.f32.mrb[0].mxu0
      %2632 = vdwg.mxu0
      %v2633 = vmax.f32 %v2630, 0.0
      %v2634 = vld [vmem:[%s14] sm:$0xff]
      %v2635 = vld [vmem:[%s14 + $0x8] sm:$0xff]
      %v2636 = vld [vmem:[%s14 + $0x10] sm:$0xff]
      %v2637 = vld [vmem:[%s14 + $0x18] sm:$0xff]
      %v2638 = vld [vmem:[%s14 + $0x20] sm:$0xff]
      %v2639 = vld [vmem:[%s14 + $0x28] sm:$0xff]
      %v2640 = vld [vmem:[%s14 + $0x30] sm:$0xff]
      %v2641 = vld [vmem:[%s14 + $0x38] sm:$0xff]
      %v2642 = vld [vmem:[%s15] sm:$0x1]
      %v2644 = vlaneseq
      %v2645 = vshrl.u32 %v2644, 7
      %v2646 = vsub.s32 0, %v2645
      %v2647 = vrot.slane %v2642, %v2646
      %vm2649 = vcmask 523264
      %v2651 = vsel %vm2649, %v2633, 0
      %2653 = vmatprep.subr.mxu0 0.0
      %2654 = vmatpush1.msra.mxu0 %v2634
      %2655 = vmatprep.subr.mxu0 0.0
      %2656 = vmatpush1.msra.mxu0 %v2635
      %2657 = vmatprep.subr.mxu0 0.0
      %2658 = vmatpush1.msra.mxu0 %v2636
      %2659 = vmatprep.subr.mxu0 0.0
      %2660 = vmatpush1.msra.mxu0 %v2637
      %2661 = vmatprep.subr.mxu0 0.0
      %2662 = vmatpush1.msra.mxu0 %v2638
      %2663 = vmatprep.subr.mxu0 0.0
      %2664 = vmatpush1.msra.mxu0 %v2639
      %2665 = vmatprep.subr.mxu0 0.0
      %2666 = vmatpush1.msra.mxu0 %v2640
      %2667 = vmatprep.subr.mxu0 0.0
      %2668 = vmatpush1.msra.mxu0 %v2641
      %2669 = vmatprep.subr.mxu0 0.0
      %2670 = vmatpush1.msra.mxu0 0.0
      %2671 = vmatprep.subr.mxu0 0.0
      %2672 = vmatpush1.msra.mxu0 0.0
      %2673 = vmatprep.subr.mxu0 0.0
      %2674 = vmatpush1.msra.mxu0 0.0
      %2675 = vmatprep.subr.mxu0 0.0
      %2676 = vmatpush1.msra.mxu0 0.0
      %2677 = vmatprep.subr.mxu0 0.0
      %2678 = vmatpush1.msra.mxu0 0.0
      %2679 = vmatprep.subr.mxu0 0.0
      %2680 = vmatpush1.msra.mxu0 0.0
      %2681 = vmatprep.subr.mxu0 0.0
      %2682 = vmatpush1.msra.mxu0 0.0
      %2683 = vmatprep.subr.mxu0 0.0
      %2684 = vmatpush1.msra.mxu0 0.0
      %2685 = vmatprep.subr.mxu0 0.0
      %2686 = vmatpush1.msra.mxu0 0.0
      %2687 = vmatprep.subr.mxu0 0.0
      %2688 = vmatpush1.msra.mxu0 0.0
      %2689 = vmatprep.subr.mxu0 0.0
      %2690 = vmatpush1.msra.mxu0 0.0
      %2691 = vmatprep.subr.mxu0 0.0
      %2692 = vmatpush1.msra.mxu0 0.0
      %2693 = vmatprep.subr.mxu0 0.0
      %2694 = vmatpush1.msra.mxu0 0.0
      %2695 = vmatprep.subr.mxu0 0.0
      %2696 = vmatpush1.msra.mxu0 0.0
      %2697 = vmatprep.subr.mxu0 0.0
      %2698 = vmatpush1.msra.mxu0 0.0
      %2699 = vmatprep.subr.mxu0 0.0
      %2700 = vmatpush1.msra.mxu0 0.0
      %2701 = vmatprep.subr.mxu0 0.0
      %2702 = vmatpush1.msra.mxu0 0.0
      %2703 = vmatprep.subr.mxu0 0.0
      %2704 = vmatpush1.msra.mxu0 0.0
      %2705 = vmatprep.subr.mxu0 0.0
      %2706 = vmatpush1.msra.mxu0 0.0
      %2707 = vmatprep.subr.mxu0 0.0
      %2708 = vmatpush1.msra.mxu0 0.0
      %2709 = vmatprep.subr.mxu0 0.0
      %2710 = vmatpush1.msra.mxu0 0.0
      %2711 = vmatprep.subr.mxu0 0.0
      %2712 = vmatpush1.msra.mxu0 0.0
      %2713 = vmatprep.subr.mxu0 0.0
      %2714 = vmatpush1.msra.mxu0 0.0
      %2715 = vmatprep.subr.mxu0 0.0
      %2716 = vmatpush1.msra.mxu0 0.0
      %2717 = vmatprep.mubr.f32.mxu0 0.0
      %2718 = vmatmul.mubr.f32.gmra.mrb[0].mxu0 %v2651
      %v2719 = vpop.f32.mrb[0].mxu0
      %v2720 = vadd.f32 %v2647, %v2719
      %v2721 = vpop.f32.mrb[0].mxu0
      %2722 = vdwg.mxu0
      %v2723 = vadd.f32 %v2548, %v2720
      %v2724 = vld [vmem:[%s16] sm:$0x1]
      %v2725 = vld [vmem:[%s17] sm:$0x1]
      %v2726 = vsel %vm585, %v2723, 0.0
      %2727 = vadd.xlane.f32.xlu0 %v2726
      %v2728 = vpop.xlane.xlu0 %2727
      %v2729 = vmul.f32 %v2728, %v2524
      %v2730 = vsub.f32 %v2723, %v2729
      %v2731 = vmul.f32 %v2730, %v2730
      %v2732 = vsel %vm585, %v2731, 0.0
      %2733 = vadd.xlane.f32.xlu0 %v2732
      %v2734 = vpop.xlane.xlu0 %2733
      %v2735 = vmul.f32 %v2734, %v2524
      %v2736 = vadd.f32 %v2735, 1e-05
      %v2737 = vrsqrt.pop %v2736
      %v2738 = vmul.f32 %v2730, %v2737
      %v2740 = vlaneseq
      %v2741 = vshrl.u32 %v2740, 7
      %v2742 = vsub.s32 0, %v2741
      %v2743 = vrot.slane %v2724, %v2742
      %v2745 = vmul.f32 %v2738, %v2743
      %v2747 = vlaneseq
      %v2748 = vshrl.u32 %v2747, 7
      %v2749 = vsub.s32 0, %v2748
      %v2750 = vrot.slane %v2725, %v2749
      %v2752 = vadd.f32 %v2745, %v2750
      %s2753 = scalar_lea.vmem %s2, 128
      %v2754 = vld [vmem:[%s2753] sm:$0xff]
      %v2755 = vld [vmem:[%s2753 + $0x8] sm:$0xff]
      %v2756 = vld [vmem:[%s2753 + $0x10] sm:$0xff]
      %v2757 = vld [vmem:[%s2753 + $0x18] sm:$0xff]
      %s2758 = scalar_lea.vmem %s3, 4
      %v2759 = vld [vmem:[%s2758] sm:$0x1]
      %v2761 = vlaneseq
      %v2762 = vshrl.u32 %v2761, 7
      %v2763 = vsub.s32 0, %v2762
      %v2764 = vrot.slane %v2759, %v2763
      %v2767 = vsel %vm585, %v2752, 0
      %2769 = vmatprep.subr.mxu0 0.0
      %2770 = vmatpush1.msra.mxu0 %v2754
      %2771 = vmatprep.subr.mxu0 0.0
      %2772 = vmatpush1.msra.mxu0 %v2755
      %2773 = vmatprep.subr.mxu0 0.0
      %2774 = vmatpush1.msra.mxu0 %v2756
      %2775 = vmatprep.subr.mxu0 0.0
      %2776 = vmatpush1.msra.mxu0 %v2757
      %2777 = vmatprep.subr.mxu0 0.0
      %2778 = vmatpush1.msra.mxu0 0.0
      %2779 = vmatprep.subr.mxu0 0.0
      %2780 = vmatpush1.msra.mxu0 0.0
      %2781 = vmatprep.subr.mxu0 0.0
      %2782 = vmatpush1.msra.mxu0 0.0
      %2783 = vmatprep.subr.mxu0 0.0
      %2784 = vmatpush1.msra.mxu0 0.0
      %2785 = vmatprep.subr.mxu0 0.0
      %2786 = vmatpush1.msra.mxu0 0.0
      %2787 = vmatprep.subr.mxu0 0.0
      %2788 = vmatpush1.msra.mxu0 0.0
      %2789 = vmatprep.subr.mxu0 0.0
      %2790 = vmatpush1.msra.mxu0 0.0
      %2791 = vmatprep.subr.mxu0 0.0
      %2792 = vmatpush1.msra.mxu0 0.0
      %2793 = vmatprep.subr.mxu0 0.0
      %2794 = vmatpush1.msra.mxu0 0.0
      %2795 = vmatprep.subr.mxu0 0.0
      %2796 = vmatpush1.msra.mxu0 0.0
      %2797 = vmatprep.subr.mxu0 0.0
      %2798 = vmatpush1.msra.mxu0 0.0
      %2799 = vmatprep.subr.mxu0 0.0
      %2800 = vmatpush1.msra.mxu0 0.0
      %2801 = vmatprep.subr.mxu0 0.0
      %2802 = vmatpush1.msra.mxu0 0.0
      %2803 = vmatprep.subr.mxu0 0.0
      %2804 = vmatpush1.msra.mxu0 0.0
      %2805 = vmatprep.subr.mxu0 0.0
      %2806 = vmatpush1.msra.mxu0 0.0
      %2807 = vmatprep.subr.mxu0 0.0
      %2808 = vmatpush1.msra.mxu0 0.0
      %2809 = vmatprep.subr.mxu0 0.0
      %2810 = vmatpush1.msra.mxu0 0.0
      %2811 = vmatprep.subr.mxu0 0.0
      %2812 = vmatpush1.msra.mxu0 0.0
      %2813 = vmatprep.subr.mxu0 0.0
      %2814 = vmatpush1.msra.mxu0 0.0
      %2815 = vmatprep.subr.mxu0 0.0
      %2816 = vmatpush1.msra.mxu0 0.0
      %2817 = vmatprep.subr.mxu0 0.0
      %2818 = vmatpush1.msra.mxu0 0.0
      %2819 = vmatprep.subr.mxu0 0.0
      %2820 = vmatpush1.msra.mxu0 0.0
      %2821 = vmatprep.subr.mxu0 0.0
      %2822 = vmatpush1.msra.mxu0 0.0
      %2823 = vmatprep.subr.mxu0 0.0
      %2824 = vmatpush1.msra.mxu0 0.0
      %2825 = vmatprep.subr.mxu0 0.0
      %2826 = vmatpush1.msra.mxu0 0.0
      %2827 = vmatprep.subr.mxu0 0.0
      %2828 = vmatpush1.msra.mxu0 0.0
      %2829 = vmatprep.subr.mxu0 0.0
      %2830 = vmatpush1.msra.mxu0 0.0
      %2831 = vmatprep.subr.mxu0 0.0
      %2832 = vmatpush1.msra.mxu0 0.0
      %2833 = vmatprep.mubr.f32.mxu0 0.0
      %2834 = vmatmul.mubr.f32.gmra.mrb[0].mxu0 %v2767
      %v2835 = vpop.f32.mrb[0].mxu0
      %v2836 = vadd.f32 %v2764, %v2835
      %v2837 = vpop.f32.mrb[0].mxu0
      %2838 = vdwg.mxu0
      %s2839 = scalar_lea.vmem %s4, 128
      %v2840 = vld [vmem:[%s2839] sm:$0xff]
      %v2841 = vld [vmem:[%s2839 + $0x8] sm:$0xff]
      %v2842 = vld [vmem:[%s2839 + $0x10] sm:$0xff]
      %v2843 = vld [vmem:[%s2839 + $0x18] sm:$0xff]
      %s2844 = scalar_lea.vmem %s5, 4
      %v2845 = vld [vmem:[%s2844] sm:$0x1]
      %v2847 = vlaneseq
      %v2848 = vshrl.u32 %v2847, 7
      %v2849 = vsub.s32 0, %v2848
      %v2850 = vrot.slane %v2845, %v2849
      %2852 = vmatprep.subr.mxu0 0.0
      %2853 = vmatpush1.msra.mxu0 %v2840
      %2854 = vmatprep.subr.mxu0 0.0
      %2855 = vmatpush1.msra.mxu0 %v2841
      %2856 = vmatprep.subr.mxu0 0.0
      %2857 = vmatpush1.msra.mxu0 %v2842
      %2858 = vmatprep.subr.mxu0 0.0
      %2859 = vmatpush1.msra.mxu0 %v2843
      %2860 = vmatprep.subr.mxu0 0.0
      %2861 = vmatpush1.msra.mxu0 0.0
      %2862 = vmatprep.subr.mxu0 0.0
      %2863 = vmatpush1.msra.mxu0 0.0
      %2864 = vmatprep.subr.mxu0 0.0
      %2865 = vmatpush1.msra.mxu0 0.0
      %2866 = vmatprep.subr.mxu0 0.0
      %2867 = vmatpush1.msra.mxu0 0.0
      %2868 = vmatprep.subr.mxu0 0.0
      %2869 = vmatpush1.msra.mxu0 0.0
      %2870 = vmatprep.subr.mxu0 0.0
      %2871 = vmatpush1.msra.mxu0 0.0
      %2872 = vmatprep.subr.mxu0 0.0
      %2873 = vmatpush1.msra.mxu0 0.0
      %2874 = vmatprep.subr.mxu0 0.0
      %2875 = vmatpush1.msra.mxu0 0.0
      %2876 = vmatprep.subr.mxu0 0.0
      %2877 = vmatpush1.msra.mxu0 0.0
      %2878 = vmatprep.subr.mxu0 0.0
      %2879 = vmatpush1.msra.mxu0 0.0
      %2880 = vmatprep.subr.mxu0 0.0
      %2881 = vmatpush1.msra.mxu0 0.0
      %2882 = vmatprep.subr.mxu0 0.0
      %2883 = vmatpush1.msra.mxu0 0.0
      %2884 = vmatprep.subr.mxu0 0.0
      %2885 = vmatpush1.msra.mxu0 0.0
      %2886 = vmatprep.subr.mxu0 0.0
      %2887 = vmatpush1.msra.mxu0 0.0
      %2888 = vmatprep.subr.mxu0 0.0
      %2889 = vmatpush1.msra.mxu0 0.0
      %2890 = vmatprep.subr.mxu0 0.0
      %2891 = vmatpush1.msra.mxu0 0.0
      %2892 = vmatprep.subr.mxu0 0.0
      %2893 = vmatpush1.msra.mxu0 0.0
      %2894 = vmatprep.subr.mxu0 0.0
      %2895 = vmatpush1.msra.mxu0 0.0
      %2896 = vmatprep.subr.mxu0 0.0
      %2897 = vmatpush1.msra.mxu0 0.0
      %2898 = vmatprep.subr.mxu0 0.0
      %2899 = vmatpush1.msra.mxu0 0.0
      %2900 = vmatprep.subr.mxu0 0.0
      %2901 = vmatpush1.msra.mxu0 0.0
      %2902 = vmatprep.subr.mxu0 0.0
      %2903 = vmatpush1.msra.mxu0 0.0
      %2904 = vmatprep.subr.mxu0 0.0
      %2905 = vmatpush1.msra.mxu0 0.0
      %2906 = vmatprep.subr.mxu0 0.0
      %2907 = vmatpush1.msra.mxu0 0.0
      %2908 = vmatprep.subr.mxu0 0.0
      %2909 = vmatpush1.msra.mxu0 0.0
      %2910 = vmatprep.subr.mxu0 0.0
      %2911 = vmatpush1.msra.mxu0 0.0
      %2912 = vmatprep.subr.mxu0 0.0
      %2913 = vmatpush1.msra.mxu0 0.0
      %2914 = vmatprep.subr.mxu0 0.0
      %2915 = vmatpush1.msra.mxu0 0.0
      %2916 = vmatprep.mubr.f32.mxu0 0.0
      %2917 = vmatmul.mubr.f32.gmra.mrb[0].mxu0 %v2767
      %v2918 = vpop.f32.mrb[0].mxu0
      %v2919 = vadd.f32 %v2850, %v2918
      %v2920 = vpop.f32.mrb[0].mxu0
      %2921 = vdwg.mxu0
      %s2922 = scalar_lea.vmem %s6, 128
      %v2923 = vld [vmem:[%s2922] sm:$0xff]
      %v2924 = vld [vmem:[%s2922 + $0x8] sm:$0xff]
      %v2925 = vld [vmem:[%s2922 + $0x10] sm:$0xff]
      %v2926 = vld [vmem:[%s2922 + $0x18] sm:$0xff]
      %s2927 = scalar_lea.vmem %s7, 4
      %v2928 = vld [vmem:[%s2927] sm:$0x1]
      %v2930 = vlaneseq
      %v2931 = vshrl.u32 %v2930, 7
      %v2932 = vsub.s32 0, %v2931
      %v2933 = vrot.slane %v2928, %v2932
      %2935 = vmatprep.subr.mxu0 0.0
      %2936 = vmatpush1.msra.mxu0 %v2923
      %2937 = vmatprep.subr.mxu0 0.0
      %2938 = vmatpush1.msra.mxu0 %v2924
      %2939 = vmatprep.subr.mxu0 0.0
      %2940 = vmatpush1.msra.mxu0 %v2925
      %2941 = vmatprep.subr.mxu0 0.0
      %2942 = vmatpush1.msra.mxu0 %v2926
      %2943 = vmatprep.subr.mxu0 0.0
      %2944 = vmatpush1.msra.mxu0 0.0
      %2945 = vmatprep.subr.mxu0 0.0
      %2946 = vmatpush1.msra.mxu0 0.0
      %2947 = vmatprep.subr.mxu0 0.0
      %2948 = vmatpush1.msra.mxu0 0.0
      %2949 = vmatprep.subr.mxu0 0.0
      %2950 = vmatpush1.msra.mxu0 0.0
      %2951 = vmatprep.subr.mxu0 0.0
      %2952 = vmatpush1.msra.mxu0 0.0
      %2953 = vmatprep.subr.mxu0 0.0
      %2954 = vmatpush1.msra.mxu0 0.0
      %2955 = vmatprep.subr.mxu0 0.0
      %2956 = vmatpush1.msra.mxu0 0.0
      %2957 = vmatprep.subr.mxu0 0.0
      %2958 = vmatpush1.msra.mxu0 0.0
      %2959 = vmatprep.subr.mxu0 0.0
      %2960 = vmatpush1.msra.mxu0 0.0
      %2961 = vmatprep.subr.mxu0 0.0
      %2962 = vmatpush1.msra.mxu0 0.0
      %2963 = vmatprep.subr.mxu0 0.0
      %2964 = vmatpush1.msra.mxu0 0.0
      %2965 = vmatprep.subr.mxu0 0.0
      %2966 = vmatpush1.msra.mxu0 0.0
      %2967 = vmatprep.subr.mxu0 0.0
      %2968 = vmatpush1.msra.mxu0 0.0
      %2969 = vmatprep.subr.mxu0 0.0
      %2970 = vmatpush1.msra.mxu0 0.0
      %2971 = vmatprep.subr.mxu0 0.0
      %2972 = vmatpush1.msra.mxu0 0.0
      %2973 = vmatprep.subr.mxu0 0.0
      %2974 = vmatpush1.msra.mxu0 0.0
      %2975 = vmatprep.subr.mxu0 0.0
      %2976 = vmatpush1.msra.mxu0 0.0
      %2977 = vmatprep.subr.mxu0 0.0
      %2978 = vmatpush1.msra.mxu0 0.0
      %2979 = vmatprep.subr.mxu0 0.0
      %2980 = vmatpush1.msra.mxu0 0.0
      %2981 = vmatprep.subr.mxu0 0.0
      %2982 = vmatpush1.msra.mxu0 0.0
      %2983 = vmatprep.subr.mxu0 0.0
      %2984 = vmatpush1.msra.mxu0 0.0
      %2985 = vmatprep.subr.mxu0 0.0
      %2986 = vmatpush1.msra.mxu0 0.0
      %2987 = vmatprep.subr.mxu0 0.0
      %2988 = vmatpush1.msra.mxu0 0.0
      %2989 = vmatprep.subr.mxu0 0.0
      %2990 = vmatpush1.msra.mxu0 0.0
      %2991 = vmatprep.subr.mxu0 0.0
      %2992 = vmatpush1.msra.mxu0 0.0
      %2993 = vmatprep.subr.mxu0 0.0
      %2994 = vmatpush1.msra.mxu0 0.0
      %2995 = vmatprep.subr.mxu0 0.0
      %2996 = vmatpush1.msra.mxu0 0.0
      %2997 = vmatprep.subr.mxu0 0.0
      %2998 = vmatpush1.msra.mxu0 0.0
      %2999 = vmatprep.mubr.f32.mxu0 0.0
      %3000 = vmatmul.mubr.f32.gmra.mrb[0].mxu0 %v2767
      %v3001 = vpop.f32.mrb[0].mxu0
      %v3002 = vadd.f32 %v2933, %v3001
      %v3003 = vpop.f32.mrb[0].mxu0
      %3004 = vdwg.mxu0
      %v3006 = vsel %vm821, %v2836, 0
      %v3009 = vsel %vm821, %v2919, 0
      %3011 = vmatprep.subr.mxu0 0.0
      %3012 = vmatpush1.xpose.msra.mxu0 %v3009
      %3013 = vmatprep.subr.mxu0 0.0
      %3014 = vmatpush1.xpose.msra.mxu0 0.0
      %3015 = vmatprep.subr.mxu0 0.0
      %3016 = vmatpush1.xpose.msra.mxu0 0.0
      %3017 = vmatprep.subr.mxu0 0.0
      %3018 = vmatpush1.xpose.msra.mxu0 0.0
      %3019 = vmatprep.subr.mxu0 0.0
      %3020 = vmatpush1.xpose.msra.mxu0 0.0
      %3021 = vmatprep.subr.mxu0 0.0
      %3022 = vmatpush1.xpose.msra.mxu0 0.0
      %3023 = vmatprep.subr.mxu0 0.0
      %3024 = vmatpush1.xpose.msra.mxu0 0.0
      %3025 = vmatprep.subr.mxu0 0.0
      %3026 = vmatpush1.xpose.msra.mxu0 0.0
      %3027 = vmatprep.subr.mxu0 0.0
      %3028 = vmatpush1.xpose.msra.mxu0 0.0
      %3029 = vmatprep.subr.mxu0 0.0
      %3030 = vmatpush1.xpose.msra.mxu0 0.0
      %3031 = vmatprep.subr.mxu0 0.0
      %3032 = vmatpush1.xpose.msra.mxu0 0.0
      %3033 = vmatprep.subr.mxu0 0.0
      %3034 = vmatpush1.xpose.msra.mxu0 0.0
      %3035 = vmatprep.subr.mxu0 0.0
      %3036 = vmatpush1.xpose.msra.mxu0 0.0
      %3037 = vmatprep.subr.mxu0 0.0
      %3038 = vmatpush1.xpose.msra.mxu0 0.0
      %3039 = vmatprep.subr.mxu0 0.0
      %3040 = vmatpush1.xpose.msra.mxu0 0.0
      %3041 = vmatprep.subr.mxu0 0.0
      %3042 = vmatpush1.xpose.msra.mxu0 0.0
      %3043 = vmatprep.subr.mxu0 0.0
      %3044 = vmatpush1.xpose.msra.mxu0 0.0
      %3045 = vmatprep.subr.mxu0 0.0
      %3046 = vmatpush1.xpose.msra.mxu0 0.0
      %3047 = vmatprep.subr.mxu0 0.0
      %3048 = vmatpush1.xpose.msra.mxu0 0.0
      %3049 = vmatprep.subr.mxu0 0.0
      %3050 = vmatpush1.xpose.msra.mxu0 0.0
      %3051 = vmatprep.subr.mxu0 0.0
      %3052 = vmatpush1.xpose.msra.mxu0 0.0
      %3053 = vmatprep.subr.mxu0 0.0
      %3054 = vmatpush1.xpose.msra.mxu0 0.0
      %3055 = vmatprep.subr.mxu0 0.0
      %3056 = vmatpush1.xpose.msra.mxu0 0.0
      %3057 = vmatprep.subr.mxu0 0.0
      %3058 = vmatpush1.xpose.msra.mxu0 0.0
      %3059 = vmatprep.subr.mxu0 0.0
      %3060 = vmatpush1.xpose.msra.mxu0 0.0
      %3061 = vmatprep.subr.mxu0 0.0
      %3062 = vmatpush1.xpose.msra.mxu0 0.0
      %3063 = vmatprep.subr.mxu0 0.0
      %3064 = vmatpush1.xpose.msra.mxu0 0.0
      %3065 = vmatprep.subr.mxu0 0.0
      %3066 = vmatpush1.xpose.msra.mxu0 0.0
      %3067 = vmatprep.subr.mxu0 0.0
      %3068 = vmatpush1.xpose.msra.mxu0 0.0
      %3069 = vmatprep.subr.mxu0 0.0
      %3070 = vmatpush1.xpose.msra.mxu0 0.0
      %3071 = vmatprep.subr.mxu0 0.0
      %3072 = vmatpush1.xpose.msra.mxu0 0.0
      %3073 = vmatprep.subr.mxu0 0.0
      %3074 = vmatpush1.xpose.msra.mxu0 0.0
      %3075 = vmatprep.mubr.f32.mxu0 0.0
      %3076 = vmatmul.mubr.f32.gmra.mrb[0].mxu0 %v3006
      %v3077 = vpop.f32.mrb[0].mxu0
      %v3078 = vadd.f32 0.0, %v3077
      %v3079 = vpop.f32.mrb[0].mxu0
      %3080 = vdwg.mxu0
      %v3081 = vsel %vm821, %v3078, -inf
      %3082 = vmax.xlane.f32.xlu0 %v3081
      %v3083 = vpop.xlane.xlu0 %3082
      %v3084 = vsub.f32 %v3078, %v3083
      %v3085 = vmul.f32 %v3084, 1.442695
      %v3086 = vpow.pop %v3085
      %v3087 = vsel %vm821, %v3086, 0.0
      %3088 = vadd.xlane.f32.xlu0 %v3087
      %v3089 = vpop.xlane.xlu0 %3088
      %v3090 = vrcp.pop %v3089
      %v3091 = vmul.f32 %v3086, %v3090
      %v3093 = vsel %vm821, %v3091, 0
      %3095 = vmatprep.subr.mxu0 0.0
      %3096 = vmatpush1.msra.mxu0 %v3002
      %3097 = vmatprep.subr.mxu0 0.0
      %3098 = vmatpush1.msra.mxu0 0.0
      %3099 = vmatprep.subr.mxu0 0.0
      %3100 = vmatpush1.msra.mxu0 0.0
      %3101 = vmatprep.subr.mxu0 0.0
      %3102 = vmatpush1.msra.mxu0 0.0
      %3103 = vmatprep.subr.mxu0 0.0
      %3104 = vmatpush1.msra.mxu0 0.0
      %3105 = vmatprep.subr.mxu0 0.0
      %3106 = vmatpush1.msra.mxu0 0.0
      %3107 = vmatprep.subr.mxu0 0.0
      %3108 = vmatpush1.msra.mxu0 0.0
      %3109 = vmatprep.subr.mxu0 0.0
      %3110 = vmatpush1.msra.mxu0 0.0
      %3111 = vmatprep.subr.mxu0 0.0
      %3112 = vmatpush1.msra.mxu0 0.0
      %3113 = vmatprep.subr.mxu0 0.0
      %3114 = vmatpush1.msra.mxu0 0.0
      %3115 = vmatprep.subr.mxu0 0.0
      %3116 = vmatpush1.msra.mxu0 0.0
      %3117 = vmatprep.subr.mxu0 0.0
      %3118 = vmatpush1.msra.mxu0 0.0
      %3119 = vmatprep.subr.mxu0 0.0
      %3120 = vmatpush1.msra.mxu0 0.0
      %3121 = vmatprep.subr.mxu0 0.0
      %3122 = vmatpush1.msra.mxu0 0.0
      %3123 = vmatprep.subr.mxu0 0.0
      %3124 = vmatpush1.msra.mxu0 0.0
      %3125 = vmatprep.subr.mxu0 0.0
      %3126 = vmatpush1.msra.mxu0 0.0
      %3127 = vmatprep.subr.mxu0 0.0
      %3128 = vmatpush1.msra.mxu0 0.0
      %3129 = vmatprep.subr.mxu0 0.0
      %3130 = vmatpush1.msra.mxu0 0.0
      %3131 = vmatprep.subr.mxu0 0.0
      %3132 = vmatpush1.msra.mxu0 0.0
      %3133 = vmatprep.subr.mxu0 0.0
      %3134 = vmatpush1.msra.mxu0 0.0
      %3135 = vmatprep.subr.mxu0 0.0
      %3136 = vmatpush1.msra.mxu0 0.0
      %3137 = vmatprep.subr.mxu0 0.0
      %3138 = vmatpush1.msra.mxu0 0.0
      %3139 = vmatprep.subr.mxu0 0.0
      %3140 = vmatpush1.msra.mxu0 0.0
      %3141 = vmatprep.subr.mxu0 0.0
      %3142 = vmatpush1.msra.mxu0 0.0
      %3143 = vmatprep.subr.mxu0 0.0
      %3144 = vmatpush1.msra.mxu0 0.0
      %3145 = vmatprep.subr.mxu0 0.0
      %3146 = vmatpush1.msra.mxu0 0.0
      %3147 = vmatprep.subr.mxu0 0.0
      %3148 = vmatpush1.msra.mxu0 0.0
      %3149 = vmatprep.subr.mxu0 0.0
      %3150 = vmatpush1.msra.mxu0 0.0
      %3151 = vmatprep.subr.mxu0 0.0
      %3152 = vmatpush1.msra.mxu0 0.0
      %3153 = vmatprep.subr.mxu0 0.0
      %3154 = vmatpush1.msra.mxu0 0.0
      %3155 = vmatprep.subr.mxu0 0.0
      %3156 = vmatpush1.msra.mxu0 0.0
      %3157 = vmatprep.subr.mxu0 0.0
      %3158 = vmatpush1.msra.mxu0 0.0
      %3159 = vmatprep.mubr.f32.mxu0 0.0
      %3160 = vmatmul.mubr.f32.gmra.mrb[0].mxu0 %v3093
      %v3161 = vpop.f32.mrb[0].mxu0
      %v3162 = vadd.f32 0.0, %v3161
      %v3163 = vpop.f32.mrb[0].mxu0
      %3164 = vdwg.mxu0
      %s3165 = scalar_lea.vmem %s8, 32
      %v3166 = vld [vmem:[%s3165] sm:$0xff]
      %s3167 = scalar_lea.vmem %s2, 160
      %v3168 = vld [vmem:[%s3167] sm:$0xff]
      %v3169 = vld [vmem:[%s3167 + $0x8] sm:$0xff]
      %v3170 = vld [vmem:[%s3167 + $0x10] sm:$0xff]
      %v3171 = vld [vmem:[%s3167 + $0x18] sm:$0xff]
      %s3172 = scalar_lea.vmem %s3, 5
      %v3173 = vld [vmem:[%s3172] sm:$0x1]
      %v3175 = vlaneseq
      %v3176 = vshrl.u32 %v3175, 7
      %v3177 = vsub.s32 0, %v3176
      %v3178 = vrot.slane %v3173, %v3177
      %3180 = vmatprep.subr.mxu0 0.0
      %3181 = vmatpush1.msra.mxu0 %v3168
      %3182 = vmatprep.subr.mxu0 0.0
      %3183 = vmatpush1.msra.mxu0 %v3169
      %3184 = vmatprep.subr.mxu0 0.0
      %3185 = vmatpush1.msra.mxu0 %v3170
      %3186 = vmatprep.subr.mxu0 0.0
      %3187 = vmatpush1.msra.mxu0 %v3171
      %3188 = vmatprep.subr.mxu0 0.0
      %3189 = vmatpush1.msra.mxu0 0.0
      %3190 = vmatprep.subr.mxu0 0.0
      %3191 = vmatpush1.msra.mxu0 0.0
      %3192 = vmatprep.subr.mxu0 0.0
      %3193 = vmatpush1.msra.mxu0 0.0
      %3194 = vmatprep.subr.mxu0 0.0
      %3195 = vmatpush1.msra.mxu0 0.0
      %3196 = vmatprep.subr.mxu0 0.0
      %3197 = vmatpush1.msra.mxu0 0.0
      %3198 = vmatprep.subr.mxu0 0.0
      %3199 = vmatpush1.msra.mxu0 0.0
      %3200 = vmatprep.subr.mxu0 0.0
      %3201 = vmatpush1.msra.mxu0 0.0
      %3202 = vmatprep.subr.mxu0 0.0
      %3203 = vmatpush1.msra.mxu0 0.0
      %3204 = vmatprep.subr.mxu0 0.0
      %3205 = vmatpush1.msra.mxu0 0.0
      %3206 = vmatprep.subr.mxu0 0.0
      %3207 = vmatpush1.msra.mxu0 0.0
      %3208 = vmatprep.subr.mxu0 0.0
      %3209 = vmatpush1.msra.mxu0 0.0
      %3210 = vmatprep.subr.mxu0 0.0
      %3211 = vmatpush1.msra.mxu0 0.0
      %3212 = vmatprep.subr.mxu0 0.0
      %3213 = vmatpush1.msra.mxu0 0.0
      %3214 = vmatprep.subr.mxu0 0.0
      %3215 = vmatpush1.msra.mxu0 0.0
      %3216 = vmatprep.subr.mxu0 0.0
      %3217 = vmatpush1.msra.mxu0 0.0
      %3218 = vmatprep.subr.mxu0 0.0
      %3219 = vmatpush1.msra.mxu0 0.0
      %3220 = vmatprep.subr.mxu0 0.0
      %3221 = vmatpush1.msra.mxu0 0.0
      %3222 = vmatprep.subr.mxu0 0.0
      %3223 = vmatpush1.msra.mxu0 0.0
      %3224 = vmatprep.subr.mxu0 0.0
      %3225 = vmatpush1.msra.mxu0 0.0
      %3226 = vmatprep.subr.mxu0 0.0
      %3227 = vmatpush1.msra.mxu0 0.0
      %3228 = vmatprep.subr.mxu0 0.0
      %3229 = vmatpush1.msra.mxu0 0.0
      %3230 = vmatprep.subr.mxu0 0.0
      %3231 = vmatpush1.msra.mxu0 0.0
      %3232 = vmatprep.subr.mxu0 0.0
      %3233 = vmatpush1.msra.mxu0 0.0
      %3234 = vmatprep.subr.mxu0 0.0
      %3235 = vmatpush1.msra.mxu0 0.0
      %3236 = vmatprep.subr.mxu0 0.0
      %3237 = vmatpush1.msra.mxu0 0.0
      %3238 = vmatprep.subr.mxu0 0.0
      %3239 = vmatpush1.msra.mxu0 0.0
      %3240 = vmatprep.subr.mxu0 0.0
      %3241 = vmatpush1.msra.mxu0 0.0
      %3242 = vmatprep.subr.mxu0 0.0
      %3243 = vmatpush1.msra.mxu0 0.0
      %3244 = vmatprep.mubr.f32.mxu0 0.0
      %3245 = vmatmul.mubr.f32.gmra.mrb[0].mxu0 %v2767
      %v3246 = vpop.f32.mrb[0].mxu0
      %v3247 = vadd.f32 %v3178, %v3246
      %v3248 = vpop.f32.mrb[0].mxu0
      %3249 = vdwg.mxu0
      %s3250 = scalar_lea.vmem %s4, 160
      %v3251 = vld [vmem:[%s3250] sm:$0xff]
      %v3252 = vld [vmem:[%s3250 + $0x8] sm:$0xff]
      %v3253 = vld [vmem:[%s3250 + $0x10] sm:$0xff]
      %v3254 = vld [vmem:[%s3250 + $0x18] sm:$0xff]
      %s3255 = scalar_lea.vmem %s5, 5
      %v3256 = vld [vmem:[%s3255] sm:$0x1]
      %v3258 = vlaneseq
      %v3259 = vshrl.u32 %v3258, 7
      %v3260 = vsub.s32 0, %v3259
      %v3261 = vrot.slane %v3256, %v3260
      %3263 = vmatprep.subr.mxu0 0.0
      %3264 = vmatpush1.msra.mxu0 %v3251
      %3265 = vmatprep.subr.mxu0 0.0
      %3266 = vmatpush1.msra.mxu0 %v3252
      %3267 = vmatprep.subr.mxu0 0.0
      %3268 = vmatpush1.msra.mxu0 %v3253
      %3269 = vmatprep.subr.mxu0 0.0
      %3270 = vmatpush1.msra.mxu0 %v3254
      %3271 = vmatprep.subr.mxu0 0.0
      %3272 = vmatpush1.msra.mxu0 0.0
      %3273 = vmatprep.subr.mxu0 0.0
      %3274 = vmatpush1.msra.mxu0 0.0
      %3275 = vmatprep.subr.mxu0 0.0
      %3276 = vmatpush1.msra.mxu0 0.0
      %3277 = vmatprep.subr.mxu0 0.0
      %3278 = vmatpush1.msra.mxu0 0.0
      %3279 = vmatprep.subr.mxu0 0.0
      %3280 = vmatpush1.msra.mxu0 0.0
      %3281 = vmatprep.subr.mxu0 0.0
      %3282 = vmatpush1.msra.mxu0 0.0
      %3283 = vmatprep.subr.mxu0 0.0
      %3284 = vmatpush1.msra.mxu0 0.0
      %3285 = vmatprep.subr.mxu0 0.0
      %3286 = vmatpush1.msra.mxu0 0.0
      %3287 = vmatprep.subr.mxu0 0.0
      %3288 = vmatpush1.msra.mxu0 0.0
      %3289 = vmatprep.subr.mxu0 0.0
      %3290 = vmatpush1.msra.mxu0 0.0
      %3291 = vmatprep.subr.mxu0 0.0
      %3292 = vmatpush1.msra.mxu0 0.0
      %3293 = vmatprep.subr.mxu0 0.0
      %3294 = vmatpush1.msra.mxu0 0.0
      %3295 = vmatprep.subr.mxu0 0.0
      %3296 = vmatpush1.msra.mxu0 0.0
      %3297 = vmatprep.subr.mxu0 0.0
      %3298 = vmatpush1.msra.mxu0 0.0
      %3299 = vmatprep.subr.mxu0 0.0
      %3300 = vmatpush1.msra.mxu0 0.0
      %3301 = vmatprep.subr.mxu0 0.0
      %3302 = vmatpush1.msra.mxu0 0.0
      %3303 = vmatprep.subr.mxu0 0.0
      %3304 = vmatpush1.msra.mxu0 0.0
      %3305 = vmatprep.subr.mxu0 0.0
      %3306 = vmatpush1.msra.mxu0 0.0
      %3307 = vmatprep.subr.mxu0 0.0
      %3308 = vmatpush1.msra.mxu0 0.0
      %3309 = vmatprep.subr.mxu0 0.0
      %3310 = vmatpush1.msra.mxu0 0.0
      %3311 = vmatprep.subr.mxu0 0.0
      %3312 = vmatpush1.msra.mxu0 0.0
      %3313 = vmatprep.subr.mxu0 0.0
      %3314 = vmatpush1.msra.mxu0 0.0
      %3315 = vmatprep.subr.mxu0 0.0
      %3316 = vmatpush1.msra.mxu0 0.0
      %3317 = vmatprep.subr.mxu0 0.0
      %3318 = vmatpush1.msra.mxu0 0.0
      %3319 = vmatprep.subr.mxu0 0.0
      %3320 = vmatpush1.msra.mxu0 0.0
      %3321 = vmatprep.subr.mxu0 0.0
      %3322 = vmatpush1.msra.mxu0 0.0
      %3323 = vmatprep.subr.mxu0 0.0
      %3324 = vmatpush1.msra.mxu0 0.0
      %3325 = vmatprep.subr.mxu0 0.0
      %3326 = vmatpush1.msra.mxu0 0.0
      %3327 = vmatprep.mubr.f32.mxu0 0.0
      %3328 = vmatmul.mubr.f32.gmra.mrb[0].mxu0 %v2767
      %v3329 = vpop.f32.mrb[0].mxu0
      %v3330 = vadd.f32 %v3261, %v3329
      %v3331 = vpop.f32.mrb[0].mxu0
      %3332 = vdwg.mxu0
      %s3333 = scalar_lea.vmem %s6, 160
      %v3334 = vld [vmem:[%s3333] sm:$0xff]
      %v3335 = vld [vmem:[%s3333 + $0x8] sm:$0xff]
      %v3336 = vld [vmem:[%s3333 + $0x10] sm:$0xff]
      %v3337 = vld [vmem:[%s3333 + $0x18] sm:$0xff]
      %s3338 = scalar_lea.vmem %s7, 5
      %v3339 = vld [vmem:[%s3338] sm:$0x1]
      %v3341 = vlaneseq
      %v3342 = vshrl.u32 %v3341, 7
      %v3343 = vsub.s32 0, %v3342
      %v3344 = vrot.slane %v3339, %v3343
      %3346 = vmatprep.subr.mxu0 0.0
      %3347 = vmatpush1.msra.mxu0 %v3334
      %3348 = vmatprep.subr.mxu0 0.0
      %3349 = vmatpush1.msra.mxu0 %v3335
      %3350 = vmatprep.subr.mxu0 0.0
      %3351 = vmatpush1.msra.mxu0 %v3336
      %3352 = vmatprep.subr.mxu0 0.0
      %3353 = vmatpush1.msra.mxu0 %v3337
      %3354 = vmatprep.subr.mxu0 0.0
      %3355 = vmatpush1.msra.mxu0 0.0
      %3356 = vmatprep.subr.mxu0 0.0
      %3357 = vmatpush1.msra.mxu0 0.0
      %3358 = vmatprep.subr.mxu0 0.0
      %3359 = vmatpush1.msra.mxu0 0.0
      %3360 = vmatprep.subr.mxu0 0.0
      %3361 = vmatpush1.msra.mxu0 0.0
      %3362 = vmatprep.subr.mxu0 0.0
      %3363 = vmatpush1.msra.mxu0 0.0
      %3364 = vmatprep.subr.mxu0 0.0
      %3365 = vmatpush1.msra.mxu0 0.0
      %3366 = vmatprep.subr.mxu0 0.0
      %3367 = vmatpush1.msra.mxu0 0.0
      %3368 = vmatprep.subr.mxu0 0.0
      %3369 = vmatpush1.msra.mxu0 0.0
      %3370 = vmatprep.subr.mxu0 0.0
      %3371 = vmatpush1.msra.mxu0 0.0
      %3372 = vmatprep.subr.mxu0 0.0
      %3373 = vmatpush1.msra.mxu0 0.0
      %3374 = vmatprep.subr.mxu0 0.0
      %3375 = vmatpush1.msra.mxu0 0.0
      %3376 = vmatprep.subr.mxu0 0.0
      %3377 = vmatpush1.msra.mxu0 0.0
      %3378 = vmatprep.subr.mxu0 0.0
      %3379 = vmatpush1.msra.mxu0 0.0
      %3380 = vmatprep.subr.mxu0 0.0
      %3381 = vmatpush1.msra.mxu0 0.0
      %3382 = vmatprep.subr.mxu0 0.0
      %3383 = vmatpush1.msra.mxu0 0.0
      %3384 = vmatprep.subr.mxu0 0.0
      %3385 = vmatpush1.msra.mxu0 0.0
      %3386 = vmatprep.subr.mxu0 0.0
      %3387 = vmatpush1.msra.mxu0 0.0
      %3388 = vmatprep.subr.mxu0 0.0
      %3389 = vmatpush1.msra.mxu0 0.0
      %3390 = vmatprep.subr.mxu0 0.0
      %3391 = vmatpush1.msra.mxu0 0.0
      %3392 = vmatprep.subr.mxu0 0.0
      %3393 = vmatpush1.msra.mxu0 0.0
      %3394 = vmatprep.subr.mxu0 0.0
      %3395 = vmatpush1.msra.mxu0 0.0
      %3396 = vmatprep.subr.mxu0 0.0
      %3397 = vmatpush1.msra.mxu0 0.0
      %3398 = vmatprep.subr.mxu0 0.0
      %3399 = vmatpush1.msra.mxu0 0.0
      %3400 = vmatprep.subr.mxu0 0.0
      %3401 = vmatpush1.msra.mxu0 0.0
      %3402 = vmatprep.subr.mxu0 0.0
      %3403 = vmatpush1.msra.mxu0 0.0
      %3404 = vmatprep.subr.mxu0 0.0
      %3405 = vmatpush1.msra.mxu0 0.0
      %3406 = vmatprep.subr.mxu0 0.0
      %3407 = vmatpush1.msra.mxu0 0.0
      %3408 = vmatprep.subr.mxu0 0.0
      %3409 = vmatpush1.msra.mxu0 0.0
      %3410 = vmatprep.mubr.f32.mxu0 0.0
      %3411 = vmatmul.mubr.f32.gmra.mrb[0].mxu0 %v2767
      %v3412 = vpop.f32.mrb[0].mxu0
      %v3413 = vadd.f32 %v3344, %v3412
      %v3414 = vpop.f32.mrb[0].mxu0
      %3415 = vdwg.mxu0
      %v3417 = vsel %vm821, %v3247, 0
      %v3420 = vsel %vm821, %v3330, 0
      %3422 = vmatprep.subr.mxu0 0.0
      %3423 = vmatpush1.xpose.msra.mxu0 %v3420
      %3424 = vmatprep.subr.mxu0 0.0
      %3425 = vmatpush1.xpose.msra.mxu0 0.0
      %3426 = vmatprep.subr.mxu0 0.0
      %3427 = vmatpush1.xpose.msra.mxu0 0.0
      %3428 = vmatprep.subr.mxu0 0.0
      %3429 = vmatpush1.xpose.msra.mxu0 0.0
      %3430 = vmatprep.subr.mxu0 0.0
      %3431 = vmatpush1.xpose.msra.mxu0 0.0
      %3432 = vmatprep.subr.mxu0 0.0
      %3433 = vmatpush1.xpose.msra.mxu0 0.0
      %3434 = vmatprep.subr.mxu0 0.0
      %3435 = vmatpush1.xpose.msra.mxu0 0.0
      %3436 = vmatprep.subr.mxu0 0.0
      %3437 = vmatpush1.xpose.msra.mxu0 0.0
      %3438 = vmatprep.subr.mxu0 0.0
      %3439 = vmatpush1.xpose.msra.mxu0 0.0
      %3440 = vmatprep.subr.mxu0 0.0
      %3441 = vmatpush1.xpose.msra.mxu0 0.0
      %3442 = vmatprep.subr.mxu0 0.0
      %3443 = vmatpush1.xpose.msra.mxu0 0.0
      %3444 = vmatprep.subr.mxu0 0.0
      %3445 = vmatpush1.xpose.msra.mxu0 0.0
      %3446 = vmatprep.subr.mxu0 0.0
      %3447 = vmatpush1.xpose.msra.mxu0 0.0
      %3448 = vmatprep.subr.mxu0 0.0
      %3449 = vmatpush1.xpose.msra.mxu0 0.0
      %3450 = vmatprep.subr.mxu0 0.0
      %3451 = vmatpush1.xpose.msra.mxu0 0.0
      %3452 = vmatprep.subr.mxu0 0.0
      %3453 = vmatpush1.xpose.msra.mxu0 0.0
      %3454 = vmatprep.subr.mxu0 0.0
      %3455 = vmatpush1.xpose.msra.mxu0 0.0
      %3456 = vmatprep.subr.mxu0 0.0
      %3457 = vmatpush1.xpose.msra.mxu0 0.0
      %3458 = vmatprep.subr.mxu0 0.0
      %3459 = vmatpush1.xpose.msra.mxu0 0.0
      %3460 = vmatprep.subr.mxu0 0.0
      %3461 = vmatpush1.xpose.msra.mxu0 0.0
      %3462 = vmatprep.subr.mxu0 0.0
      %3463 = vmatpush1.xpose.msra.mxu0 0.0
      %3464 = vmatprep.subr.mxu0 0.0
      %3465 = vmatpush1.xpose.msra.mxu0 0.0
      %3466 = vmatprep.subr.mxu0 0.0
      %3467 = vmatpush1.xpose.msra.mxu0 0.0
      %3468 = vmatprep.subr.mxu0 0.0
      %3469 = vmatpush1.xpose.msra.mxu0 0.0
      %3470 = vmatprep.subr.mxu0 0.0
      %3471 = vmatpush1.xpose.msra.mxu0 0.0
      %3472 = vmatprep.subr.mxu0 0.0
      %3473 = vmatpush1.xpose.msra.mxu0 0.0
      %3474 = vmatprep.subr.mxu0 0.0
      %3475 = vmatpush1.xpose.msra.mxu0 0.0
      %3476 = vmatprep.subr.mxu0 0.0
      %3477 = vmatpush1.xpose.msra.mxu0 0.0
      %3478 = vmatprep.subr.mxu0 0.0
      %3479 = vmatpush1.xpose.msra.mxu0 0.0
      %3480 = vmatprep.subr.mxu0 0.0
      %3481 = vmatpush1.xpose.msra.mxu0 0.0
      %3482 = vmatprep.subr.mxu0 0.0
      %3483 = vmatpush1.xpose.msra.mxu0 0.0
      %3484 = vmatprep.subr.mxu0 0.0
      %3485 = vmatpush1.xpose.msra.mxu0 0.0
      %3486 = vmatprep.mubr.f32.mxu0 0.0
      %3487 = vmatmul.mubr.f32.gmra.mrb[0].mxu0 %v3417
      %v3488 = vpop.f32.mrb[0].mxu0
      %v3489 = vadd.f32 0.0, %v3488
      %v3490 = vpop.f32.mrb[0].mxu0
      %3491 = vdwg.mxu0
      %v3492 = vsel %vm821, %v3489, -inf
      %3493 = vmax.xlane.f32.xlu0 %v3492
      %v3494 = vpop.xlane.xlu0 %3493
      %v3495 = vsub.f32 %v3489, %v3494
      %v3496 = vmul.f32 %v3495, 1.442695
      %v3497 = vpow.pop %v3496
      %v3498 = vsel %vm821, %v3497, 0.0
      %3499 = vadd.xlane.f32.xlu0 %v3498
      %v3500 = vpop.xlane.xlu0 %3499
      %v3501 = vrcp.pop %v3500
      %v3502 = vmul.f32 %v3497, %v3501
      %v3504 = vsel %vm821, %v3502, 0
      %3506 = vmatprep.subr.mxu0 0.0
      %3507 = vmatpush1.msra.mxu0 %v3413
      %3508 = vmatprep.subr.mxu0 0.0
      %3509 = vmatpush1.msra.mxu0 0.0
      %3510 = vmatprep.subr.mxu0 0.0
      %3511 = vmatpush1.msra.mxu0 0.0
      %3512 = vmatprep.subr.mxu0 0.0
      %3513 = vmatpush1.msra.mxu0 0.0
      %3514 = vmatprep.subr.mxu0 0.0
      %3515 = vmatpush1.msra.mxu0 0.0
      %3516 = vmatprep.subr.mxu0 0.0
      %3517 = vmatpush1.msra.mxu0 0.0
      %3518 = vmatprep.subr.mxu0 0.0
      %3519 = vmatpush1.msra.mxu0 0.0
      %3520 = vmatprep.subr.mxu0 0.0
      %3521 = vmatpush1.msra.mxu0 0.0
      %3522 = vmatprep.subr.mxu0 0.0
      %3523 = vmatpush1.msra.mxu0 0.0
      %3524 = vmatprep.subr.mxu0 0.0
      %3525 = vmatpush1.msra.mxu0 0.0
      %3526 = vmatprep.subr.mxu0 0.0
      %3527 = vmatpush1.msra.mxu0 0.0
      %3528 = vmatprep.subr.mxu0 0.0
      %3529 = vmatpush1.msra.mxu0 0.0
      %3530 = vmatprep.subr.mxu0 0.0
      %3531 = vmatpush1.msra.mxu0 0.0
      %3532 = vmatprep.subr.mxu0 0.0
      %3533 = vmatpush1.msra.mxu0 0.0
      %3534 = vmatprep.subr.mxu0 0.0
      %3535 = vmatpush1.msra.mxu0 0.0
      %3536 = vmatprep.subr.mxu0 0.0
      %3537 = vmatpush1.msra.mxu0 0.0
      %3538 = vmatprep.subr.mxu0 0.0
      %3539 = vmatpush1.msra.mxu0 0.0
      %3540 = vmatprep.subr.mxu0 0.0
      %3541 = vmatpush1.msra.mxu0 0.0
      %3542 = vmatprep.subr.mxu0 0.0
      %3543 = vmatpush1.msra.mxu0 0.0
      %3544 = vmatprep.subr.mxu0 0.0
      %3545 = vmatpush1.msra.mxu0 0.0
      %3546 = vmatprep.subr.mxu0 0.0
      %3547 = vmatpush1.msra.mxu0 0.0
      %3548 = vmatprep.subr.mxu0 0.0
      %3549 = vmatpush1.msra.mxu0 0.0
      %3550 = vmatprep.subr.mxu0 0.0
      %3551 = vmatpush1.msra.mxu0 0.0
      %3552 = vmatprep.subr.mxu0 0.0
      %3553 = vmatpush1.msra.mxu0 0.0
      %3554 = vmatprep.subr.mxu0 0.0
      %3555 = vmatpush1.msra.mxu0 0.0
      %3556 = vmatprep.subr.mxu0 0.0
      %3557 = vmatpush1.msra.mxu0 0.0
      %3558 = vmatprep.subr.mxu0 0.0
      %3559 = vmatpush1.msra.mxu0 0.0
      %3560 = vmatprep.subr.mxu0 0.0
      %3561 = vmatpush1.msra.mxu0 0.0
      %3562 = vmatprep.subr.mxu0 0.0
      %3563 = vmatpush1.msra.mxu0 0.0
      %3564 = vmatprep.subr.mxu0 0.0
      %3565 = vmatpush1.msra.mxu0 0.0
      %3566 = vmatprep.subr.mxu0 0.0
      %3567 = vmatpush1.msra.mxu0 0.0
      %3568 = vmatprep.subr.mxu0 0.0
      %3569 = vmatpush1.msra.mxu0 0.0
      %3570 = vmatprep.mubr.f32.mxu0 0.0
      %3571 = vmatmul.mubr.f32.gmra.mrb[0].mxu0 %v3504
      %v3572 = vpop.f32.mrb[0].mxu0
      %v3573 = vadd.f32 0.0, %v3572
      %v3574 = vpop.f32.mrb[0].mxu0
      %3575 = vdwg.mxu0
      %s3576 = scalar_lea.vmem %s8, 40
      %v3577 = vld [vmem:[%s3576] sm:$0xff]
      %v3579 = vsel %vm821, %v3573, 0
      %3581 = vmatprep.subr.mxu0 0.0
      %3582 = vmatpush1.msra.mxu0 %v3577
      %3583 = vmatprep.subr.mxu0 0.0
      %3584 = vmatpush1.msra.mxu0 0.0
      %3585 = vmatprep.subr.mxu0 0.0
      %3586 = vmatpush1.msra.mxu0 0.0
      %3587 = vmatprep.subr.mxu0 0.0
      %3588 = vmatpush1.msra.mxu0 0.0
      %3589 = vmatprep.subr.mxu0 0.0
      %3590 = vmatpush1.msra.mxu0 0.0
      %3591 = vmatprep.subr.mxu0 0.0
      %3592 = vmatpush1.msra.mxu0 0.0
      %3593 = vmatprep.subr.mxu0 0.0
      %3594 = vmatpush1.msra.mxu0 0.0
      %3595 = vmatprep.subr.mxu0 0.0
      %3596 = vmatpush1.msra.mxu0 0.0
      %3597 = vmatprep.subr.mxu0 0.0
      %3598 = vmatpush1.msra.mxu0 0.0
      %3599 = vmatprep.subr.mxu0 0.0
      %3600 = vmatpush1.msra.mxu0 0.0
      %3601 = vmatprep.subr.mxu0 0.0
      %3602 = vmatpush1.msra.mxu0 0.0
      %3603 = vmatprep.subr.mxu0 0.0
      %3604 = vmatpush1.msra.mxu0 0.0
      %3605 = vmatprep.subr.mxu0 0.0
      %3606 = vmatpush1.msra.mxu0 0.0
      %3607 = vmatprep.subr.mxu0 0.0
      %3608 = vmatpush1.msra.mxu0 0.0
      %3609 = vmatprep.subr.mxu0 0.0
      %3610 = vmatpush1.msra.mxu0 0.0
      %3611 = vmatprep.subr.mxu0 0.0
      %3612 = vmatpush1.msra.mxu0 0.0
      %3613 = vmatprep.subr.mxu0 0.0
      %3614 = vmatpush1.msra.mxu0 0.0
      %3615 = vmatprep.subr.mxu0 0.0
      %3616 = vmatpush1.msra.mxu0 0.0
      %3617 = vmatprep.subr.mxu0 0.0
      %3618 = vmatpush1.msra.mxu0 0.0
      %3619 = vmatprep.subr.mxu0 0.0
      %3620 = vmatpush1.msra.mxu0 0.0
      %3621 = vmatprep.subr.mxu0 0.0
      %3622 = vmatpush1.msra.mxu0 0.0
      %3623 = vmatprep.subr.mxu0 0.0
      %3624 = vmatpush1.msra.mxu0 0.0
      %3625 = vmatprep.subr.mxu0 0.0
      %3626 = vmatpush1.msra.mxu0 0.0
      %3627 = vmatprep.subr.mxu0 0.0
      %3628 = vmatpush1.msra.mxu0 0.0
      %3629 = vmatprep.subr.mxu0 0.0
      %3630 = vmatpush1.msra.mxu0 0.0
      %3631 = vmatprep.subr.mxu0 0.0
      %3632 = vmatpush1.msra.mxu0 0.0
      %3633 = vmatprep.subr.mxu0 0.0
      %3634 = vmatpush1.msra.mxu0 0.0
      %3635 = vmatprep.subr.mxu0 0.0
      %3636 = vmatpush1.msra.mxu0 0.0
      %3637 = vmatprep.subr.mxu0 0.0
      %3638 = vmatpush1.msra.mxu0 0.0
      %3639 = vmatprep.subr.mxu0 0.0
      %3640 = vmatpush1.msra.mxu0 0.0
      %3641 = vmatprep.subr.mxu0 0.0
      %3642 = vmatpush1.msra.mxu0 0.0
      %3643 = vmatprep.subr.mxu0 0.0
      %3644 = vmatpush1.msra.mxu0 0.0
      %3645 = vmatprep.mubr.f32.mxu0 0.0
      %3646 = vmatmul.mubr.f32.gmra.mrb[0].mxu0 %v3579
      %v3647 = vpop.f32.mrb[0].mxu0
      %v3648 = vadd.f32 0.0, %v3647
      %v3649 = vpop.f32.mrb[0].mxu0
      %3650 = vdwg.mxu0
      %v3652 = vsel %vm821, %v3162, 0
      %3654 = vmatprep.subr.mxu0 0.0
      %3655 = vmatpush1.msra.mxu0 %v3166
      %3656 = vmatprep.subr.mxu0 0.0
      %3657 = vmatpush1.msra.mxu0 0.0
      %3658 = vmatprep.subr.mxu0 0.0
      %3659 = vmatpush1.msra.mxu0 0.0
      %3660 = vmatprep.subr.mxu0 0.0
      %3661 = vmatpush1.msra.mxu0 0.0
      %3662 = vmatprep.subr.mxu0 0.0
      %3663 = vmatpush1.msra.mxu0 0.0
      %3664 = vmatprep.subr.mxu0 0.0
      %3665 = vmatpush1.msra.mxu0 0.0
      %3666 = vmatprep.subr.mxu0 0.0
      %3667 = vmatpush1.msra.mxu0 0.0
      %3668 = vmatprep.subr.mxu0 0.0
      %3669 = vmatpush1.msra.mxu0 0.0
      %3670 = vmatprep.subr.mxu0 0.0
      %3671 = vmatpush1.msra.mxu0 0.0
      %3672 = vmatprep.subr.mxu0 0.0
      %3673 = vmatpush1.msra.mxu0 0.0
      %3674 = vmatprep.subr.mxu0 0.0
      %3675 = vmatpush1.msra.mxu0 0.0
      %3676 = vmatprep.subr.mxu0 0.0
      %3677 = vmatpush1.msra.mxu0 0.0
      %3678 = vmatprep.subr.mxu0 0.0
      %3679 = vmatpush1.msra.mxu0 0.0
      %3680 = vmatprep.subr.mxu0 0.0
      %3681 = vmatpush1.msra.mxu0 0.0
      %3682 = vmatprep.subr.mxu0 0.0
      %3683 = vmatpush1.msra.mxu0 0.0
      %3684 = vmatprep.subr.mxu0 0.0
      %3685 = vmatpush1.msra.mxu0 0.0
      %3686 = vmatprep.subr.mxu0 0.0
      %3687 = vmatpush1.msra.mxu0 0.0
      %3688 = vmatprep.subr.mxu0 0.0
      %3689 = vmatpush1.msra.mxu0 0.0
      %3690 = vmatprep.subr.mxu0 0.0
      %3691 = vmatpush1.msra.mxu0 0.0
      %3692 = vmatprep.subr.mxu0 0.0
      %3693 = vmatpush1.msra.mxu0 0.0
      %3694 = vmatprep.subr.mxu0 0.0
      %3695 = vmatpush1.msra.mxu0 0.0
      %3696 = vmatprep.subr.mxu0 0.0
      %3697 = vmatpush1.msra.mxu0 0.0
      %3698 = vmatprep.subr.mxu0 0.0
      %3699 = vmatpush1.msra.mxu0 0.0
      %3700 = vmatprep.subr.mxu0 0.0
      %3701 = vmatpush1.msra.mxu0 0.0
      %3702 = vmatprep.subr.mxu0 0.0
      %3703 = vmatpush1.msra.mxu0 0.0
      %3704 = vmatprep.subr.mxu0 0.0
      %3705 = vmatpush1.msra.mxu0 0.0
      %3706 = vmatprep.subr.mxu0 0.0
      %3707 = vmatpush1.msra.mxu0 0.0
      %3708 = vmatprep.subr.mxu0 0.0
      %3709 = vmatpush1.msra.mxu0 0.0
      %3710 = vmatprep.subr.mxu0 0.0
      %3711 = vmatpush1.msra.mxu0 0.0
      %3712 = vmatprep.subr.mxu0 0.0
      %3713 = vmatpush1.msra.mxu0 0.0
      %3714 = vmatprep.subr.mxu0 0.0
      %3715 = vmatpush1.msra.mxu0 0.0
      %3716 = vmatprep.subr.mxu0 0.0
      %3717 = vmatpush1.msra.mxu0 0.0
      %3718 = vmatprep.mubr.f32.mxu0 0.0
      %3719 = vmatmul.mubr.f32.gmra.mrb[0].mxu0 %v3652
      %v3720 = vpop.f32.mrb[0].mxu0
      %v3721 = vadd.f32 %v3648, %v3720
      %v3722 = vpop.f32.mrb[0].mxu0
      %3723 = vdwg.mxu0
      %s3724 = scalar_lea.vmem %s2, 192
      %v3725 = vld [vmem:[%s3724] sm:$0xff]
      %v3726 = vld [vmem:[%s3724 + $0x8] sm:$0xff]
      %v3727 = vld [vmem:[%s3724 + $0x10] sm:$0xff]
      %v3728 = vld [vmem:[%s3724 + $0x18] sm:$0xff]
      %s3729 = scalar_lea.vmem %s3, 6
      %v3730 = vld [vmem:[%s3729] sm:$0x1]
      %v3732 = vlaneseq
      %v3733 = vshrl.u32 %v3732, 7
      %v3734 = vsub.s32 0, %v3733
      %v3735 = vrot.slane %v3730, %v3734
      %3737 = vmatprep.subr.mxu0 0.0
      %3738 = vmatpush1.msra.mxu0 %v3725
      %3739 = vmatprep.subr.mxu0 0.0
      %3740 = vmatpush1.msra.mxu0 %v3726
      %3741 = vmatprep.subr.mxu0 0.0
      %3742 = vmatpush1.msra.mxu0 %v3727
      %3743 = vmatprep.subr.mxu0 0.0
      %3744 = vmatpush1.msra.mxu0 %v3728
      %3745 = vmatprep.subr.mxu0 0.0
      %3746 = vmatpush1.msra.mxu0 0.0
      %3747 = vmatprep.subr.mxu0 0.0
      %3748 = vmatpush1.msra.mxu0 0.0
      %3749 = vmatprep.subr.mxu0 0.0
      %3750 = vmatpush1.msra.mxu0 0.0
      %3751 = vmatprep.subr.mxu0 0.0
      %3752 = vmatpush1.msra.mxu0 0.0
      %3753 = vmatprep.subr.mxu0 0.0
      %3754 = vmatpush1.msra.mxu0 0.0
      %3755 = vmatprep.subr.mxu0 0.0
      %3756 = vmatpush1.msra.mxu0 0.0
      %3757 = vmatprep.subr.mxu0 0.0
      %3758 = vmatpush1.msra.mxu0 0.0
      %3759 = vmatprep.subr.mxu0 0.0
      %3760 = vmatpush1.msra.mxu0 0.0
      %3761 = vmatprep.subr.mxu0 0.0
      %3762 = vmatpush1.msra.mxu0 0.0
      %3763 = vmatprep.subr.mxu0 0.0
      %3764 = vmatpush1.msra.mxu0 0.0
      %3765 = vmatprep.subr.mxu0 0.0
      %3766 = vmatpush1.msra.mxu0 0.0
      %3767 = vmatprep.subr.mxu0 0.0
      %3768 = vmatpush1.msra.mxu0 0.0
      %3769 = vmatprep.subr.mxu0 0.0
      %3770 = vmatpush1.msra.mxu0 0.0
      %3771 = vmatprep.subr.mxu0 0.0
      %3772 = vmatpush1.msra.mxu0 0.0
      %3773 = vmatprep.subr.mxu0 0.0
      %3774 = vmatpush1.msra.mxu0 0.0
      %3775 = vmatprep.subr.mxu0 0.0
      %3776 = vmatpush1.msra.mxu0 0.0
      %3777 = vmatprep.subr.mxu0 0.0
      %3778 = vmatpush1.msra.mxu0 0.0
      %3779 = vmatprep.subr.mxu0 0.0
      %3780 = vmatpush1.msra.mxu0 0.0
      %3781 = vmatprep.subr.mxu0 0.0
      %3782 = vmatpush1.msra.mxu0 0.0
      %3783 = vmatprep.subr.mxu0 0.0
      %3784 = vmatpush1.msra.mxu0 0.0
      %3785 = vmatprep.subr.mxu0 0.0
      %3786 = vmatpush1.msra.mxu0 0.0
      %3787 = vmatprep.subr.mxu0 0.0
      %3788 = vmatpush1.msra.mxu0 0.0
      %3789 = vmatprep.subr.mxu0 0.0
      %3790 = vmatpush1.msra.mxu0 0.0
      %3791 = vmatprep.subr.mxu0 0.0
      %3792 = vmatpush1.msra.mxu0 0.0
      %3793 = vmatprep.subr.mxu0 0.0
      %3794 = vmatpush1.msra.mxu0 0.0
      %3795 = vmatprep.subr.mxu0 0.0
      %3796 = vmatpush1.msra.mxu0 0.0
      %3797 = vmatprep.subr.mxu0 0.0
      %3798 = vmatpush1.msra.mxu0 0.0
      %3799 = vmatprep.subr.mxu0 0.0
      %3800 = vmatpush1.msra.mxu0 0.0
      %3801 = vmatprep.mubr.f32.mxu0 0.0
      %3802 = vmatmul.mubr.f32.gmra.mrb[0].mxu0 %v2767
      %v3803 = vpop.f32.mrb[0].mxu0
      %v3804 = vadd.f32 %v3735, %v3803
      %v3805 = vpop.f32.mrb[0].mxu0
      %3806 = vdwg.mxu0
      %s3807 = scalar_lea.vmem %s4, 192
      %v3808 = vld [vmem:[%s3807] sm:$0xff]
      %v3809 = vld [vmem:[%s3807 + $0x8] sm:$0xff]
      %v3810 = vld [vmem:[%s3807 + $0x10] sm:$0xff]
      %v3811 = vld [vmem:[%s3807 + $0x18] sm:$0xff]
      %s3812 = scalar_lea.vmem %s5, 6
      %v3813 = vld [vmem:[%s3812] sm:$0x1]
      %v3815 = vlaneseq
      %v3816 = vshrl.u32 %v3815, 7
      %v3817 = vsub.s32 0, %v3816
      %v3818 = vrot.slane %v3813, %v3817
      %3820 = vmatprep.subr.mxu0 0.0
      %3821 = vmatpush1.msra.mxu0 %v3808
      %3822 = vmatprep.subr.mxu0 0.0
      %3823 = vmatpush1.msra.mxu0 %v3809
      %3824 = vmatprep.subr.mxu0 0.0
      %3825 = vmatpush1.msra.mxu0 %v3810
      %3826 = vmatprep.subr.mxu0 0.0
      %3827 = vmatpush1.msra.mxu0 %v3811
      %3828 = vmatprep.subr.mxu0 0.0
      %3829 = vmatpush1.msra.mxu0 0.0
      %3830 = vmatprep.subr.mxu0 0.0
      %3831 = vmatpush1.msra.mxu0 0.0
      %3832 = vmatprep.subr.mxu0 0.0
      %3833 = vmatpush1.msra.mxu0 0.0
      %3834 = vmatprep.subr.mxu0 0.0
      %3835 = vmatpush1.msra.mxu0 0.0
      %3836 = vmatprep.subr.mxu0 0.0
      %3837 = vmatpush1.msra.mxu0 0.0
      %3838 = vmatprep.subr.mxu0 0.0
      %3839 = vmatpush1.msra.mxu0 0.0
      %3840 = vmatprep.subr.mxu0 0.0
      %3841 = vmatpush1.msra.mxu0 0.0
      %3842 = vmatprep.subr.mxu0 0.0
      %3843 = vmatpush1.msra.mxu0 0.0
      %3844 = vmatprep.subr.mxu0 0.0
      %3845 = vmatpush1.msra.mxu0 0.0
      %3846 = vmatprep.subr.mxu0 0.0
      %3847 = vmatpush1.msra.mxu0 0.0
      %3848 = vmatprep.subr.mxu0 0.0
      %3849 = vmatpush1.msra.mxu0 0.0
      %3850 = vmatprep.subr.mxu0 0.0
      %3851 = vmatpush1.msra.mxu0 0.0
      %3852 = vmatprep.subr.mxu0 0.0
      %3853 = vmatpush1.msra.mxu0 0.0
      %3854 = vmatprep.subr.mxu0 0.0
      %3855 = vmatpush1.msra.mxu0 0.0
      %3856 = vmatprep.subr.mxu0 0.0
      %3857 = vmatpush1.msra.mxu0 0.0
      %3858 = vmatprep.subr.mxu0 0.0
      %3859 = vmatpush1.msra.mxu0 0.0
      %3860 = vmatprep.subr.mxu0 0.0
      %3861 = vmatpush1.msra.mxu0 0.0
      %3862 = vmatprep.subr.mxu0 0.0
      %3863 = vmatpush1.msra.mxu0 0.0
      %3864 = vmatprep.subr.mxu0 0.0
      %3865 = vmatpush1.msra.mxu0 0.0
      %3866 = vmatprep.subr.mxu0 0.0
      %3867 = vmatpush1.msra.mxu0 0.0
      %3868 = vmatprep.subr.mxu0 0.0
      %3869 = vmatpush1.msra.mxu0 0.0
      %3870 = vmatprep.subr.mxu0 0.0
      %3871 = vmatpush1.msra.mxu0 0.0
      %3872 = vmatprep.subr.mxu0 0.0
      %3873 = vmatpush1.msra.mxu0 0.0
      %3874 = vmatprep.subr.mxu0 0.0
      %3875 = vmatpush1.msra.mxu0 0.0
      %3876 = vmatprep.subr.mxu0 0.0
      %3877 = vmatpush1.msra.mxu0 0.0
      %3878 = vmatprep.subr.mxu0 0.0
      %3879 = vmatpush1.msra.mxu0 0.0
      %3880 = vmatprep.subr.mxu0 0.0
      %3881 = vmatpush1.msra.mxu0 0.0
      %3882 = vmatprep.subr.mxu0 0.0
      %3883 = vmatpush1.msra.mxu0 0.0
      %3884 = vmatprep.mubr.f32.mxu0 0.0
      %3885 = vmatmul.mubr.f32.gmra.mrb[0].mxu0 %v2767
      %v3886 = vpop.f32.mrb[0].mxu0
      %v3887 = vadd.f32 %v3818, %v3886
      %v3888 = vpop.f32.mrb[0].mxu0
      %3889 = vdwg.mxu0
      %s3890 = scalar_lea.vmem %s6, 192
      %v3891 = vld [vmem:[%s3890] sm:$0xff]
      %v3892 = vld [vmem:[%s3890 + $0x8] sm:$0xff]
      %v3893 = vld [vmem:[%s3890 + $0x10] sm:$0xff]
      %v3894 = vld [vmem:[%s3890 + $0x18] sm:$0xff]
      %s3895 = scalar_lea.vmem %s7, 6
      %v3896 = vld [vmem:[%s3895] sm:$0x1]
      %v3898 = vlaneseq
      %v3899 = vshrl.u32 %v3898, 7
      %v3900 = vsub.s32 0, %v3899
      %v3901 = vrot.slane %v3896, %v3900
      %3903 = vmatprep.subr.mxu0 0.0
      %3904 = vmatpush1.msra.mxu0 %v3891
      %3905 = vmatprep.subr.mxu0 0.0
      %3906 = vmatpush1.msra.mxu0 %v3892
      %3907 = vmatprep.subr.mxu0 0.0
      %3908 = vmatpush1.msra.mxu0 %v3893
      %3909 = vmatprep.subr.mxu0 0.0
      %3910 = vmatpush1.msra.mxu0 %v3894
      %3911 = vmatprep.subr.mxu0 0.0
      %3912 = vmatpush1.msra.mxu0 0.0
      %3913 = vmatprep.subr.mxu0 0.0
      %3914 = vmatpush1.msra.mxu0 0.0
      %3915 = vmatprep.subr.mxu0 0.0
      %3916 = vmatpush1.msra.mxu0 0.0
      %3917 = vmatprep.subr.mxu0 0.0
      %3918 = vmatpush1.msra.mxu0 0.0
      %3919 = vmatprep.subr.mxu0 0.0
      %3920 = vmatpush1.msra.mxu0 0.0
      %3921 = vmatprep.subr.mxu0 0.0
      %3922 = vmatpush1.msra.mxu0 0.0
      %3923 = vmatprep.subr.mxu0 0.0
      %3924 = vmatpush1.msra.mxu0 0.0
      %3925 = vmatprep.subr.mxu0 0.0
      %3926 = vmatpush1.msra.mxu0 0.0
      %3927 = vmatprep.subr.mxu0 0.0
      %3928 = vmatpush1.msra.mxu0 0.0
      %3929 = vmatprep.subr.mxu0 0.0
      %3930 = vmatpush1.msra.mxu0 0.0
      %3931 = vmatprep.subr.mxu0 0.0
      %3932 = vmatpush1.msra.mxu0 0.0
      %3933 = vmatprep.subr.mxu0 0.0
      %3934 = vmatpush1.msra.mxu0 0.0
      %3935 = vmatprep.subr.mxu0 0.0
      %3936 = vmatpush1.msra.mxu0 0.0
      %3937 = vmatprep.subr.mxu0 0.0
      %3938 = vmatpush1.msra.mxu0 0.0
      %3939 = vmatprep.subr.mxu0 0.0
      %3940 = vmatpush1.msra.mxu0 0.0
      %3941 = vmatprep.subr.mxu0 0.0
      %3942 = vmatpush1.msra.mxu0 0.0
      %3943 = vmatprep.subr.mxu0 0.0
      %3944 = vmatpush1.msra.mxu0 0.0
      %3945 = vmatprep.subr.mxu0 0.0
      %3946 = vmatpush1.msra.mxu0 0.0
      %3947 = vmatprep.subr.mxu0 0.0
      %3948 = vmatpush1.msra.mxu0 0.0
      %3949 = vmatprep.subr.mxu0 0.0
      %3950 = vmatpush1.msra.mxu0 0.0
      %3951 = vmatprep.subr.mxu0 0.0
      %3952 = vmatpush1.msra.mxu0 0.0
      %3953 = vmatprep.subr.mxu0 0.0
      %3954 = vmatpush1.msra.mxu0 0.0
      %3955 = vmatprep.subr.mxu0 0.0
      %3956 = vmatpush1.msra.mxu0 0.0
      %3957 = vmatprep.subr.mxu0 0.0
      %3958 = vmatpush1.msra.mxu0 0.0
      %3959 = vmatprep.subr.mxu0 0.0
      %3960 = vmatpush1.msra.mxu0 0.0
      %3961 = vmatprep.subr.mxu0 0.0
      %3962 = vmatpush1.msra.mxu0 0.0
      %3963 = vmatprep.subr.mxu0 0.0
      %3964 = vmatpush1.msra.mxu0 0.0
      %3965 = vmatprep.subr.mxu0 0.0
      %3966 = vmatpush1.msra.mxu0 0.0
      %3967 = vmatprep.mubr.f32.mxu0 0.0
      %3968 = vmatmul.mubr.f32.gmra.mrb[0].mxu0 %v2767
      %v3969 = vpop.f32.mrb[0].mxu0
      %v3970 = vadd.f32 %v3901, %v3969
      %v3971 = vpop.f32.mrb[0].mxu0
      %3972 = vdwg.mxu0
      %v3974 = vsel %vm821, %v3804, 0
      %v3977 = vsel %vm821, %v3887, 0
      %3979 = vmatprep.subr.mxu0 0.0
      %3980 = vmatpush1.xpose.msra.mxu0 %v3977
      %3981 = vmatprep.subr.mxu0 0.0
      %3982 = vmatpush1.xpose.msra.mxu0 0.0
      %3983 = vmatprep.subr.mxu0 0.0
      %3984 = vmatpush1.xpose.msra.mxu0 0.0
      %3985 = vmatprep.subr.mxu0 0.0
      %3986 = vmatpush1.xpose.msra.mxu0 0.0
      %3987 = vmatprep.subr.mxu0 0.0
      %3988 = vmatpush1.xpose.msra.mxu0 0.0
      %3989 = vmatprep.subr.mxu0 0.0
      %3990 = vmatpush1.xpose.msra.mxu0 0.0
      %3991 = vmatprep.subr.mxu0 0.0
      %3992 = vmatpush1.xpose.msra.mxu0 0.0
      %3993 = vmatprep.subr.mxu0 0.0
      %3994 = vmatpush1.xpose.msra.mxu0 0.0
      %3995 = vmatprep.subr.mxu0 0.0
      %3996 = vmatpush1.xpose.msra.mxu0 0.0
      %3997 = vmatprep.subr.mxu0 0.0
      %3998 = vmatpush1.xpose.msra.mxu0 0.0
      %3999 = vmatprep.subr.mxu0 0.0
      %4000 = vmatpush1.xpose.msra.mxu0 0.0
      %4001 = vmatprep.subr.mxu0 0.0
      %4002 = vmatpush1.xpose.msra.mxu0 0.0
      %4003 = vmatprep.subr.mxu0 0.0
      %4004 = vmatpush1.xpose.msra.mxu0 0.0
      %4005 = vmatprep.subr.mxu0 0.0
      %4006 = vmatpush1.xpose.msra.mxu0 0.0
      %4007 = vmatprep.subr.mxu0 0.0
      %4008 = vmatpush1.xpose.msra.mxu0 0.0
      %4009 = vmatprep.subr.mxu0 0.0
      %4010 = vmatpush1.xpose.msra.mxu0 0.0
      %4011 = vmatprep.subr.mxu0 0.0
      %4012 = vmatpush1.xpose.msra.mxu0 0.0
      %4013 = vmatprep.subr.mxu0 0.0
      %4014 = vmatpush1.xpose.msra.mxu0 0.0
      %4015 = vmatprep.subr.mxu0 0.0
      %4016 = vmatpush1.xpose.msra.mxu0 0.0
      %4017 = vmatprep.subr.mxu0 0.0
      %4018 = vmatpush1.xpose.msra.mxu0 0.0
      %4019 = vmatprep.subr.mxu0 0.0
      %4020 = vmatpush1.xpose.msra.mxu0 0.0
      %4021 = vmatprep.subr.mxu0 0.0
      %4022 = vmatpush1.xpose.msra.mxu0 0.0
      %4023 = vmatprep.subr.mxu0 0.0
      %4024 = vmatpush1.xpose.msra.mxu0 0.0
      %4025 = vmatprep.subr.mxu0 0.0
      %4026 = vmatpush1.xpose.msra.mxu0 0.0
      %4027 = vmatprep.subr.mxu0 0.0
      %4028 = vmatpush1.xpose.msra.mxu0 0.0
      %4029 = vmatprep.subr.mxu0 0.0
      %4030 = vmatpush1.xpose.msra.mxu0 0.0
      %4031 = vmatprep.subr.mxu0 0.0
      %4032 = vmatpush1.xpose.msra.mxu0 0.0
      %4033 = vmatprep.subr.mxu0 0.0
      %4034 = vmatpush1.xpose.msra.mxu0 0.0
      %4035 = vmatprep.subr.mxu0 0.0
      %4036 = vmatpush1.xpose.msra.mxu0 0.0
      %4037 = vmatprep.subr.mxu0 0.0
      %4038 = vmatpush1.xpose.msra.mxu0 0.0
      %4039 = vmatprep.subr.mxu0 0.0
      %4040 = vmatpush1.xpose.msra.mxu0 0.0
      %4041 = vmatprep.subr.mxu0 0.0
      %4042 = vmatpush1.xpose.msra.mxu0 0.0
      %4043 = vmatprep.mubr.f32.mxu0 0.0
      %4044 = vmatmul.mubr.f32.gmra.mrb[0].mxu0 %v3974
      %v4045 = vpop.f32.mrb[0].mxu0
      %v4046 = vadd.f32 0.0, %v4045
      %v4047 = vpop.f32.mrb[0].mxu0
      %4048 = vdwg.mxu0
      %v4049 = vsel %vm821, %v4046, -inf
      %4050 = vmax.xlane.f32.xlu0 %v4049
      %v4051 = vpop.xlane.xlu0 %4050
      %v4052 = vsub.f32 %v4046, %v4051
      %v4053 = vmul.f32 %v4052, 1.442695
      %v4054 = vpow.pop %v4053
      %v4055 = vsel %vm821, %v4054, 0.0
      %4056 = vadd.xlane.f32.xlu0 %v4055
      %v4057 = vpop.xlane.xlu0 %4056
      %v4058 = vrcp.pop %v4057
      %v4059 = vmul.f32 %v4054, %v4058
      %v4061 = vsel %vm821, %v4059, 0
      %4063 = vmatprep.subr.mxu0 0.0
      %4064 = vmatpush1.msra.mxu0 %v3970
      %4065 = vmatprep.subr.mxu0 0.0
      %4066 = vmatpush1.msra.mxu0 0.0
      %4067 = vmatprep.subr.mxu0 0.0
      %4068 = vmatpush1.msra.mxu0 0.0
      %4069 = vmatprep.subr.mxu0 0.0
      %4070 = vmatpush1.msra.mxu0 0.0
      %4071 = vmatprep.subr.mxu0 0.0
      %4072 = vmatpush1.msra.mxu0 0.0
      %4073 = vmatprep.subr.mxu0 0.0
      %4074 = vmatpush1.msra.mxu0 0.0
      %4075 = vmatprep.subr.mxu0 0.0
      %4076 = vmatpush1.msra.mxu0 0.0
      %4077 = vmatprep.subr.mxu0 0.0
      %4078 = vmatpush1.msra.mxu0 0.0
      %4079 = vmatprep.subr.mxu0 0.0
      %4080 = vmatpush1.msra.mxu0 0.0
      %4081 = vmatprep.subr.mxu0 0.0
      %4082 = vmatpush1.msra.mxu0 0.0
      %4083 = vmatprep.subr.mxu0 0.0
      %4084 = vmatpush1.msra.mxu0 0.0
      %4085 = vmatprep.subr.mxu0 0.0
      %4086 = vmatpush1.msra.mxu0 0.0
      %4087 = vmatprep.subr.mxu0 0.0
      %4088 = vmatpush1.msra.mxu0 0.0
      %4089 = vmatprep.subr.mxu0 0.0
      %4090 = vmatpush1.msra.mxu0 0.0
      %4091 = vmatprep.subr.mxu0 0.0
      %4092 = vmatpush1.msra.mxu0 0.0
      %4093 = vmatprep.subr.mxu0 0.0
      %4094 = vmatpush1.msra.mxu0 0.0
      %4095 = vmatprep.subr.mxu0 0.0
      %4096 = vmatpush1.msra.mxu0 0.0
      %4097 = vmatprep.subr.mxu0 0.0
      %4098 = vmatpush1.msra.mxu0 0.0
      %4099 = vmatprep.subr.mxu0 0.0
      %4100 = vmatpush1.msra.mxu0 0.0
      %4101 = vmatprep.subr.mxu0 0.0
      %4102 = vmatpush1.msra.mxu0 0.0
      %4103 = vmatprep.subr.mxu0 0.0
      %4104 = vmatpush1.msra.mxu0 0.0
      %4105 = vmatprep.subr.mxu0 0.0
      %4106 = vmatpush1.msra.mxu0 0.0
      %4107 = vmatprep.subr.mxu0 0.0
      %4108 = vmatpush1.msra.mxu0 0.0
      %4109 = vmatprep.subr.mxu0 0.0
      %4110 = vmatpush1.msra.mxu0 0.0
      %4111 = vmatprep.subr.mxu0 0.0
      %4112 = vmatpush1.msra.mxu0 0.0
      %4113 = vmatprep.subr.mxu0 0.0
      %4114 = vmatpush1.msra.mxu0 0.0
      %4115 = vmatprep.subr.mxu0 0.0
      %4116 = vmatpush1.msra.mxu0 0.0
      %4117 = vmatprep.subr.mxu0 0.0
      %4118 = vmatpush1.msra.mxu0 0.0
      %4119 = vmatprep.subr.mxu0 0.0
      %4120 = vmatpush1.msra.mxu0 0.0
      %4121 = vmatprep.subr.mxu0 0.0
      %4122 = vmatpush1.msra.mxu0 0.0
      %4123 = vmatprep.subr.mxu0 0.0
      %4124 = vmatpush1.msra.mxu0 0.0
      %4125 = vmatprep.subr.mxu0 0.0
      %4126 = vmatpush1.msra.mxu0 0.0
      %4127 = vmatprep.mubr.f32.mxu0 0.0
      %4128 = vmatmul.mubr.f32.gmra.mrb[0].mxu0 %v4061
      %v4129 = vpop.f32.mrb[0].mxu0
      %v4130 = vadd.f32 0.0, %v4129
      %v4131 = vpop.f32.mrb[0].mxu0
      %4132 = vdwg.mxu0
      %s4133 = scalar_lea.vmem %s8, 48
      %v4134 = vld [vmem:[%s4133] sm:$0xff]
      %v4136 = vsel %vm821, %v4130, 0
      %4138 = vmatprep.subr.mxu0 0.0
      %4139 = vmatpush1.msra.mxu0 %v4134
      %4140 = vmatprep.subr.mxu0 0.0
      %4141 = vmatpush1.msra.mxu0 0.0
      %4142 = vmatprep.subr.mxu0 0.0
      %4143 = vmatpush1.msra.mxu0 0.0
      %4144 = vmatprep.subr.mxu0 0.0
      %4145 = vmatpush1.msra.mxu0 0.0
      %4146 = vmatprep.subr.mxu0 0.0
      %4147 = vmatpush1.msra.mxu0 0.0
      %4148 = vmatprep.subr.mxu0 0.0
      %4149 = vmatpush1.msra.mxu0 0.0
      %4150 = vmatprep.subr.mxu0 0.0
      %4151 = vmatpush1.msra.mxu0 0.0
      %4152 = vmatprep.subr.mxu0 0.0
      %4153 = vmatpush1.msra.mxu0 0.0
      %4154 = vmatprep.subr.mxu0 0.0
      %4155 = vmatpush1.msra.mxu0 0.0
      %4156 = vmatprep.subr.mxu0 0.0
      %4157 = vmatpush1.msra.mxu0 0.0
      %4158 = vmatprep.subr.mxu0 0.0
      %4159 = vmatpush1.msra.mxu0 0.0
      %4160 = vmatprep.subr.mxu0 0.0
      %4161 = vmatpush1.msra.mxu0 0.0
      %4162 = vmatprep.subr.mxu0 0.0
      %4163 = vmatpush1.msra.mxu0 0.0
      %4164 = vmatprep.subr.mxu0 0.0
      %4165 = vmatpush1.msra.mxu0 0.0
      %4166 = vmatprep.subr.mxu0 0.0
      %4167 = vmatpush1.msra.mxu0 0.0
      %4168 = vmatprep.subr.mxu0 0.0
      %4169 = vmatpush1.msra.mxu0 0.0
      %4170 = vmatprep.subr.mxu0 0.0
      %4171 = vmatpush1.msra.mxu0 0.0
      %4172 = vmatprep.subr.mxu0 0.0
      %4173 = vmatpush1.msra.mxu0 0.0
      %4174 = vmatprep.subr.mxu0 0.0
      %4175 = vmatpush1.msra.mxu0 0.0
      %4176 = vmatprep.subr.mxu0 0.0
      %4177 = vmatpush1.msra.mxu0 0.0
      %4178 = vmatprep.subr.mxu0 0.0
      %4179 = vmatpush1.msra.mxu0 0.0
      %4180 = vmatprep.subr.mxu0 0.0
      %4181 = vmatpush1.msra.mxu0 0.0
      %4182 = vmatprep.subr.mxu0 0.0
      %4183 = vmatpush1.msra.mxu0 0.0
      %4184 = vmatprep.subr.mxu0 0.0
      %4185 = vmatpush1.msra.mxu0 0.0
      %4186 = vmatprep.subr.mxu0 0.0
      %4187 = vmatpush1.msra.mxu0 0.0
      %4188 = vmatprep.subr.mxu0 0.0
      %4189 = vmatpush1.msra.mxu0 0.0
      %4190 = vmatprep.subr.mxu0 0.0
      %4191 = vmatpush1.msra.mxu0 0.0
      %4192 = vmatprep.subr.mxu0 0.0
      %4193 = vmatpush1.msra.mxu0 0.0
      %4194 = vmatprep.subr.mxu0 0.0
      %4195 = vmatpush1.msra.mxu0 0.0
      %4196 = vmatprep.subr.mxu0 0.0
      %4197 = vmatpush1.msra.mxu0 0.0
      %4198 = vmatprep.subr.mxu0 0.0
      %4199 = vmatpush1.msra.mxu0 0.0
      %4200 = vmatprep.subr.mxu0 0.0
      %4201 = vmatpush1.msra.mxu0 0.0
      %4202 = vmatprep.mubr.f32.mxu0 0.0
      %4203 = vmatmul.mubr.f32.gmra.mrb[0].mxu0 %v4136
      %v4204 = vpop.f32.mrb[0].mxu0
      %v4205 = vadd.f32 0.0, %v4204
      %v4206 = vpop.f32.mrb[0].mxu0
      %4207 = vdwg.mxu0
      %v4208 = vadd.f32 %v3721, %v4205
      %s4209 = scalar_lea.vmem %s2, 224
      %v4210 = vld [vmem:[%s4209] sm:$0xff]
      %v4211 = vld [vmem:[%s4209 + $0x8] sm:$0xff]
      %v4212 = vld [vmem:[%s4209 + $0x10] sm:$0xff]
      %v4213 = vld [vmem:[%s4209 + $0x18] sm:$0xff]
      %s4214 = scalar_lea.vmem %s3, 7
      %v4215 = vld [vmem:[%s4214] sm:$0x1]
      %v4217 = vlaneseq
      %v4218 = vshrl.u32 %v4217, 7
      %v4219 = vsub.s32 0, %v4218
      %v4220 = vrot.slane %v4215, %v4219
      %4222 = vmatprep.subr.mxu0 0.0
      %4223 = vmatpush1.msra.mxu0 %v4210
      %4224 = vmatprep.subr.mxu0 0.0
      %4225 = vmatpush1.msra.mxu0 %v4211
      %4226 = vmatprep.subr.mxu0 0.0
      %4227 = vmatpush1.msra.mxu0 %v4212
      %4228 = vmatprep.subr.mxu0 0.0
      %4229 = vmatpush1.msra.mxu0 %v4213
      %4230 = vmatprep.subr.mxu0 0.0
      %4231 = vmatpush1.msra.mxu0 0.0
      %4232 = vmatprep.subr.mxu0 0.0
      %4233 = vmatpush1.msra.mxu0 0.0
      %4234 = vmatprep.subr.mxu0 0.0
      %4235 = vmatpush1.msra.mxu0 0.0
      %4236 = vmatprep.subr.mxu0 0.0
      %4237 = vmatpush1.msra.mxu0 0.0
      %4238 = vmatprep.subr.mxu0 0.0
      %4239 = vmatpush1.msra.mxu0 0.0
      %4240 = vmatprep.subr.mxu0 0.0
      %4241 = vmatpush1.msra.mxu0 0.0
      %4242 = vmatprep.subr.mxu0 0.0
      %4243 = vmatpush1.msra.mxu0 0.0
      %4244 = vmatprep.subr.mxu0 0.0
      %4245 = vmatpush1.msra.mxu0 0.0
      %4246 = vmatprep.subr.mxu0 0.0
      %4247 = vmatpush1.msra.mxu0 0.0
      %4248 = vmatprep.subr.mxu0 0.0
      %4249 = vmatpush1.msra.mxu0 0.0
      %4250 = vmatprep.subr.mxu0 0.0
      %4251 = vmatpush1.msra.mxu0 0.0
      %4252 = vmatprep.subr.mxu0 0.0
      %4253 = vmatpush1.msra.mxu0 0.0
      %4254 = vmatprep.subr.mxu0 0.0
      %4255 = vmatpush1.msra.mxu0 0.0
      %4256 = vmatprep.subr.mxu0 0.0
      %4257 = vmatpush1.msra.mxu0 0.0
      %4258 = vmatprep.subr.mxu0 0.0
      %4259 = vmatpush1.msra.mxu0 0.0
      %4260 = vmatprep.subr.mxu0 0.0
      %4261 = vmatpush1.msra.mxu0 0.0
      %4262 = vmatprep.subr.mxu0 0.0
      %4263 = vmatpush1.msra.mxu0 0.0
      %4264 = vmatprep.subr.mxu0 0.0
      %4265 = vmatpush1.msra.mxu0 0.0
      %4266 = vmatprep.subr.mxu0 0.0
      %4267 = vmatpush1.msra.mxu0 0.0
      %4268 = vmatprep.subr.mxu0 0.0
      %4269 = vmatpush1.msra.mxu0 0.0
      %4270 = vmatprep.subr.mxu0 0.0
      %4271 = vmatpush1.msra.mxu0 0.0
      %4272 = vmatprep.subr.mxu0 0.0
      %4273 = vmatpush1.msra.mxu0 0.0
      %4274 = vmatprep.subr.mxu0 0.0
      %4275 = vmatpush1.msra.mxu0 0.0
      %4276 = vmatprep.subr.mxu0 0.0
      %4277 = vmatpush1.msra.mxu0 0.0
      %4278 = vmatprep.subr.mxu0 0.0
      %4279 = vmatpush1.msra.mxu0 0.0
      %4280 = vmatprep.subr.mxu0 0.0
      %4281 = vmatpush1.msra.mxu0 0.0
      %4282 = vmatprep.subr.mxu0 0.0
      %4283 = vmatpush1.msra.mxu0 0.0
      %4284 = vmatprep.subr.mxu0 0.0
      %4285 = vmatpush1.msra.mxu0 0.0
      %4286 = vmatprep.mubr.f32.mxu0 0.0
      %4287 = vmatmul.mubr.f32.gmra.mrb[0].mxu0 %v2767
      %v4288 = vpop.f32.mrb[0].mxu0
      %v4289 = vadd.f32 %v4220, %v4288
      %v4290 = vpop.f32.mrb[0].mxu0
      %4291 = vdwg.mxu0
      %s4292 = scalar_lea.vmem %s4, 224
      %v4293 = vld [vmem:[%s4292] sm:$0xff]
      %v4294 = vld [vmem:[%s4292 + $0x8] sm:$0xff]
      %v4295 = vld [vmem:[%s4292 + $0x10] sm:$0xff]
      %v4296 = vld [vmem:[%s4292 + $0x18] sm:$0xff]
      %s4297 = scalar_lea.vmem %s5, 7
      %v4298 = vld [vmem:[%s4297] sm:$0x1]
      %v4300 = vlaneseq
      %v4301 = vshrl.u32 %v4300, 7
      %v4302 = vsub.s32 0, %v4301
      %v4303 = vrot.slane %v4298, %v4302
      %4305 = vmatprep.subr.mxu0 0.0
      %4306 = vmatpush1.msra.mxu0 %v4293
      %4307 = vmatprep.subr.mxu0 0.0
      %4308 = vmatpush1.msra.mxu0 %v4294
      %4309 = vmatprep.subr.mxu0 0.0
      %4310 = vmatpush1.msra.mxu0 %v4295
      %4311 = vmatprep.subr.mxu0 0.0
      %4312 = vmatpush1.msra.mxu0 %v4296
      %4313 = vmatprep.subr.mxu0 0.0
      %4314 = vmatpush1.msra.mxu0 0.0
      %4315 = vmatprep.subr.mxu0 0.0
      %4316 = vmatpush1.msra.mxu0 0.0
      %4317 = vmatprep.subr.mxu0 0.0
      %4318 = vmatpush1.msra.mxu0 0.0
      %4319 = vmatprep.subr.mxu0 0.0
      %4320 = vmatpush1.msra.mxu0 0.0
      %4321 = vmatprep.subr.mxu0 0.0
      %4322 = vmatpush1.msra.mxu0 0.0
      %4323 = vmatprep.subr.mxu0 0.0
      %4324 = vmatpush1.msra.mxu0 0.0
      %4325 = vmatprep.subr.mxu0 0.0
      %4326 = vmatpush1.msra.mxu0 0.0
      %4327 = vmatprep.subr.mxu0 0.0
      %4328 = vmatpush1.msra.mxu0 0.0
      %4329 = vmatprep.subr.mxu0 0.0
      %4330 = vmatpush1.msra.mxu0 0.0
      %4331 = vmatprep.subr.mxu0 0.0
      %4332 = vmatpush1.msra.mxu0 0.0
      %4333 = vmatprep.subr.mxu0 0.0
      %4334 = vmatpush1.msra.mxu0 0.0
      %4335 = vmatprep.subr.mxu0 0.0
      %4336 = vmatpush1.msra.mxu0 0.0
      %4337 = vmatprep.subr.mxu0 0.0
      %4338 = vmatpush1.msra.mxu0 0.0
      %4339 = vmatprep.subr.mxu0 0.0
      %4340 = vmatpush1.msra.mxu0 0.0
      %4341 = vmatprep.subr.mxu0 0.0
      %4342 = vmatpush1.msra.mxu0 0.0
      %4343 = vmatprep.subr.mxu0 0.0
      %4344 = vmatpush1.msra.mxu0 0.0
      %4345 = vmatprep.subr.mxu0 0.0
      %4346 = vmatpush1.msra.mxu0 0.0
      %4347 = vmatprep.subr.mxu0 0.0
      %4348 = vmatpush1.msra.mxu0 0.0
      %4349 = vmatprep.subr.mxu0 0.0
      %4350 = vmatpush1.msra.mxu0 0.0
      %4351 = vmatprep.subr.mxu0 0.0
      %4352 = vmatpush1.msra.mxu0 0.0
      %4353 = vmatprep.subr.mxu0 0.0
      %4354 = vmatpush1.msra.mxu0 0.0
      %4355 = vmatprep.subr.mxu0 0.0
      %4356 = vmatpush1.msra.mxu0 0.0
      %4357 = vmatprep.subr.mxu0 0.0
      %4358 = vmatpush1.msra.mxu0 0.0
      %4359 = vmatprep.subr.mxu0 0.0
      %4360 = vmatpush1.msra.mxu0 0.0
      %4361 = vmatprep.subr.mxu0 0.0
      %4362 = vmatpush1.msra.mxu0 0.0
      %4363 = vmatprep.subr.mxu0 0.0
      %4364 = vmatpush1.msra.mxu0 0.0
      %4365 = vmatprep.subr.mxu0 0.0
      %4366 = vmatpush1.msra.mxu0 0.0
      %4367 = vmatprep.subr.mxu0 0.0
      %4368 = vmatpush1.msra.mxu0 0.0
      %4369 = vmatprep.mubr.f32.mxu0 0.0
      %4370 = vmatmul.mubr.f32.gmra.mrb[0].mxu0 %v2767
      %v4371 = vpop.f32.mrb[0].mxu0
      %v4372 = vadd.f32 %v4303, %v4371
      %v4373 = vpop.f32.mrb[0].mxu0
      %4374 = vdwg.mxu0
      %s4375 = scalar_lea.vmem %s6, 224
      %v4376 = vld [vmem:[%s4375] sm:$0xff]
      %v4377 = vld [vmem:[%s4375 + $0x8] sm:$0xff]
      %v4378 = vld [vmem:[%s4375 + $0x10] sm:$0xff]
      %v4379 = vld [vmem:[%s4375 + $0x18] sm:$0xff]
      %s4380 = scalar_lea.vmem %s7, 7
      %v4381 = vld [vmem:[%s4380] sm:$0x1]
      %v4383 = vlaneseq
      %v4384 = vshrl.u32 %v4383, 7
      %v4385 = vsub.s32 0, %v4384
      %v4386 = vrot.slane %v4381, %v4385
      %4388 = vmatprep.subr.mxu0 0.0
      %4389 = vmatpush1.msra.mxu0 %v4376
      %4390 = vmatprep.subr.mxu0 0.0
      %4391 = vmatpush1.msra.mxu0 %v4377
      %4392 = vmatprep.subr.mxu0 0.0
      %4393 = vmatpush1.msra.mxu0 %v4378
      %4394 = vmatprep.subr.mxu0 0.0
      %4395 = vmatpush1.msra.mxu0 %v4379
      %4396 = vmatprep.subr.mxu0 0.0
      %4397 = vmatpush1.msra.mxu0 0.0
      %4398 = vmatprep.subr.mxu0 0.0
      %4399 = vmatpush1.msra.mxu0 0.0
      %4400 = vmatprep.subr.mxu0 0.0
      %4401 = vmatpush1.msra.mxu0 0.0
      %4402 = vmatprep.subr.mxu0 0.0
      %4403 = vmatpush1.msra.mxu0 0.0
      %4404 = vmatprep.subr.mxu0 0.0
      %4405 = vmatpush1.msra.mxu0 0.0
      %4406 = vmatprep.subr.mxu0 0.0
      %4407 = vmatpush1.msra.mxu0 0.0
      %4408 = vmatprep.subr.mxu0 0.0
      %4409 = vmatpush1.msra.mxu0 0.0
      %4410 = vmatprep.subr.mxu0 0.0
      %4411 = vmatpush1.msra.mxu0 0.0
      %4412 = vmatprep.subr.mxu0 0.0
      %4413 = vmatpush1.msra.mxu0 0.0
      %4414 = vmatprep.subr.mxu0 0.0
      %4415 = vmatpush1.msra.mxu0 0.0
      %4416 = vmatprep.subr.mxu0 0.0
      %4417 = vmatpush1.msra.mxu0 0.0
      %4418 = vmatprep.subr.mxu0 0.0
      %4419 = vmatpush1.msra.mxu0 0.0
      %4420 = vmatprep.subr.mxu0 0.0
      %4421 = vmatpush1.msra.mxu0 0.0
      %4422 = vmatprep.subr.mxu0 0.0
      %4423 = vmatpush1.msra.mxu0 0.0
      %4424 = vmatprep.subr.mxu0 0.0
      %4425 = vmatpush1.msra.mxu0 0.0
      %4426 = vmatprep.subr.mxu0 0.0
      %4427 = vmatpush1.msra.mxu0 0.0
      %4428 = vmatprep.subr.mxu0 0.0
      %4429 = vmatpush1.msra.mxu0 0.0
      %4430 = vmatprep.subr.mxu0 0.0
      %4431 = vmatpush1.msra.mxu0 0.0
      %4432 = vmatprep.subr.mxu0 0.0
      %4433 = vmatpush1.msra.mxu0 0.0
      %4434 = vmatprep.subr.mxu0 0.0
      %4435 = vmatpush1.msra.mxu0 0.0
      %4436 = vmatprep.subr.mxu0 0.0
      %4437 = vmatpush1.msra.mxu0 0.0
      %4438 = vmatprep.subr.mxu0 0.0
      %4439 = vmatpush1.msra.mxu0 0.0
      %4440 = vmatprep.subr.mxu0 0.0
      %4441 = vmatpush1.msra.mxu0 0.0
      %4442 = vmatprep.subr.mxu0 0.0
      %4443 = vmatpush1.msra.mxu0 0.0
      %4444 = vmatprep.subr.mxu0 0.0
      %4445 = vmatpush1.msra.mxu0 0.0
      %4446 = vmatprep.subr.mxu0 0.0
      %4447 = vmatpush1.msra.mxu0 0.0
      %4448 = vmatprep.subr.mxu0 0.0
      %4449 = vmatpush1.msra.mxu0 0.0
      %4450 = vmatprep.subr.mxu0 0.0
      %4451 = vmatpush1.msra.mxu0 0.0
      %4452 = vmatprep.mubr.f32.mxu0 0.0
      %4453 = vmatmul.mubr.f32.gmra.mrb[0].mxu0 %v2767
      %v4454 = vpop.f32.mrb[0].mxu0
      %v4455 = vadd.f32 %v4386, %v4454
      %v4456 = vpop.f32.mrb[0].mxu0
      %4457 = vdwg.mxu0
      %v4459 = vsel %vm821, %v4289, 0
      %v4462 = vsel %vm821, %v4372, 0
      %4464 = vmatprep.subr.mxu0 0.0
      %4465 = vmatpush1.xpose.msra.mxu0 %v4462
      %4466 = vmatprep.subr.mxu0 0.0
      %4467 = vmatpush1.xpose.msra.mxu0 0.0
      %4468 = vmatprep.subr.mxu0 0.0
      %4469 = vmatpush1.xpose.msra.mxu0 0.0
      %4470 = vmatprep.subr.mxu0 0.0
      %4471 = vmatpush1.xpose.msra.mxu0 0.0
      %4472 = vmatprep.subr.mxu0 0.0
      %4473 = vmatpush1.xpose.msra.mxu0 0.0
      %4474 = vmatprep.subr.mxu0 0.0
      %4475 = vmatpush1.xpose.msra.mxu0 0.0
      %4476 = vmatprep.subr.mxu0 0.0
      %4477 = vmatpush1.xpose.msra.mxu0 0.0
      %4478 = vmatprep.subr.mxu0 0.0
      %4479 = vmatpush1.xpose.msra.mxu0 0.0
      %4480 = vmatprep.subr.mxu0 0.0
      %4481 = vmatpush1.xpose.msra.mxu0 0.0
      %4482 = vmatprep.subr.mxu0 0.0
      %4483 = vmatpush1.xpose.msra.mxu0 0.0
      %4484 = vmatprep.subr.mxu0 0.0
      %4485 = vmatpush1.xpose.msra.mxu0 0.0
      %4486 = vmatprep.subr.mxu0 0.0
      %4487 = vmatpush1.xpose.msra.mxu0 0.0
      %4488 = vmatprep.subr.mxu0 0.0
      %4489 = vmatpush1.xpose.msra.mxu0 0.0
      %4490 = vmatprep.subr.mxu0 0.0
      %4491 = vmatpush1.xpose.msra.mxu0 0.0
      %4492 = vmatprep.subr.mxu0 0.0
      %4493 = vmatpush1.xpose.msra.mxu0 0.0
      %4494 = vmatprep.subr.mxu0 0.0
      %4495 = vmatpush1.xpose.msra.mxu0 0.0
      %4496 = vmatprep.subr.mxu0 0.0
      %4497 = vmatpush1.xpose.msra.mxu0 0.0
      %4498 = vmatprep.subr.mxu0 0.0
      %4499 = vmatpush1.xpose.msra.mxu0 0.0
      %4500 = vmatprep.subr.mxu0 0.0
      %4501 = vmatpush1.xpose.msra.mxu0 0.0
      %4502 = vmatprep.subr.mxu0 0.0
      %4503 = vmatpush1.xpose.msra.mxu0 0.0
      %4504 = vmatprep.subr.mxu0 0.0
      %4505 = vmatpush1.xpose.msra.mxu0 0.0
      %4506 = vmatprep.subr.mxu0 0.0
      %4507 = vmatpush1.xpose.msra.mxu0 0.0
      %4508 = vmatprep.subr.mxu0 0.0
      %4509 = vmatpush1.xpose.msra.mxu0 0.0
      %4510 = vmatprep.subr.mxu0 0.0
      %4511 = vmatpush1.xpose.msra.mxu0 0.0
      %4512 = vmatprep.subr.mxu0 0.0
      %4513 = vmatpush1.xpose.msra.mxu0 0.0
      %4514 = vmatprep.subr.mxu0 0.0
      %4515 = vmatpush1.xpose.msra.mxu0 0.0
      %4516 = vmatprep.subr.mxu0 0.0
      %4517 = vmatpush1.xpose.msra.mxu0 0.0
      %4518 = vmatprep.subr.mxu0 0.0
      %4519 = vmatpush1.xpose.msra.mxu0 0.0
      %4520 = vmatprep.subr.mxu0 0.0
      %4521 = vmatpush1.xpose.msra.mxu0 0.0
      %4522 = vmatprep.subr.mxu0 0.0
      %4523 = vmatpush1.xpose.msra.mxu0 0.0
      %4524 = vmatprep.subr.mxu0 0.0
      %4525 = vmatpush1.xpose.msra.mxu0 0.0
      %4526 = vmatprep.subr.mxu0 0.0
      %4527 = vmatpush1.xpose.msra.mxu0 0.0
      %4528 = vmatprep.mubr.f32.mxu0 0.0
      %4529 = vmatmul.mubr.f32.gmra.mrb[0].mxu0 %v4459
      %v4530 = vpop.f32.mrb[0].mxu0
      %v4531 = vadd.f32 0.0, %v4530
      %v4532 = vpop.f32.mrb[0].mxu0
      %4533 = vdwg.mxu0
      %v4534 = vsel %vm821, %v4531, -inf
      %4535 = vmax.xlane.f32.xlu0 %v4534
      %v4536 = vpop.xlane.xlu0 %4535
      %v4537 = vsub.f32 %v4531, %v4536
      %v4538 = vmul.f32 %v4537, 1.442695
      %v4539 = vpow.pop %v4538
      %v4540 = vsel %vm821, %v4539, 0.0
      %4541 = vadd.xlane.f32.xlu0 %v4540
      %v4542 = vpop.xlane.xlu0 %4541
      %v4543 = vrcp.pop %v4542
      %v4544 = vmul.f32 %v4539, %v4543
      %v4546 = vsel %vm821, %v4544, 0
      %4548 = vmatprep.subr.mxu0 0.0
      %4549 = vmatpush1.msra.mxu0 %v4455
      %4550 = vmatprep.subr.mxu0 0.0
      %4551 = vmatpush1.msra.mxu0 0.0
      %4552 = vmatprep.subr.mxu0 0.0
      %4553 = vmatpush1.msra.mxu0 0.0
      %4554 = vmatprep.subr.mxu0 0.0
      %4555 = vmatpush1.msra.mxu0 0.0
      %4556 = vmatprep.subr.mxu0 0.0
      %4557 = vmatpush1.msra.mxu0 0.0
      %4558 = vmatprep.subr.mxu0 0.0
      %4559 = vmatpush1.msra.mxu0 0.0
      %4560 = vmatprep.subr.mxu0 0.0
      %4561 = vmatpush1.msra.mxu0 0.0
      %4562 = vmatprep.subr.mxu0 0.0
      %4563 = vmatpush1.msra.mxu0 0.0
      %4564 = vmatprep.subr.mxu0 0.0
      %4565 = vmatpush1.msra.mxu0 0.0
      %4566 = vmatprep.subr.mxu0 0.0
      %4567 = vmatpush1.msra.mxu0 0.0
      %4568 = vmatprep.subr.mxu0 0.0
      %4569 = vmatpush1.msra.mxu0 0.0
      %4570 = vmatprep.subr.mxu0 0.0
      %4571 = vmatpush1.msra.mxu0 0.0
      %4572 = vmatprep.subr.mxu0 0.0
      %4573 = vmatpush1.msra.mxu0 0.0
      %4574 = vmatprep.subr.mxu0 0.0
      %4575 = vmatpush1.msra.mxu0 0.0
      %4576 = vmatprep.subr.mxu0 0.0
      %4577 = vmatpush1.msra.mxu0 0.0
      %4578 = vmatprep.subr.mxu0 0.0
      %4579 = vmatpush1.msra.mxu0 0.0
      %4580 = vmatprep.subr.mxu0 0.0
      %4581 = vmatpush1.msra.mxu0 0.0
      %4582 = vmatprep.subr.mxu0 0.0
      %4583 = vmatpush1.msra.mxu0 0.0
      %4584 = vmatprep.subr.mxu0 0.0
      %4585 = vmatpush1.msra.mxu0 0.0
      %4586 = vmatprep.subr.mxu0 0.0
      %4587 = vmatpush1.msra.mxu0 0.0
      %4588 = vmatprep.subr.mxu0 0.0
      %4589 = vmatpush1.msra.mxu0 0.0
      %4590 = vmatprep.subr.mxu0 0.0
      %4591 = vmatpush1.msra.mxu0 0.0
      %4592 = vmatprep.subr.mxu0 0.0
      %4593 = vmatpush1.msra.mxu0 0.0
      %4594 = vmatprep.subr.mxu0 0.0
      %4595 = vmatpush1.msra.mxu0 0.0
      %4596 = vmatprep.subr.mxu0 0.0
      %4597 = vmatpush1.msra.mxu0 0.0
      %4598 = vmatprep.subr.mxu0 0.0
      %4599 = vmatpush1.msra.mxu0 0.0
      %4600 = vmatprep.subr.mxu0 0.0
      %4601 = vmatpush1.msra.mxu0 0.0
      %4602 = vmatprep.subr.mxu0 0.0
      %4603 = vmatpush1.msra.mxu0 0.0
      %4604 = vmatprep.subr.mxu0 0.0
      %4605 = vmatpush1.msra.mxu0 0.0
      %4606 = vmatprep.subr.mxu0 0.0
      %4607 = vmatpush1.msra.mxu0 0.0
      %4608 = vmatprep.subr.mxu0 0.0
      %4609 = vmatpush1.msra.mxu0 0.0
      %4610 = vmatprep.subr.mxu0 0.0
      %4611 = vmatpush1.msra.mxu0 0.0
      %4612 = vmatprep.mubr.f32.mxu0 0.0
      %4613 = vmatmul.mubr.f32.gmra.mrb[0].mxu0 %v4546
      %v4614 = vpop.f32.mrb[0].mxu0
      %v4615 = vadd.f32 0.0, %v4614
      %v4616 = vpop.f32.mrb[0].mxu0
      %4617 = vdwg.mxu0
      %s4618 = scalar_lea.vmem %s8, 56
      %v4619 = vld [vmem:[%s4618] sm:$0xff]
      %v4621 = vsel %vm821, %v4615, 0
      %4623 = vmatprep.subr.mxu0 0.0
      %4624 = vmatpush1.msra.mxu0 %v4619
      %4625 = vmatprep.subr.mxu0 0.0
      %4626 = vmatpush1.msra.mxu0 0.0
      %4627 = vmatprep.subr.mxu0 0.0
      %4628 = vmatpush1.msra.mxu0 0.0
      %4629 = vmatprep.subr.mxu0 0.0
      %4630 = vmatpush1.msra.mxu0 0.0
      %4631 = vmatprep.subr.mxu0 0.0
      %4632 = vmatpush1.msra.mxu0 0.0
      %4633 = vmatprep.subr.mxu0 0.0
      %4634 = vmatpush1.msra.mxu0 0.0
      %4635 = vmatprep.subr.mxu0 0.0
      %4636 = vmatpush1.msra.mxu0 0.0
      %4637 = vmatprep.subr.mxu0 0.0
      %4638 = vmatpush1.msra.mxu0 0.0
      %4639 = vmatprep.subr.mxu0 0.0
      %4640 = vmatpush1.msra.mxu0 0.0
      %4641 = vmatprep.subr.mxu0 0.0
      %4642 = vmatpush1.msra.mxu0 0.0
      %4643 = vmatprep.subr.mxu0 0.0
      %4644 = vmatpush1.msra.mxu0 0.0
      %4645 = vmatprep.subr.mxu0 0.0
      %4646 = vmatpush1.msra.mxu0 0.0
      %4647 = vmatprep.subr.mxu0 0.0
      %4648 = vmatpush1.msra.mxu0 0.0
      %4649 = vmatprep.subr.mxu0 0.0
      %4650 = vmatpush1.msra.mxu0 0.0
      %4651 = vmatprep.subr.mxu0 0.0
      %4652 = vmatpush1.msra.mxu0 0.0
      %4653 = vmatprep.subr.mxu0 0.0
      %4654 = vmatpush1.msra.mxu0 0.0
      %4655 = vmatprep.subr.mxu0 0.0
      %4656 = vmatpush1.msra.mxu0 0.0
      %4657 = vmatprep.subr.mxu0 0.0
      %4658 = vmatpush1.msra.mxu0 0.0
      %4659 = vmatprep.subr.mxu0 0.0
      %4660 = vmatpush1.msra.mxu0 0.0
      %4661 = vmatprep.subr.mxu0 0.0
      %4662 = vmatpush1.msra.mxu0 0.0
      %4663 = vmatprep.subr.mxu0 0.0
      %4664 = vmatpush1.msra.mxu0 0.0
      %4665 = vmatprep.subr.mxu0 0.0
      %4666 = vmatpush1.msra.mxu0 0.0
      %4667 = vmatprep.subr.mxu0 0.0
      %4668 = vmatpush1.msra.mxu0 0.0
      %4669 = vmatprep.subr.mxu0 0.0
      %4670 = vmatpush1.msra.mxu0 0.0
      %4671 = vmatprep.subr.mxu0 0.0
      %4672 = vmatpush1.msra.mxu0 0.0
      %4673 = vmatprep.subr.mxu0 0.0
      %4674 = vmatpush1.msra.mxu0 0.0
      %4675 = vmatprep.subr.mxu0 0.0
      %4676 = vmatpush1.msra.mxu0 0.0
      %4677 = vmatprep.subr.mxu0 0.0
      %4678 = vmatpush1.msra.mxu0 0.0
      %4679 = vmatprep.subr.mxu0 0.0
      %4680 = vmatpush1.msra.mxu0 0.0
      %4681 = vmatprep.subr.mxu0 0.0
      %4682 = vmatpush1.msra.mxu0 0.0
      %4683 = vmatprep.subr.mxu0 0.0
      %4684 = vmatpush1.msra.mxu0 0.0
      %4685 = vmatprep.subr.mxu0 0.0
      %4686 = vmatpush1.msra.mxu0 0.0
      %4687 = vmatprep.mubr.f32.mxu0 0.0
      %4688 = vmatmul.mubr.f32.gmra.mrb[0].mxu0 %v4621
      %v4689 = vpop.f32.mrb[0].mxu0
      %v4690 = vadd.f32 0.0, %v4689
      %v4691 = vpop.f32.mrb[0].mxu0
      %4692 = vdwg.mxu0
      %v4693 = vadd.f32 %v4208, %v4690
      %s4694 = scalar_lea.vmem %s9, 1
      %v4695 = vld [vmem:[%s4694] sm:$0x1]
      %v4697 = vlaneseq
      %v4698 = vshrl.u32 %v4697, 7
      %v4699 = vsub.s32 0, %v4698
      %v4700 = vrot.slane %v4695, %v4699
      %v4702 = vadd.f32 %v4693, %v4700
      %v4703 = vadd.f32 %v2752, %v4702
      %s4704 = scalar_lea.vmem %s10, 1
      %v4705 = vld [vmem:[%s4704] sm:$0x1]
      %s4706 = scalar_lea.vmem %s11, 1
      %v4707 = vld [vmem:[%s4706] sm:$0x1]
      %v4708 = vsel %vm585, %v4703, 0.0
      %4709 = vadd.xlane.f32.xlu0 %v4708
      %v4710 = vpop.xlane.xlu0 %4709
      %v4711 = vmul.f32 %v4710, %v2524
      %v4712 = vsub.f32 %v4703, %v4711
      %v4713 = vmul.f32 %v4712, %v4712
      %v4714 = vsel %vm585, %v4713, 0.0
      %4715 = vadd.xlane.f32.xlu0 %v4714
      %v4716 = vpop.xlane.xlu0 %4715
      %v4717 = vmul.f32 %v4716, %v2524
      %v4718 = vadd.f32 %v4717, 1e-05
      %v4719 = vrsqrt.pop %v4718
      %v4720 = vmul.f32 %v4712, %v4719
      %v4722 = vlaneseq
      %v4723 = vshrl.u32 %v4722, 7
      %v4724 = vsub.s32 0, %v4723
      %v4725 = vrot.slane %v4705, %v4724
      %v4727 = vmul.f32 %v4720, %v4725
      %v4729 = vlaneseq
      %v4730 = vshrl.u32 %v4729, 7
      %v4731 = vsub.s32 0, %v4730
      %v4732 = vrot.slane %v4707, %v4731
      %v4734 = vadd.f32 %v4727, %v4732
      %s4735 = scalar_lea.vmem %s12, 32
      %v4736 = vld [vmem:[%s4735] sm:$0xff]
      %v4737 = vld [vmem:[%s4735 + $0x8] sm:$0xff]
      %v4738 = vld [vmem:[%s4735 + $0x10] sm:$0xff]
      %v4739 = vld [vmem:[%s4735 + $0x18] sm:$0xff]
      %s4740 = scalar_lea.vmem %s13, 1
      %v4741 = vld [vmem:[%s4740] sm:$0x1]
      %v4743 = vlaneseq
      %v4744 = vshrl.u32 %v4743, 7
      %v4745 = vsub.s32 0, %v4744
      %v4746 = vrot.slane %v4741, %v4745
      %v4749 = vsel %vm585, %v4734, 0
      %4751 = vmatprep.subr.mxu0 0.0
      %4752 = vmatpush1.msra.mxu0 %v4736
      %4753 = vmatprep.subr.mxu0 0.0
      %4754 = vmatpush1.msra.mxu0 %v4737
      %4755 = vmatprep.subr.mxu0 0.0
      %4756 = vmatpush1.msra.mxu0 %v4738
      %4757 = vmatprep.subr.mxu0 0.0
      %4758 = vmatpush1.msra.mxu0 %v4739
      %4759 = vmatprep.subr.mxu0 0.0
      %4760 = vmatpush1.msra.mxu0 0.0
      %4761 = vmatprep.subr.mxu0 0.0
      %4762 = vmatpush1.msra.mxu0 0.0
      %4763 = vmatprep.subr.mxu0 0.0
      %4764 = vmatpush1.msra.mxu0 0.0
      %4765 = vmatprep.subr.mxu0 0.0
      %4766 = vmatpush1.msra.mxu0 0.0
      %4767 = vmatprep.subr.mxu0 0.0
      %4768 = vmatpush1.msra.mxu0 0.0
      %4769 = vmatprep.subr.mxu0 0.0
      %4770 = vmatpush1.msra.mxu0 0.0
      %4771 = vmatprep.subr.mxu0 0.0
      %4772 = vmatpush1.msra.mxu0 0.0
      %4773 = vmatprep.subr.mxu0 0.0
      %4774 = vmatpush1.msra.mxu0 0.0
      %4775 = vmatprep.subr.mxu0 0.0
      %4776 = vmatpush1.msra.mxu0 0.0
      %4777 = vmatprep.subr.mxu0 0.0
      %4778 = vmatpush1.msra.mxu0 0.0
      %4779 = vmatprep.subr.mxu0 0.0
      %4780 = vmatpush1.msra.mxu0 0.0
      %4781 = vmatprep.subr.mxu0 0.0
      %4782 = vmatpush1.msra.mxu0 0.0
      %4783 = vmatprep.subr.mxu0 0.0
      %4784 = vmatpush1.msra.mxu0 0.0
      %4785 = vmatprep.subr.mxu0 0.0
      %4786 = vmatpush1.msra.mxu0 0.0
      %4787 = vmatprep.subr.mxu0 0.0
      %4788 = vmatpush1.msra.mxu0 0.0
      %4789 = vmatprep.subr.mxu0 0.0
      %4790 = vmatpush1.msra.mxu0 0.0
      %4791 = vmatprep.subr.mxu0 0.0
      %4792 = vmatpush1.msra.mxu0 0.0
      %4793 = vmatprep.subr.mxu0 0.0
      %4794 = vmatpush1.msra.mxu0 0.0
      %4795 = vmatprep.subr.mxu0 0.0
      %4796 = vmatpush1.msra.mxu0 0.0
      %4797 = vmatprep.subr.mxu0 0.0
      %4798 = vmatpush1.msra.mxu0 0.0
      %4799 = vmatprep.subr.mxu0 0.0
      %4800 = vmatpush1.msra.mxu0 0.0
      %4801 = vmatprep.subr.mxu0 0.0
      %4802 = vmatpush1.msra.mxu0 0.0
      %4803 = vmatprep.subr.mxu0 0.0
      %4804 = vmatpush1.msra.mxu0 0.0
      %4805 = vmatprep.subr.mxu0 0.0
      %4806 = vmatpush1.msra.mxu0 0.0
      %4807 = vmatprep.subr.mxu0 0.0
      %4808 = vmatpush1.msra.mxu0 0.0
      %4809 = vmatprep.subr.mxu0 0.0
      %4810 = vmatpush1.msra.mxu0 0.0
      %4811 = vmatprep.subr.mxu0 0.0
      %4812 = vmatpush1.msra.mxu0 0.0
      %4813 = vmatprep.subr.mxu0 0.0
      %4814 = vmatpush1.msra.mxu0 0.0
      %4815 = vmatprep.mubr.f32.mxu0 0.0
      %4816 = vmatmul.mubr.f32.gmra.mrb[0].mxu0 %v4749
      %v4817 = vpop.f32.mrb[0].mxu0
      %v4818 = vadd.f32 %v4746, %v4817
      %v4819 = vpop.f32.mrb[0].mxu0
      %4820 = vdwg.mxu0
      %v4821 = vmax.f32 %v4818, 0.0
      %s4822 = scalar_lea.vmem %s14, 64
      %v4823 = vld [vmem:[%s4822] sm:$0xff]
      %v4824 = vld [vmem:[%s4822 + $0x8] sm:$0xff]
      %v4825 = vld [vmem:[%s4822 + $0x10] sm:$0xff]
      %v4826 = vld [vmem:[%s4822 + $0x18] sm:$0xff]
      %v4827 = vld [vmem:[%s4822 + $0x20] sm:$0xff]
      %v4828 = vld [vmem:[%s4822 + $0x28] sm:$0xff]
      %v4829 = vld [vmem:[%s4822 + $0x30] sm:$0xff]
      %v4830 = vld [vmem:[%s4822 + $0x38] sm:$0xff]
      %s4831 = scalar_lea.vmem %s15, 1
      %v4832 = vld [vmem:[%s4831] sm:$0x1]
      %v4834 = vlaneseq
      %v4835 = vshrl.u32 %v4834, 7
      %v4836 = vsub.s32 0, %v4835
      %v4837 = vrot.slane %v4832, %v4836
      %v4840 = vsel %vm2649, %v4821, 0
      %4842 = vmatprep.subr.mxu0 0.0
      %4843 = vmatpush1.msra.mxu0 %v4823
      %4844 = vmatprep.subr.mxu0 0.0
      %4845 = vmatpush1.msra.mxu0 %v4824
      %4846 = vmatprep.subr.mxu0 0.0
      %4847 = vmatpush1.msra.mxu0 %v4825
      %4848 = vmatprep.subr.mxu0 0.0
      %4849 = vmatpush1.msra.mxu0 %v4826
      %4850 = vmatprep.subr.mxu0 0.0
      %4851 = vmatpush1.msra.mxu0 %v4827
      %4852 = vmatprep.subr.mxu0 0.0
      %4853 = vmatpush1.msra.mxu0 %v4828
      %4854 = vmatprep.subr.mxu0 0.0
      %4855 = vmatpush1.msra.mxu0 %v4829
      %4856 = vmatprep.subr.mxu0 0.0
      %4857 = vmatpush1.msra.mxu0 %v4830
      %4858 = vmatprep.subr.mxu0 0.0
      %4859 = vmatpush1.msra.mxu0 0.0
      %4860 = vmatprep.subr.mxu0 0.0
      %4861 = vmatpush1.msra.mxu0 0.0
      %4862 = vmatprep.subr.mxu0 0.0
      %4863 = vmatpush1.msra.mxu0 0.0
      %4864 = vmatprep.subr.mxu0 0.0
      %4865 = vmatpush1.msra.mxu0 0.0
      %4866 = vmatprep.subr.mxu0 0.0
      %4867 = vmatpush1.msra.mxu0 0.0
      %4868 = vmatprep.subr.mxu0 0.0
      %4869 = vmatpush1.msra.mxu0 0.0
      %4870 = vmatprep.subr.mxu0 0.0
      %4871 = vmatpush1.msra.mxu0 0.0
      %4872 = vmatprep.subr.mxu0 0.0
      %4873 = vmatpush1.msra.mxu0 0.0
      %4874 = vmatprep.subr.mxu0 0.0
      %4875 = vmatpush1.msra.mxu0 0.0
      %4876 = vmatprep.subr.mxu0 0.0
      %4877 = vmatpush1.msra.mxu0 0.0
      %4878 = vmatprep.subr.mxu0 0.0
      %4879 = vmatpush1.msra.mxu0 0.0
      %4880 = vmatprep.subr.mxu0 0.0
      %4881 = vmatpush1.msra.mxu0 0.0
      %4882 = vmatprep.subr.mxu0 0.0
      %4883 = vmatpush1.msra.mxu0 0.0
      %4884 = vmatprep.subr.mxu0 0.0
      %4885 = vmatpush1.msra.mxu0 0.0
      %4886 = vmatprep.subr.mxu0 0.0
      %4887 = vmatpush1.msra.mxu0 0.0
      %4888 = vmatprep.subr.mxu0 0.0
      %4889 = vmatpush1.msra.mxu0 0.0
      %4890 = vmatprep.subr.mxu0 0.0
      %4891 = vmatpush1.msra.mxu0 0.0
      %4892 = vmatprep.subr.mxu0 0.0
      %4893 = vmatpush1.msra.mxu0 0.0
      %4894 = vmatprep.subr.mxu0 0.0
      %4895 = vmatpush1.msra.mxu0 0.0
      %4896 = vmatprep.subr.mxu0 0.0
      %4897 = vmatpush1.msra.mxu0 0.0
      %4898 = vmatprep.subr.mxu0 0.0
      %4899 = vmatpush1.msra.mxu0 0.0
      %4900 = vmatprep.subr.mxu0 0.0
      %4901 = vmatpush1.msra.mxu0 0.0
      %4902 = vmatprep.subr.mxu0 0.0
      %4903 = vmatpush1.msra.mxu0 0.0
      %4904 = vmatprep.subr.mxu0 0.0
      %4905 = vmatpush1.msra.mxu0 0.0
      %4906 = vmatprep.mubr.f32.mxu0 0.0
      %4907 = vmatmul.mubr.f32.gmra.mrb[0].mxu0 %v4840
      %v4908 = vpop.f32.mrb[0].mxu0
      %v4909 = vadd.f32 %v4837, %v4908
      %v4910 = vpop.f32.mrb[0].mxu0
      %4911 = vdwg.mxu0
      %v4912 = vadd.f32 %v4734, %v4909
      %s4913 = scalar_lea.vmem %s16, 1
      %v4914 = vld [vmem:[%s4913] sm:$0x1]
      %s4915 = scalar_lea.vmem %s17, 1
      %v4916 = vld [vmem:[%s4915] sm:$0x1]
      %v4917 = vsel %vm585, %v4912, 0.0
      %4918 = vadd.xlane.f32.xlu0 %v4917
      %v4919 = vpop.xlane.xlu0 %4918
      %v4920 = vmul.f32 %v4919, %v2524
      %v4921 = vsub.f32 %v4912, %v4920
      %v4922 = vmul.f32 %v4921, %v4921
      %v4923 = vsel %vm585, %v4922, 0.0
      %4924 = vadd.xlane.f32.xlu0 %v4923
      %v4925 = vpop.xlane.xlu0 %4924
      %v4926 = vmul.f32 %v4925, %v2524
      %v4927 = vadd.f32 %v4926, 1e-05
      %v4928 = vrsqrt.pop %v4927
      %v4929 = vmul.f32 %v4921, %v4928
      %v4931 = vlaneseq
      %v4932 = vshrl.u32 %v4931, 7
      %v4933 = vsub.s32 0, %v4932
      %v4934 = vrot.slane %v4914, %v4933
      %v4936 = vmul.f32 %v4929, %v4934
      %v4938 = vlaneseq
      %v4939 = vshrl.u32 %v4938, 7
      %v4940 = vsub.s32 0, %v4939
      %v4941 = vrot.slane %v4916, %v4940
      %v4943 = vadd.f32 %v4936, %v4941
      %4944 = vst.msk [vmem:[%s570] sm:$0xff] %vm585, %v4943
      %p4945 = scmp.lt.s32.totalorder %s29, 1
      %s4946 = scalar_select %p4945, %s29, 1
      %s4947 = smul.addr %s4946, 8
      %s4948 = scalar_lea.vmem %s18, %s4947
      // Predicated region
      $region93: #{encoder_forward.1} parent=91 // pred_check
        %p4949 = pneg %p430
      $region94: #{encoder_forward.1} parent=91 // pred_check_branch
        %4951 = sbr.rel (%p4949) target = $region96
      $region95: #{encoder_forward.1} parent=91 // pred_region
        _
      $region96: #{encoder_forward.1} parent=91 // pred_fallthru
        _
    $region92: #{encoder_forward.1} parent=5 // pred_fallthru
      _
    %p4952 = scmp.le.s32.totalorder 2, %s24
    // Predicated region
    $region97: #{encoder_forward.1} parent=5 // pred_check
      %p4953 = pneg %p4952
    $region98: #{encoder_forward.1} parent=5 // pred_check_branch
      %4955 = sbr.rel (%p4953) target = $region100
    $region99: #{encoder_forward.1} parent=5 // pred_region
      %s4956 = ssub.s32 %s24, 2
      // Predicated region
      $region101: #{encoder_forward.1} parent=99 // pred_check
        %p4957 = pneg %p436
      $region102: #{encoder_forward.1} parent=99 // pred_check_branch
        %4959 = sbr.rel (%p4957) target = $region104
      $region103: #{encoder_forward.1} parent=99 // pred_region
        %p4960 = scmp.lt.s32.totalorder %s30, 1
        %s4961 = scalar_select %p4960, %s30, 1
        %s4962 = smul.addr %s4961, 8
        %s4963 = scalar_lea.vmem %s18, %s4962
      $region104: #{encoder_forward.1} parent=99 // pred_fallthru
        _
    $region100: #{encoder_forward.1} parent=5 // pred_fallthru
      _
  $region6: #{encoder_forward.1} parent=0 // loop_footer
    %s28 = sadd.s32 1, %s24
  $region7: #{encoder_forward.1} parent=0 // loop_footer_branch
    %23 = sbr.rel target = $region3
  $region8: #{encoder_forward.1} parent=0 // loop_exit
    _

</llo_original>
